<compile_context>
chip_gen: v6e
topology: v6e:2x2x1
jax: 0.10.0
libtpu: 0.0.40
codegen_flags: <defaults>
</compile_context>

<pallas_src>
import functools

import jax
import jax.numpy as jnp
import numpy as np
from jax.experimental import pallas as pl
from jax.experimental.pallas import tpu as pltpu


# ------------------------------ small helpers ---------------------------------
def _round_up(x, m):
    return (x + m - 1) // m * m


def _pad_axis(a, axis, new):
    pad = new - a.shape[axis]
    if pad == 0:
        return a
    widths = [(0, 0)] * a.ndim
    widths[axis] = (0, pad)
    return jnp.pad(a, widths)


def _pad_gate_cols(a, H, Hp):
    """(..., 3H) -> (..., 3Hp); gate g is moved to lanes [g*Hp, g*Hp + H), rest zero."""
    if H == Hp:
        return a
    parts = []
    zshape = a.shape[:-1] + (Hp - H,)
    for g in range(3):
        parts.append(a[..., g * H:(g + 1) * H])
        parts.append(jnp.zeros(zshape, a.dtype))
    return jnp.concatenate(parts, axis=-1)


def _pick_div(n, cands):
    for c in cands:
        if n % c == 0:
            return c
    return n


def _tpu_info():
    try:
        return pltpu.get_tpu_info()
    except Exception:
        return None


def _vmem_capacity_bytes():
    info = _tpu_info()
    if info is not None:
        for attr in ("vmem_capacity_bytes", "vmem_bytes", "vmem_size_bytes"):
            v = getattr(info, attr, None)
            if isinstance(v, (int, np.integer)) and v > 0:
                return int(v)
    return 64 * 1024 * 1024  # conservative default (v7x per-TC physical VMEM)


def _num_tensorcores():
    info = _tpu_info()
    if info is not None:
        for attr in ("num_cores", "core_count", "num_tensorcores", "cores_per_chip"):
            v = getattr(info, attr, None)
            if isinstance(v, (int, np.integer)) and v > 0:
                return int(v)
    return 1


def _vmem_bytes_recurrence(tc, Bb, Hp, L, Lr):
    """VMEM footprint of one recurrent grid step (double-buffered streams + resident blocks)."""
    f32, bf16 = 4, 2
    b = 0
    b += 2 * tc * Bb * 3 * Hp * bf16   # gi0 stream (bf16, double-buffered)
    b += 2 * tc * Bb * Hp * bf16       # tops stream (bf16, double-buffered)
    b += 2 * L * Bb * Hp * f32         # h0
    b += 2 * L * Hp * 3 * Hp * bf16    # whh (resident)
    b += 2 * Lr * Hp * 3 * Hp * bf16   # wih layers>0 (resident)
    b += 2 * Lr * 8 * 3 * Hp * f32     # gi-side biases (1 row, sublane-padded to 8)
    b += 2 * L * 8 * Hp * f32          # b_hh n-gate bias rows
    b += 2 * L * Bb * Hp * f32         # final-state output block
    b += L * Bb * Hp * f32             # carried-state scratch
    return b


def _pick_time_chunk(T, Bb, Hp, L, Lr, budget):
    best = 1
    for d in range(1, min(32, T) + 1):
        if T % d != 0:
            continue
        if T > 1 and (T // d) < 2:     # keep >=2 grid steps so gi0/tops DMAs stay pipelined
            continue
        if _vmem_bytes_recurrence(d, Bb, Hp, L, Lr) <= budget:
            best = d
    return best


# ----------------------------- recurrent kernel --------------------------------
def gru_recurrent_kernel(gi0_ref, h0_ref, whh_ref, wih_r_ref, bgi_r_ref, bhhn_ref,
                         tops_ref, hout_ref, h_scr, *, num_layers, hidden_p, t_chunk, unroll):
    """One grid step = `t_chunk` decoder timesteps (all GRU layers), for one batch chunk.

    gi0_ref   : (tc, Bb, 3Hp) bf16 precomputed layer-0 input gates (bias + context folded in)
    h0_ref    : (L,  Bb, Hp)  f32  initial hidden state (encoder final state)
    whh_ref   : (L,  Hp, 3Hp) bf16 hidden->gates weights (gate blocks 128-lane aligned)
    wih_r_ref : (L-1,Hp, 3Hp) bf16 input->gates weights for layers > 0 (dummy if L == 1)
    bgi_r_ref : (L-1,1,  3Hp) f32  folded gi-side biases for layers > 0 (single row)
    bhhn_ref  : (L,  1,  Hp)  f32  b_hh n-gate bias (single row)
    tops_ref  : (tc, Bb, Hp)  bf16 top-layer hidden state per timestep (lane-dense output)
    hout_ref  : (L,  Bb, Hp)  f32  final hidden state (written only on the last time chunk)
    h_scr     : (L,  Bb, Hp)  f32  VMEM scratch carrying the recurrent state across chunks
    """
    c = pl.program_id(1)
    Hp = hidden_p
    L = num_layers
    Bb = h0_ref.shape[1]

    @pl.when(c == 0)
    def _init():
        h_scr[...] = h0_ref[...]

    # Broadcast the (1, .) bias rows ONCE per grid step (outside the time loop) so no
    # broadcast_in_dim sits on the serial critical path.
    bhhn = [jnp.broadcast_to(bhhn_ref[l], (Bb, Hp)) for l in range(L)]
    bgi_r = [jnp.broadcast_to(bgi_r_ref[l], (Bb, 3 * Hp)) for l in range(L - 1)]

    def step(t, carry):
        gi = gi0_ref[t].astype(jnp.float32)               # (Bb, 3Hp)
        hs = [h_scr[l] for l in range(L)]
        # All L hidden->gate matmuls depend only on the previous timestep's state:
        # issue them back-to-back so the MXU pipelines them under the gate math.
        ghs = [jnp.dot(hs[l].astype(jnp.bfloat16), whh_ref[l],
                       preferred_element_type=jnp.float32) for l in range(L)]
        h_new = hs[0]
        for l in range(L):
            h_prev = hs[l]
            if l > 0:
                # layer l consumes layer l-1's fresh output
                gi = jnp.dot(h_new.astype(jnp.bfloat16), wih_r_ref[l - 1],
                             preferred_element_type=jnp.float32) + bgi_r[l - 1]
            gh = ghs[l]
            # PyTorch GRU gate order [r, z, n]; each gate block is 128-lane aligned.
            r = jax.nn.sigmoid(gi[:, 0:Hp] + gh[:, 0:Hp])
            z = jax.nn.sigmoid(gi[:, Hp:2 * Hp] + gh[:, Hp:2 * Hp])
            n = jnp.tanh(gi[:, 2 * Hp:3 * Hp] + r * (gh[:, 2 * Hp:3 * Hp] + bhhn[l]))
            h_new = (1.0 - z) * n + z * h_prev
            h_scr[l] = h_new
        tops_ref[t] = h_new.astype(tops_ref.dtype)        # write fresh top-layer state directly
        return carry

    jax.lax.fori_loop(0, t_chunk, step, 0, unroll=unroll)

    @pl.when(c == pl.num_programs(1) - 1)
    def _writeback():
        hout_ref[...] = h_scr[...]


# -------------------------- batched vocab-head kernel ---------------------------
def dense_head_kernel(x_ref, w_ref, b_ref, o_ref):
    """logits tile = x (Rm, Hp) bf16 @ w (Hp, Vt) bf16 + b, f32 accumulation, lane-dense output."""
    o_ref[...] = (jnp.dot(x_ref[...], w_ref[...], preferred_element_type=jnp.float32)
                  + b_ref[...]).astype(o_ref.dtype)


# ---------------------------------- wrapper -------------------------------------
def seq2seq_decoder_forward(X_tokens, state, params):
    """X_tokens: (B, T) int32 token ids; state: (L, B, H) encoder final hidden state."""
    # TODO(synk): embedding gather (data-dependent table lookup) stays in plain JAX/XLA.
    emb = params["embedding"][X_tokens]                      # (B, T, E)
    X = jnp.transpose(emb, (1, 0, 2)).astype(jnp.float32)    # (T, B, E) -- permute(1,0,2)
    T, B, E = X.shape
    L, _, H = state.shape
    V = params["dense_w"].shape[0]

    Bp = _round_up(B, 8)       # sublane padding
    Hp = _round_up(H, 128)     # lane padding: gate blocks land on 128-lane boundaries
    Vp = _round_up(V, 128)

    # ---- fold biases: gi-side gets b_ih + [b_hh_r, b_hh_z, 0]; gh-side keeps only b_hh_n
    b_gi, b_hhn = [], []
    for l in range(L):
        bi = params["b_ih"][l].astype(jnp.float32)
        bh = params["b_hh"][l].astype(jnp.float32)
        b_gi.append(bi + jnp.concatenate([bh[:2 * H], jnp.zeros((H,), jnp.float32)]))
        b_hhn.append(bh[2 * H:])

    # ---- layer-0 projection hoisted over ALL timesteps, in bf16 on the MXU (f32 accumulation).
    # The gate-block padding is applied to the SMALL weight so gi0 comes out directly as
    # (T, Bp, 3Hp); the time-invariant encoder context is projected ONCE (no (T,B,E+H) concat).
    w0 = params["w_ih"][0].astype(jnp.float32)                              # (3H, E+H)
    w0x_p = _pad_gate_cols(w0[:, :E].T, H, Hp).astype(jnp.bfloat16)         # (E, 3Hp)
    w0c_p = _pad_gate_cols(w0[:, E:].T, H, Hp).astype(jnp.bfloat16)         # (H, 3Hp)
    bgi0_p = _pad_gate_cols(b_gi[0], H, Hp)                                 # (3Hp,) f32

    Xp = _pad_axis(X, 1, Bp).astype(jnp.bfloat16)                           # (T, Bp, E)
    ctx_p = _pad_axis(state[-1].astype(jnp.float32), 0, Bp).astype(jnp.bfloat16)  # (Bp, H)

    gi_ctx = jnp.dot(ctx_p, w0c_p, preferred_element_type=jnp.float32) + bgi0_p   # (Bp, 3Hp)
    gi_x = jnp.dot(Xp.reshape(T * Bp, E), w0x_p,
                   preferred_element_type=jnp.float32).reshape(T, Bp, 3 * Hp)
    gi0_p = (gi_x + gi_ctx[None]).astype(jnp.bfloat16)                      # (T, Bp, 3Hp) bf16

    # ---- padded, gate-block weight / state layouts
    h0_p = _pad_axis(_pad_axis(state.astype(jnp.float32), 2, Hp), 1, Bp)    # (L, Bp, Hp) f32
    whh_p = jnp.stack(
        [_pad_axis(_pad_gate_cols(params["w_hh"][l].T.astype(jnp.float32), H, Hp), 0, Hp)
         for l in range(L)]).astype(jnp.bfloat16)                           # (L, Hp, 3Hp)
    if L > 1:
        wih_r_p = jnp.stack(
            [_pad_axis(_pad_gate_cols(params["w_ih"][l].T.astype(jnp.float32), H, Hp), 0, Hp)
             for l in range(1, L)]).astype(jnp.bfloat16)                    # (L-1, Hp, 3Hp)
        bgi_r_p = jnp.stack([_pad_gate_cols(b_gi[l], H, Hp)
                             for l in range(1, L)])[:, None, :]             # (L-1, 1, 3Hp)
    else:
        wih_r_p = jnp.zeros((1, Hp, 3 * Hp), jnp.bfloat16)                  # dummy, unused
        bgi_r_p = jnp.zeros((1, 1, 3 * Hp), jnp.float32)
    bhhn_p = jnp.stack([_pad_axis(b_hhn[l], 0, Hp) for l in range(L)])[:, None, :]  # (L, 1, Hp)
    Lr = wih_r_p.shape[0]

    # ---- chunking: split the batch across a leading grid axis only if there are 2 TensorCores
    num_tc = _num_tensorcores()
    if num_tc >= 2 and Bp % 16 == 0:
        Bb, nbc = Bp // 2, 2
        batch_sem = getattr(pltpu, "CORE_PARALLEL", "parallel")
    else:
        Bb, nbc = Bp, 1
        batch_sem = "arbitrary"

    vmem_cap = _vmem_capacity_bytes()
    budget = int(0.7 * vmem_cap)
    tc = _pick_time_chunk(T, Bb, Hp, L, Lr, budget)
    ntc = T // tc
    unroll = min(tc, 8 if Bb * Hp <= 8 * 256 else 4)   # capped unroll: visibility w/o vreg spills
    needed = _vmem_bytes_recurrence(tc, Bb, Hp, L, Lr)
    rec_limit = int(min(0.9 * vmem_cap, max(needed * 1.5, 32 * 1024 * 1024)))

    kernel = functools.partial(gru_recurrent_kernel, num_layers=L, hidden_p=Hp,
                               t_chunk=tc, unroll=unroll)
    tops, h_final_p = pl.pallas_call(
        kernel,
        out_shape=(jax.ShapeDtypeStruct((T, Bp, Hp), jnp.bfloat16),
                   jax.ShapeDtypeStruct((L, Bp, Hp), jnp.float32)),
        grid_spec=pltpu.PrefetchScalarGridSpec(
            num_scalar_prefetch=0,
            grid=(nbc, ntc),
            in_specs=[
                pl.BlockSpec((tc, Bb, 3 * Hp), lambda b, c: (c, b, 0)),   # gi0 stream (bf16)
                pl.BlockSpec((L, Bb, Hp), lambda b, c: (0, b, 0)),        # h0
                pl.BlockSpec((L, Hp, 3 * Hp), lambda b, c: (0, 0, 0)),    # whh (bf16, resident)
                pl.BlockSpec((Lr, Hp, 3 * Hp), lambda b, c: (0, 0, 0)),   # wih layers>0 (bf16)
                pl.BlockSpec((Lr, 1, 3 * Hp), lambda b, c: (0, 0, 0)),    # gi biases l>0 (rows)
                pl.BlockSpec((L, 1, Hp), lambda b, c: (0, 0, 0)),         # b_hh n-gate (rows)
            ],
            out_specs=(pl.BlockSpec((tc, Bb, Hp), lambda b, c: (c, b, 0)),
                       pl.BlockSpec((L, Bb, Hp), lambda b, c: (0, b, 0))),
            scratch_shapes=[pltpu.VMEM((L, Bb, Hp), jnp.float32)],
        ),
        compiler_params=pltpu.CompilerParams(
            dimension_semantics=(batch_sem, "arbitrary"),
            vmem_limit_bytes=rec_limit),
    )(gi0_p, h0_p, whh_p, wih_r_p, bgi_r_p, bhhn_p)

    # ---- batched vocab head: vocab OUTER / rows INNER so the (Hp, Vt) weight tile stays
    # ---- resident in VMEM across the row sweep (no per-row-tile re-streaming of the weight).
    wd_p = _pad_axis(_pad_axis(params["dense_w"].T.astype(jnp.float32), 0, Hp),
                     1, Vp).astype(jnp.bfloat16)                              # (Hp, Vp)
    bd_p = _pad_axis(params["dense_b"].astype(jnp.float32)[None, :], 1, Vp)   # (1, Vp)

    rows = T * Bp                                       # multiple of 8 by construction
    Rm = _pick_div(rows, (512, 256, 128, 64, 32, 16, 8))
    Vt = _pick_div(Vp, (512, 256, 128))
    x2d = tops.reshape(rows, Hp)                        # bf16, no padding copy needed
    head_bytes = 2 * (Rm * Hp * 2 + Hp * Vt * 2 + 8 * Vt * 4 + Rm * Vt * 4)
    head_limit = int(min(0.9 * vmem_cap, max(head_bytes * 2, 32 * 1024 * 1024)))

    logits2d = pl.pallas_call(
        dense_head_kernel,
        out_shape=jax.ShapeDtypeStruct((rows, Vp), jnp.float32),
        grid_spec=pltpu.PrefetchScalarGridSpec(
            num_scalar_prefetch=0,
            grid=(Vp // Vt, rows // Rm),
            in_specs=[pl.BlockSpec((Rm, Hp), lambda j, i: (i, 0)),
                      pl.BlockSpec((Hp, Vt), lambda j, i: (0, j)),
                      pl.BlockSpec((1, Vt), lambda j, i: (0, j))],
            out_specs=pl.BlockSpec((Rm, Vt), lambda j, i: (i, j)),
        ),
        compiler_params=pltpu.CompilerParams(
            dimension_semantics=("parallel", "arbitrary"),
            vmem_limit_bytes=head_limit),
    )(x2d, wd_p, bd_p)

    logits = logits2d.reshape(T, Bp, Vp)[:, :B, :V]            # unpad
    output = jnp.transpose(logits, (1, 0, 2))                  # (B, T, V) -- permute(1,0,2)
    h_final = h_final_p[:, :B, :H]
    return output, h_final


# ---------------------------- pure-JAX reference ------------------------------
def reference_forward(X_tokens, state, params):
    emb = params["embedding"][X_tokens]
    X = jnp.transpose(emb, (1, 0, 2))
    T, B, E = X.shape
    L, _, H = state.shape
    context = jnp.broadcast_to(state[-1][None], (T, B, H))
    x_cat = jnp.concatenate([X, context], axis=2)

    def step(h, x_t):
        inp = x_t
        new_h = []
        for l in range(L):
            h_prev = h[l]
            gi = inp @ params["w_ih"][l].T + params["b_ih"][l]
            gh = h_prev @ params["w_hh"][l].T + params["b_hh"][l]
            r = jax.nn.sigmoid(gi[:, :H] + gh[:, :H])
            z = jax.nn.sigmoid(gi[:, H:2 * H] + gh[:, H:2 * H])
            n = jnp.tanh(gi[:, 2 * H:] + r * gh[:, 2 * H:])
            h_new = (1.0 - z) * n + z * h_prev
            new_h.append(h_new)
            inp = h_new
        h = jnp.stack(new_h)
        return h, h[-1]

    h_final, tops = jax.lax.scan(step, state, x_cat)
    logits = tops @ params["dense_w"].T + params["dense_b"]
    return jnp.transpose(logits, (1, 0, 2)), h_final


# ---------------------------------- main ---------------------------------------
if __name__ == "__main__":
    vocab_size, embed_size, num_hiddens, num_layers = 32, 16, 32, 2
    B, T = 4, 8
    H, E = num_hiddens, embed_size

    key = jax.random.PRNGKey(0)
    ks = jax.random.split(key, 16)
    scale = 0.1

    params = {
        "embedding": jax.random.normal(ks[0], (vocab_size, embed_size), jnp.float32),
        "w_ih": [
            scale * jax.random.normal(ks[1], (3 * H, E + H), jnp.float32),   # layer 0
            scale * jax.random.normal(ks[2], (3 * H, H), jnp.float32),       # layer 1
        ],
        "w_hh": [
            scale * jax.random.normal(ks[3], (3 * H, H), jnp.float32),
            scale * jax.random.normal(ks[4], (3 * H, H), jnp.float32),
        ],
        "b_ih": [
            scale * jax.random.normal(ks[5], (3 * H,), jnp.float32),
            scale * jax.random.normal(ks[6], (3 * H,), jnp.float32),
        ],
        "b_hh": [
            scale * jax.random.normal(ks[7], (3 * H,), jnp.float32),
            scale * jax.random.normal(ks[8], (3 * H,), jnp.float32),
        ],
        "dense_w": scale * jax.random.normal(ks[9], (vocab_size, H), jnp.float32),
        "dense_b": scale * jax.random.normal(ks[10], (vocab_size,), jnp.float32),
    }

    X_tokens = jax.random.randint(ks[11], (B, T), 0, vocab_size, jnp.int32)
    enc_state = jax.random.normal(ks[12], (num_layers, B, H), jnp.float32)  # init_state(enc_outputs)

    fwd = jax.jit(seq2seq_decoder_forward)
    out, h_final = fwd(X_tokens, enc_state, params)
    out = jax.block_until_ready(out)
    h_final = jax.block_until_ready(h_final)

    ref_out, ref_h = reference_forward(X_tokens, enc_state, params)
    ref_out = jax.block_until_ready(ref_out)
    ref_h = jax.block_until_ready(ref_h)

    assert out.shape == (B, T, vocab_size) and h_final.shape == (num_layers, B, H)
    # bf16 MXU inputs + bf16-streamed gi0/tops (all with f32 accumulation) introduce small drift
    # vs the pure-f32 reference.
    np.testing.assert_allclose(np.asarray(out), np.asarray(ref_out), atol=3e-2, rtol=3e-2)
    np.testing.assert_allclose(np.asarray(h_final), np.asarray(ref_h), atol=3e-2, rtol=3e-2)

    print("KERNEL_OK")
</pallas_src>

<mosaic_0001>
module attributes {stable_mosaic.version = 11 : i64} {
  func.func @dense_head_kernel(%arg0: i32, %arg1: i32, %arg2: memref<64x128xbf16, #tpu.memory_space<vmem>>, %arg3: memref<128x128xbf16, #tpu.memory_space<vmem>>, %arg4: memref<1x128xf32, #tpu.memory_space<vmem>>, %arg5: memref<64x128xf32, #tpu.memory_space<vmem>>) attributes {dimension_semantics = [#tpu.dimension_semantics<parallel>, #tpu.dimension_semantics<arbitrary>], iteration_bounds = array<i64: 1, 1>, scalar_prefetch = 0 : i64, scratch_operands = 0 : i64, tpu.core_type = #tpu.core_type<tc>, window_params = [{transform_indices = @transform_0, window_bounds = array<i64: 64, 128>}, {transform_indices = @transform_1, window_bounds = array<i64: 128, 128>}, {transform_indices = @transform_2, window_bounds = array<i64: 1, 128>}, {transform_indices = @transform_3, window_bounds = array<i64: 64, 128>}]} {
    %c0 = arith.constant 0 : index
    %c0_0 = arith.constant 0 : index
    %0 = vector.load %arg2[%c0, %c0_0] : memref<64x128xbf16, #tpu.memory_space<vmem>>, vector<64x128xbf16>
    %c0_1 = arith.constant 0 : index
    %c0_2 = arith.constant 0 : index
    %1 = vector.load %arg3[%c0_1, %c0_2] : memref<128x128xbf16, #tpu.memory_space<vmem>>, vector<128x128xbf16>
    %cst = arith.constant dense<0.000000e+00> : vector<64x128xf32>
    %2 = tpu.matmul %0, %1, %cst {dimension_numbers = #tpu.dot_dimension_numbers<[1], [0], [0], [1], [0, 0, 1, 1], [], []>} : vector<64x128xbf16>, vector<128x128xbf16>, vector<64x128xf32> -> vector<64x128xf32>
    %c0_3 = arith.constant 0 : index
    %c0_4 = arith.constant 0 : index
    %3 = vector.load %arg4[%c0_3, %c0_4] : memref<1x128xf32, #tpu.memory_space<vmem>>, vector<1x128xf32>
    %4 = vector.broadcast %3 : vector<1x128xf32> to vector<64x128xf32>
    %5 = arith.addf %2, %4 : vector<64x128xf32>
    %c0_5 = arith.constant 0 : index
    %c0_6 = arith.constant 0 : index
    %6 = vector.load %arg5[%c0_5, %c0_6] : memref<64x128xf32, #tpu.memory_space<vmem>>, vector<64x128xf32>
    tpu.vector_store %arg5[%c0_5, %c0_6], %5 {strides = array<i32>} : memref<64x128xf32, #tpu.memory_space<vmem>>, vector<64x128xf32>,
    return
  }
  func.func @transform_0(%arg0: i32, %arg1: i32) -> (i32, i32) {
    %c0_i32 = arith.constant 0 : i32
    %c0_i32_0 = arith.constant 0 : i32
    return %arg1, %c0_i32 : i32, i32
  }
  func.func @transform_1(%arg0: i32, %arg1: i32) -> (i32, i32) {
    %c0_i32 = arith.constant 0 : i32
    %c0_i32_0 = arith.constant 0 : i32
    return %c0_i32, %arg0 : i32, i32
  }
  func.func @transform_2(%arg0: i32, %arg1: i32) -> (i32, i32) {
    %c0_i32 = arith.constant 0 : i32
    %c0_i32_0 = arith.constant 0 : i32
    return %c0_i32, %arg0 : i32, i32
  }
  func.func @transform_3(%arg0: i32, %arg1: i32) -> (i32, i32) {
    %c0_i32 = arith.constant 0 : i32
    return %arg1, %arg0 : i32, i32
  }
}

module attributes {stable_mosaic.version = 11 : i64} {
  func.func @gru_recurrent_kernel(%arg0: i32, %arg1: i32, %arg2: memref<4x8x384xbf16, #tpu.memory_space<vmem>>, %arg3: memref<2x8x128xf32, #tpu.memory_space<vmem>>, %arg4: memref<2x128x384xbf16, #tpu.memory_space<vmem>>, %arg5: memref<1x128x384xbf16, #tpu.memory_space<vmem>>, %arg6: memref<1x1x384xf32, #tpu.memory_space<vmem>>, %arg7: memref<2x1x128xf32, #tpu.memory_space<vmem>>, %arg8: memref<4x8x128xbf16, #tpu.memory_space<vmem>>, %arg9: memref<2x8x128xf32, #tpu.memory_space<vmem>>, %arg10: memref<2x8x128xf32, #tpu.memory_space<vmem>>) attributes {dimension_semantics = [#tpu.dimension_semantics<arbitrary>, #tpu.dimension_semantics<arbitrary>], iteration_bounds = array<i64: 1, 2>, scalar_prefetch = 0 : i64, scratch_operands = 1 : i64, tpu.core_type = #tpu.core_type<tc>, window_params = [{transform_indices = @transform_0, window_bounds = array<i64: 4, 8, 384>}, {transform_indices = @transform_1, window_bounds = array<i64: 2, 8, 128>}, {pipeline_mode = #tpu.pipeline_mode<synchronous>, transform_indices = @transform_2, window_bounds = array<i64: 2, 128, 384>}, {pipeline_mode = #tpu.pipeline_mode<synchronous>, transform_indices = @transform_3, window_bounds = array<i64: 1, 128, 384>}, {pipeline_mode = #tpu.pipeline_mode<synchronous>, transform_indices = @transform_4, window_bounds = array<i64: 1, 1, 384>}, {pipeline_mode = #tpu.pipeline_mode<synchronous>, transform_indices = @transform_5, window_bounds = array<i64: 2, 1, 128>}, {transform_indices = @transform_6, window_bounds = array<i64: 4, 8, 128>}, {transform_indices = @transform_7, window_bounds = array<i64: 2, 8, 128>}]} {
    %c0_i32 = arith.constant 0 : i32
    %0 = arith.cmpi eq, %arg1, %c0_i32 : i32
    %1 = arith.extui %0 : i1 to i32
    %c0_i32_0 = arith.constant 0 : i32
    %2 = arith.cmpi ne, %1, %c0_i32_0 : i32
    scf.if %2 {
      %c0_146 = arith.constant 0 : index
      %c0_147 = arith.constant 0 : index
      %c0_148 = arith.constant 0 : index
      %362 = vector.load %arg3[%c0_146, %c0_147, %c0_148] : memref<2x8x128xf32, #tpu.memory_space<vmem>>, vector<2x8x128xf32>
      %c0_149 = arith.constant 0 : index
      %c0_150 = arith.constant 0 : index
      %c0_151 = arith.constant 0 : index
      %363 = vector.load %arg10[%c0_149, %c0_150, %c0_151] : memref<2x8x128xf32, #tpu.memory_space<vmem>>, vector<2x8x128xf32>
      tpu.vector_store %arg10[%c0_149, %c0_150, %c0_151], %362 {strides = array<i32>} : memref<2x8x128xf32, #tpu.memory_space<vmem>>, vector<2x8x128xf32>,
    } else {
    }
    %c0 = arith.constant 0 : index
    %c0_1 = arith.constant 0 : index
    %c0_2 = arith.constant 0 : index
    %3 = vector.load %arg7[%c0, %c0_1, %c0_2] : memref<2x1x128xf32, #tpu.memory_space<vmem>>, vector<1x1x128xf32>
    %4 = vector.shape_cast %3 : vector<1x1x128xf32> to vector<1x128xf32>
    %5 = vector.shape_cast %4 : vector<1x128xf32> to vector<1x128xf32>
    %6 = vector.broadcast %5 : vector<1x128xf32> to vector<8x128xf32>
    %c1 = arith.constant 1 : index
    %c0_3 = arith.constant 0 : index
    %c0_4 = arith.constant 0 : index
    %7 = vector.load %arg7[%c1, %c0_3, %c0_4] : memref<2x1x128xf32, #tpu.memory_space<vmem>>, vector<1x1x128xf32>
    %8 = vector.shape_cast %7 : vector<1x1x128xf32> to vector<1x128xf32>
    %9 = vector.shape_cast %8 : vector<1x128xf32> to vector<1x128xf32>
    %10 = vector.broadcast %9 : vector<1x128xf32> to vector<8x128xf32>
    %c0_5 = arith.constant 0 : index
    %c0_6 = arith.constant 0 : index
    %c0_7 = arith.constant 0 : index
    %11 = vector.load %arg6[%c0_5, %c0_6, %c0_7] : memref<1x1x384xf32, #tpu.memory_space<vmem>>, vector<1x1x384xf32>
    %12 = vector.shape_cast %11 : vector<1x1x384xf32> to vector<1x384xf32>
    %13 = vector.shape_cast %12 : vector<1x384xf32> to vector<1x384xf32>
    %14 = vector.broadcast %13 : vector<1x384xf32> to vector<8x384xf32>
    %c0_i32_8 = arith.constant 0 : i32
    %15 = arith.index_cast %c0_i32_8 : i32 to index
    %c0_9 = arith.constant 0 : index
    %c0_10 = arith.constant 0 : index
    %16 = vector.load %arg2[%15, %c0_9, %c0_10] : memref<4x8x384xbf16, #tpu.memory_space<vmem>>, vector<1x8x384xbf16>
    %17 = vector.shape_cast %16 : vector<1x8x384xbf16> to vector<8x384xbf16>
    %18 = arith.extf %17 : vector<8x384xbf16> to vector<8x384xf32>
    %c0_11 = arith.constant 0 : index
    %c0_12 = arith.constant 0 : index
    %c0_13 = arith.constant 0 : index
    %19 = vector.load %arg10[%c0_11, %c0_12, %c0_13] : memref<2x8x128xf32, #tpu.memory_space<vmem>>, vector<1x8x128xf32>
    %20 = vector.shape_cast %19 : vector<1x8x128xf32> to vector<8x128xf32>
    %c1_14 = arith.constant 1 : index
    %c0_15 = arith.constant 0 : index
    %c0_16 = arith.constant 0 : index
    %21 = vector.load %arg10[%c1_14, %c0_15, %c0_16] : memref<2x8x128xf32, #tpu.memory_space<vmem>>, vector<1x8x128xf32>
    %22 = vector.shape_cast %21 : vector<1x8x128xf32> to vector<8x128xf32>
    %23 = arith.truncf %20 : vector<8x128xf32> to vector<8x128xbf16>
    %c0_17 = arith.constant 0 : index
    %c0_18 = arith.constant 0 : index
    %c0_19 = arith.constant 0 : index
    %24 = vector.load %arg4[%c0_17, %c0_18, %c0_19] : memref<2x128x384xbf16, #tpu.memory_space<vmem>>, vector<1x128x384xbf16>
    %25 = vector.shape_cast %24 : vector<1x128x384xbf16> to vector<128x384xbf16>
    %cst = arith.constant dense<0.000000e+00> : vector<8x384xf32>
    %26 = tpu.matmul %23, %25, %cst {dimension_numbers = #tpu.dot_dimension_numbers<[1], [0], [0], [1], [0, 0, 1, 1], [], []>} : vector<8x128xbf16>, vector<128x384xbf16>, vector<8x384xf32> -> vector<8x384xf32>
    %27 = arith.truncf %22 : vector<8x128xf32> to vector<8x128xbf16>
    %c1_20 = arith.constant 1 : index
    %c0_21 = arith.constant 0 : index
    %c0_22 = arith.constant 0 : index
    %28 = vector.load %arg4[%c1_20, %c0_21, %c0_22] : memref<2x128x384xbf16, #tpu.memory_space<vmem>>, vector<1x128x384xbf16>
    %29 = vector.shape_cast %28 : vector<1x128x384xbf16> to vector<128x384xbf16>
    %cst_23 = arith.constant dense<0.000000e+00> : vector<8x384xf32>
    %30 = tpu.matmul %27, %29, %cst_23 {dimension_numbers = #tpu.dot_dimension_numbers<[1], [0], [0], [1], [0, 0, 1, 1], [], []>} : vector<8x128xbf16>, vector<128x384xbf16>, vector<8x384xf32> -> vector<8x384xf32>
    %31 = vector.extract_strided_slice %18 {offsets = [0, 0], sizes = [8, 128], strides = [1, 1]} : vector<8x384xf32> to vector<8x128xf32>
    %32 = vector.extract_strided_slice %26 {offsets = [0, 0], sizes = [8, 128], strides = [1, 1]} : vector<8x384xf32> to vector<8x128xf32>
    %33 = arith.addf %31, %32 : vector<8x128xf32>
    %34 = arith.negf %33 : vector<8x128xf32>
    %35 = math.exp %34 : vector<8x128xf32>
    %cst_24 = arith.constant 1.000000e+00 : f32
    %36 = vector.broadcast %cst_24 : f32 to vector<8x128xf32>
    %37 = arith.addf %36, %35 : vector<8x128xf32>
    %38 = arith.divf %36, %37 : vector<8x128xf32>
    %39 = vector.extract_strided_slice %18 {offsets = [0, 128], sizes = [8, 128], strides = [1, 1]} : vector<8x384xf32> to vector<8x128xf32>
    %40 = vector.extract_strided_slice %26 {offsets = [0, 128], sizes = [8, 128], strides = [1, 1]} : vector<8x384xf32> to vector<8x128xf32>
    %41 = arith.addf %39, %40 : vector<8x128xf32>
    %42 = arith.negf %41 : vector<8x128xf32>
    %43 = math.exp %42 : vector<8x128xf32>
    %cst_25 = arith.constant 1.000000e+00 : f32
    %44 = vector.broadcast %cst_25 : f32 to vector<8x128xf32>
    %45 = arith.addf %44, %43 : vector<8x128xf32>
    %46 = arith.divf %44, %45 : vector<8x128xf32>
    %47 = vector.extract_strided_slice %18 {offsets = [0, 256], sizes = [8, 128], strides = [1, 1]} : vector<8x384xf32> to vector<8x128xf32>
    %48 = vector.extract_strided_slice %26 {offsets = [0, 256], sizes = [8, 128], strides = [1, 1]} : vector<8x384xf32> to vector<8x128xf32>
    %49 = arith.addf %48, %6 : vector<8x128xf32>
    %50 = arith.mulf %38, %49 : vector<8x128xf32>
    %51 = arith.addf %47, %50 : vector<8x128xf32>
    %52 = math.tanh %51 : vector<8x128xf32>
    %cst_26 = arith.constant 1.000000e+00 : f32
    %53 = vector.broadcast %cst_26 : f32 to vector<8x128xf32>
    %54 = arith.subf %53, %46 : vector<8x128xf32>
    %55 = arith.mulf %54, %52 : vector<8x128xf32>
    %56 = arith.mulf %46, %20 : vector<8x128xf32>
    %57 = arith.addf %55, %56 : vector<8x128xf32>
    %c0_27 = arith.constant 0 : index
    %c0_28 = arith.constant 0 : index
    %c0_29 = arith.constant 0 : index
    %58 = vector.load %arg10[%c0_27, %c0_28, %c0_29] : memref<2x8x128xf32, #tpu.memory_space<vmem>>, vector<1x8x128xf32>
    %59 = vector.shape_cast %58 : vector<1x8x128xf32> to vector<8x128xf32>
    %60 = vector.shape_cast %57 : vector<8x128xf32> to vector<1x8x128xf32>
    tpu.vector_store %arg10[%c0_27, %c0_28, %c0_29], %60 {strides = array<i32>} : memref<2x8x128xf32, #tpu.memory_space<vmem>>, vector<1x8x128xf32>,
    %61 = arith.truncf %57 : vector<8x128xf32> to vector<8x128xbf16>
    %c0_30 = arith.constant 0 : index
    %c0_31 = arith.constant 0 : index
    %c0_32 = arith.constant 0 : index
    %62 = vector.load %arg5[%c0_30, %c0_31, %c0_32] : memref<1x128x384xbf16, #tpu.memory_space<vmem>>, vector<1x128x384xbf16>
    %63 = vector.shape_cast %62 : vector<1x128x384xbf16> to vector<128x384xbf16>
    %cst_33 = arith.constant dense<0.000000e+00> : vector<8x384xf32>
    %64 = tpu.matmul %61, %63, %cst_33 {dimension_numbers = #tpu.dot_dimension_numbers<[1], [0], [0], [1], [0, 0, 1, 1], [], []>} : vector<8x128xbf16>, vector<128x384xbf16>, vector<8x384xf32> -> vector<8x384xf32>
    %65 = arith.addf %64, %14 : vector<8x384xf32>
    %66 = vector.extract_strided_slice %65 {offsets = [0, 0], sizes = [8, 128], strides = [1, 1]} : vector<8x384xf32> to vector<8x128xf32>
    %67 = vector.extract_strided_slice %30 {offsets = [0, 0], sizes = [8, 128], strides = [1, 1]} : vector<8x384xf32> to vector<8x128xf32>
    %68 = arith.addf %66, %67 : vector<8x128xf32>
    %69 = arith.negf %68 : vector<8x128xf32>
    %70 = math.exp %69 : vector<8x128xf32>
    %cst_34 = arith.constant 1.000000e+00 : f32
    %71 = vector.broadcast %cst_34 : f32 to vector<8x128xf32>
    %72 = arith.addf %71, %70 : vector<8x128xf32>
    %73 = arith.divf %71, %72 : vector<8x128xf32>
    %74 = vector.extract_strided_slice %65 {offsets = [0, 128], sizes = [8, 128], strides = [1, 1]} : vector<8x384xf32> to vector<8x128xf32>
    %75 = vector.extract_strided_slice %30 {offsets = [0, 128], sizes = [8, 128], strides = [1, 1]} : vector<8x384xf32> to vector<8x128xf32>
    %76 = arith.addf %74, %75 : vector<8x128xf32>
    %77 = arith.negf %76 : vector<8x128xf32>
    %78 = math.exp %77 : vector<8x128xf32>
    %cst_35 = arith.constant 1.000000e+00 : f32
    %79 = vector.broadcast %cst_35 : f32 to vector<8x128xf32>
    %80 = arith.addf %79, %78 : vector<8x128xf32>
    %81 = arith.divf %79, %80 : vector<8x128xf32>
    %82 = vector.extract_strided_slice %65 {offsets = [0, 256], sizes = [8, 128], strides = [1, 1]} : vector<8x384xf32> to vector<8x128xf32>
    %83 = vector.extract_strided_slice %30 {offsets = [0, 256], sizes = [8, 128], strides = [1, 1]} : vector<8x384xf32> to vector<8x128xf32>
    %84 = arith.addf %83, %10 : vector<8x128xf32>
    %85 = arith.mulf %73, %84 : vector<8x128xf32>
    %86 = arith.addf %82, %85 : vector<8x128xf32>
    %87 = math.tanh %86 : vector<8x128xf32>
    %cst_36 = arith.constant 1.000000e+00 : f32
    %88 = vector.broadcast %cst_36 : f32 to vector<8x128xf32>
    %89 = arith.subf %88, %81 : vector<8x128xf32>
    %90 = arith.mulf %89, %87 : vector<8x128xf32>
    %91 = arith.mulf %81, %22 : vector<8x128xf32>
    %92 = arith.addf %90, %91 : vector<8x128xf32>
    %c1_37 = arith.constant 1 : index
    %c0_38 = arith.constant 0 : index
    %c0_39 = arith.constant 0 : index
    %93 = vector.load %arg10[%c1_37, %c0_38, %c0_39] : memref<2x8x128xf32, #tpu.memory_space<vmem>>, vector<1x8x128xf32>
    %94 = vector.shape_cast %93 : vector<1x8x128xf32> to vector<8x128xf32>
    %95 = vector.shape_cast %92 : vector<8x128xf32> to vector<1x8x128xf32>
    tpu.vector_store %arg10[%c1_37, %c0_38, %c0_39], %95 {strides = array<i32>} : memref<2x8x128xf32, #tpu.memory_space<vmem>>, vector<1x8x128xf32>,
    %96 = arith.truncf %92 : vector<8x128xf32> to vector<8x128xbf16>
    %97 = arith.index_cast %c0_i32_8 : i32 to index
    %c0_40 = arith.constant 0 : index
    %c0_41 = arith.constant 0 : index
    %98 = vector.load %arg8[%97, %c0_40, %c0_41] : memref<4x8x128xbf16, #tpu.memory_space<vmem>>, vector<1x8x128xbf16>
    %99 = vector.shape_cast %98 : vector<1x8x128xbf16> to vector<8x128xbf16>
    %100 = vector.shape_cast %96 : vector<8x128xbf16> to vector<1x8x128xbf16>
    tpu.vector_store %arg8[%97, %c0_40, %c0_41], %100 {strides = array<i32>} : memref<4x8x128xbf16, #tpu.memory_space<vmem>>, vector<1x8x128xbf16>,
    %c1_i32 = arith.constant 1 : i32
    %101 = arith.index_cast %c1_i32 : i32 to index
    %c0_42 = arith.constant 0 : index
    %c0_43 = arith.constant 0 : index
    %102 = vector.load %arg2[%101, %c0_42, %c0_43] : memref<4x8x384xbf16, #tpu.memory_space<vmem>>, vector<1x8x384xbf16>
    %103 = vector.shape_cast %102 : vector<1x8x384xbf16> to vector<8x384xbf16>
    %104 = arith.extf %103 : vector<8x384xbf16> to vector<8x384xf32>
    %c0_44 = arith.constant 0 : index
    %c0_45 = arith.constant 0 : index
    %c0_46 = arith.constant 0 : index
    %105 = vector.load %arg10[%c0_44, %c0_45, %c0_46] : memref<2x8x128xf32, #tpu.memory_space<vmem>>, vector<1x8x128xf32>
    %106 = vector.shape_cast %105 : vector<1x8x128xf32> to vector<8x128xf32>
    %c1_47 = arith.constant 1 : index
    %c0_48 = arith.constant 0 : index
    %c0_49 = arith.constant 0 : index
    %107 = vector.load %arg10[%c1_47, %c0_48, %c0_49] : memref<2x8x128xf32, #tpu.memory_space<vmem>>, vector<1x8x128xf32>
    %108 = vector.shape_cast %107 : vector<1x8x128xf32> to vector<8x128xf32>
    %109 = arith.truncf %106 : vector<8x128xf32> to vector<8x128xbf16>
    %c0_50 = arith.constant 0 : index
    %c0_51 = arith.constant 0 : index
    %c0_52 = arith.constant 0 : index
    %110 = vector.load %arg4[%c0_50, %c0_51, %c0_52] : memref<2x128x384xbf16, #tpu.memory_space<vmem>>, vector<1x128x384xbf16>
    %111 = vector.shape_cast %110 : vector<1x128x384xbf16> to vector<128x384xbf16>
    %cst_53 = arith.constant dense<0.000000e+00> : vector<8x384xf32>
    %112 = tpu.matmul %109, %111, %cst_53 {dimension_numbers = #tpu.dot_dimension_numbers<[1], [0], [0], [1], [0, 0, 1, 1], [], []>} : vector<8x128xbf16>, vector<128x384xbf16>, vector<8x384xf32> -> vector<8x384xf32>
    %113 = arith.truncf %108 : vector<8x128xf32> to vector<8x128xbf16>
    %c1_54 = arith.constant 1 : index
    %c0_55 = arith.constant 0 : index
    %c0_56 = arith.constant 0 : index
    %114 = vector.load %arg4[%c1_54, %c0_55, %c0_56] : memref<2x128x384xbf16, #tpu.memory_space<vmem>>, vector<1x128x384xbf16>
    %115 = vector.shape_cast %114 : vector<1x128x384xbf16> to vector<128x384xbf16>
    %cst_57 = arith.constant dense<0.000000e+00> : vector<8x384xf32>
    %116 = tpu.matmul %113, %115, %cst_57 {dimension_numbers = #tpu.dot_dimension_numbers<[1], [0], [0], [1], [0, 0, 1, 1], [], []>} : vector<8x128xbf16>, vector<128x384xbf16>, vector<8x384xf32> -> vector<8x384xf32>
    %117 = vector.extract_strided_slice %104 {offsets = [0, 0], sizes = [8, 128], strides = [1, 1]} : vector<8x384xf32> to vector<8x128xf32>
    %118 = vector.extract_strided_slice %112 {offsets = [0, 0], sizes = [8, 128], strides = [1, 1]} : vector<8x384xf32> to vector<8x128xf32>
    %119 = arith.addf %117, %118 : vector<8x128xf32>
    %120 = arith.negf %119 : vector<8x128xf32>
    %121 = math.exp %120 : vector<8x128xf32>
    %cst_58 = arith.constant 1.000000e+00 : f32
    %122 = vector.broadcast %cst_58 : f32 to vector<8x128xf32>
    %123 = arith.addf %122, %121 : vector<8x128xf32>
    %124 = arith.divf %122, %123 : vector<8x128xf32>
    %125 = vector.extract_strided_slice %104 {offsets = [0, 128], sizes = [8, 128], strides = [1, 1]} : vector<8x384xf32> to vector<8x128xf32>
    %126 = vector.extract_strided_slice %112 {offsets = [0, 128], sizes = [8, 128], strides = [1, 1]} : vector<8x384xf32> to vector<8x128xf32>
    %127 = arith.addf %125, %126 : vector<8x128xf32>
    %128 = arith.negf %127 : vector<8x128xf32>
    %129 = math.exp %128 : vector<8x128xf32>
    %cst_59 = arith.constant 1.000000e+00 : f32
    %130 = vector.broadcast %cst_59 : f32 to vector<8x128xf32>
    %131 = arith.addf %130, %129 : vector<8x128xf32>
    %132 = arith.divf %130, %131 : vector<8x128xf32>
    %133 = vector.extract_strided_slice %104 {offsets = [0, 256], sizes = [8, 128], strides = [1, 1]} : vector<8x384xf32> to vector<8x128xf32>
    %134 = vector.extract_strided_slice %112 {offsets = [0, 256], sizes = [8, 128], strides = [1, 1]} : vector<8x384xf32> to vector<8x128xf32>
    %135 = arith.addf %134, %6 : vector<8x128xf32>
    %136 = arith.mulf %124, %135 : vector<8x128xf32>
    %137 = arith.addf %133, %136 : vector<8x128xf32>
    %138 = math.tanh %137 : vector<8x128xf32>
    %cst_60 = arith.constant 1.000000e+00 : f32
    %139 = vector.broadcast %cst_60 : f32 to vector<8x128xf32>
    %140 = arith.subf %139, %132 : vector<8x128xf32>
    %141 = arith.mulf %140, %138 : vector<8x128xf32>
    %142 = arith.mulf %132, %106 : vector<8x128xf32>
    %143 = arith.addf %141, %142 : vector<8x128xf32>
    %c0_61 = arith.constant 0 : index
    %c0_62 = arith.constant 0 : index
    %c0_63 = arith.constant 0 : index
    %144 = vector.load %arg10[%c0_61, %c0_62, %c0_63] : memref<2x8x128xf32, #tpu.memory_space<vmem>>, vector<1x8x128xf32>
    %145 = vector.shape_cast %144 : vector<1x8x128xf32> to vector<8x128xf32>
    %146 = vector.shape_cast %143 : vector<8x128xf32> to vector<1x8x128xf32>
    tpu.vector_store %arg10[%c0_61, %c0_62, %c0_63], %146 {strides = array<i32>} : memref<2x8x128xf32, #tpu.memory_space<vmem>>, vector<1x8x128xf32>,
    %147 = arith.truncf %143 : vector<8x128xf32> to vector<8x128xbf16>
    %c0_64 = arith.constant 0 : index
    %c0_65 = arith.constant 0 : index
    %c0_66 = arith.constant 0 : index
    %148 = vector.load %arg5[%c0_64, %c0_65, %c0_66] : memref<1x128x384xbf16, #tpu.memory_space<vmem>>, vector<1x128x384xbf16>
    %149 = vector.shape_cast %148 : vector<1x128x384xbf16> to vector<128x384xbf16>
    %cst_67 = arith.constant dense<0.000000e+00> : vector<8x384xf32>
    %150 = tpu.matmul %147, %149, %cst_67 {dimension_numbers = #tpu.dot_dimension_numbers<[1], [0], [0], [1], [0, 0, 1, 1], [], []>} : vector<8x128xbf16>, vector<128x384xbf16>, vector<8x384xf32> -> vector<8x384xf32>
    %151 = arith.addf %150, %14 : vector<8x384xf32>
    %152 = vector.extract_strided_slice %151 {offsets = [0, 0], sizes = [8, 128], strides = [1, 1]} : vector<8x384xf32> to vector<8x128xf32>
    %153 = vector.extract_strided_slice %116 {offsets = [0, 0], sizes = [8, 128], strides = [1, 1]} : vector<8x384xf32> to vector<8x128xf32>
    %154 = arith.addf %152, %153 : vector<8x128xf32>
    %155 = arith.negf %154 : vector<8x128xf32>
    %156 = math.exp %155 : vector<8x128xf32>
    %cst_68 = arith.constant 1.000000e+00 : f32
    %157 = vector.broadcast %cst_68 : f32 to vector<8x128xf32>
    %158 = arith.addf %157, %156 : vector<8x128xf32>
    %159 = arith.divf %157, %158 : vector<8x128xf32>
    %160 = vector.extract_strided_slice %151 {offsets = [0, 128], sizes = [8, 128], strides = [1, 1]} : vector<8x384xf32> to vector<8x128xf32>
    %161 = vector.extract_strided_slice %116 {offsets = [0, 128], sizes = [8, 128], strides = [1, 1]} : vector<8x384xf32> to vector<8x128xf32>
    %162 = arith.addf %160, %161 : vector<8x128xf32>
    %163 = arith.negf %162 : vector<8x128xf32>
    %164 = math.exp %163 : vector<8x128xf32>
    %cst_69 = arith.constant 1.000000e+00 : f32
    %165 = vector.broadcast %cst_69 : f32 to vector<8x128xf32>
    %166 = arith.addf %165, %164 : vector<8x128xf32>
    %167 = arith.divf %165, %166 : vector<8x128xf32>
    %168 = vector.extract_strided_slice %151 {offsets = [0, 256], sizes = [8, 128], strides = [1, 1]} : vector<8x384xf32> to vector<8x128xf32>
    %169 = vector.extract_strided_slice %116 {offsets = [0, 256], sizes = [8, 128], strides = [1, 1]} : vector<8x384xf32> to vector<8x128xf32>
    %170 = arith.addf %169, %10 : vector<8x128xf32>
    %171 = arith.mulf %159, %170 : vector<8x128xf32>
    %172 = arith.addf %168, %171 : vector<8x128xf32>
    %173 = math.tanh %172 : vector<8x128xf32>
    %cst_70 = arith.constant 1.000000e+00 : f32
    %174 = vector.broadcast %cst_70 : f32 to vector<8x128xf32>
    %175 = arith.subf %174, %167 : vector<8x128xf32>
    %176 = arith.mulf %175, %173 : vector<8x128xf32>
    %177 = arith.mulf %167, %108 : vector<8x128xf32>
    %178 = arith.addf %176, %177 : vector<8x128xf32>
    %c1_71 = arith.constant 1 : index
    %c0_72 = arith.constant 0 : index
    %c0_73 = arith.constant 0 : index
    %179 = vector.load %arg10[%c1_71, %c0_72, %c0_73] : memref<2x8x128xf32, #tpu.memory_space<vmem>>, vector<1x8x128xf32>
    %180 = vector.shape_cast %179 : vector<1x8x128xf32> to vector<8x128xf32>
    %181 = vector.shape_cast %178 : vector<8x128xf32> to vector<1x8x128xf32>
    tpu.vector_store %arg10[%c1_71, %c0_72, %c0_73], %181 {strides = array<i32>} : memref<2x8x128xf32, #tpu.memory_space<vmem>>, vector<1x8x128xf32>,
    %182 = arith.truncf %178 : vector<8x128xf32> to vector<8x128xbf16>
    %183 = arith.index_cast %c1_i32 : i32 to index
    %c0_74 = arith.constant 0 : index
    %c0_75 = arith.constant 0 : index
    %184 = vector.load %arg8[%183, %c0_74, %c0_75] : memref<4x8x128xbf16, #tpu.memory_space<vmem>>, vector<1x8x128xbf16>
    %185 = vector.shape_cast %184 : vector<1x8x128xbf16> to vector<8x128xbf16>
    %186 = vector.shape_cast %182 : vector<8x128xbf16> to vector<1x8x128xbf16>
    tpu.vector_store %arg8[%183, %c0_74, %c0_75], %186 {strides = array<i32>} : memref<4x8x128xbf16, #tpu.memory_space<vmem>>, vector<1x8x128xbf16>,
    %c2_i32 = arith.constant 2 : i32
    %187 = arith.index_cast %c2_i32 : i32 to index
    %c0_76 = arith.constant 0 : index
    %c0_77 = arith.constant 0 : index
    %188 = vector.load %arg2[%187, %c0_76, %c0_77] : memref<4x8x384xbf16, #tpu.memory_space<vmem>>, vector<1x8x384xbf16>
    %189 = vector.shape_cast %188 : vector<1x8x384xbf16> to vector<8x384xbf16>
    %190 = arith.extf %189 : vector<8x384xbf16> to vector<8x384xf32>
    %c0_78 = arith.constant 0 : index
    %c0_79 = arith.constant 0 : index
    %c0_80 = arith.constant 0 : index
    %191 = vector.load %arg10[%c0_78, %c0_79, %c0_80] : memref<2x8x128xf32, #tpu.memory_space<vmem>>, vector<1x8x128xf32>
    %192 = vector.shape_cast %191 : vector<1x8x128xf32> to vector<8x128xf32>
    %c1_81 = arith.constant 1 : index
    %c0_82 = arith.constant 0 : index
    %c0_83 = arith.constant 0 : index
    %193 = vector.load %arg10[%c1_81, %c0_82, %c0_83] : memref<2x8x128xf32, #tpu.memory_space<vmem>>, vector<1x8x128xf32>
    %194 = vector.shape_cast %193 : vector<1x8x128xf32> to vector<8x128xf32>
    %195 = arith.truncf %192 : vector<8x128xf32> to vector<8x128xbf16>
    %c0_84 = arith.constant 0 : index
    %c0_85 = arith.constant 0 : index
    %c0_86 = arith.constant 0 : index
    %196 = vector.load %arg4[%c0_84, %c0_85, %c0_86] : memref<2x128x384xbf16, #tpu.memory_space<vmem>>, vector<1x128x384xbf16>
    %197 = vector.shape_cast %196 : vector<1x128x384xbf16> to vector<128x384xbf16>
    %cst_87 = arith.constant dense<0.000000e+00> : vector<8x384xf32>
    %198 = tpu.matmul %195, %197, %cst_87 {dimension_numbers = #tpu.dot_dimension_numbers<[1], [0], [0], [1], [0, 0, 1, 1], [], []>} : vector<8x128xbf16>, vector<128x384xbf16>, vector<8x384xf32> -> vector<8x384xf32>
    %199 = arith.truncf %194 : vector<8x128xf32> to vector<8x128xbf16>
    %c1_88 = arith.constant 1 : index
    %c0_89 = arith.constant 0 : index
    %c0_90 = arith.constant 0 : index
    %200 = vector.load %arg4[%c1_88, %c0_89, %c0_90] : memref<2x128x384xbf16, #tpu.memory_space<vmem>>, vector<1x128x384xbf16>
    %201 = vector.shape_cast %200 : vector<1x128x384xbf16> to vector<128x384xbf16>
    %cst_91 = arith.constant dense<0.000000e+00> : vector<8x384xf32>
    %202 = tpu.matmul %199, %201, %cst_91 {dimension_numbers = #tpu.dot_dimension_numbers<[1], [0], [0], [1], [0, 0, 1, 1], [], []>} : vector<8x128xbf16>, vector<128x384xbf16>, vector<8x384xf32> -> vector<8x384xf32>
    %203 = vector.extract_strided_slice %190 {offsets = [0, 0], sizes = [8, 128], strides = [1, 1]} : vector<8x384xf32> to vector<8x128xf32>
    %204 = vector.extract_strided_slice %198 {offsets = [0, 0], sizes = [8, 128], strides = [1, 1]} : vector<8x384xf32> to vector<8x128xf32>
    %205 = arith.addf %203, %204 : vector<8x128xf32>
    %206 = arith.negf %205 : vector<8x128xf32>
    %207 = math.exp %206 : vector<8x128xf32>
    %cst_92 = arith.constant 1.000000e+00 : f32
    %208 = vector.broadcast %cst_92 : f32 to vector<8x128xf32>
    %209 = arith.addf %208, %207 : vector<8x128xf32>
    %210 = arith.divf %208, %209 : vector<8x128xf32>
    %211 = vector.extract_strided_slice %190 {offsets = [0, 128], sizes = [8, 128], strides = [1, 1]} : vector<8x384xf32> to vector<8x128xf32>
    %212 = vector.extract_strided_slice %198 {offsets = [0, 128], sizes = [8, 128], strides = [1, 1]} : vector<8x384xf32> to vector<8x128xf32>
    %213 = arith.addf %211, %212 : vector<8x128xf32>
    %214 = arith.negf %213 : vector<8x128xf32>
    %215 = math.exp %214 : vector<8x128xf32>
    %cst_93 = arith.constant 1.000000e+00 : f32
    %216 = vector.broadcast %cst_93 : f32 to vector<8x128xf32>
    %217 = arith.addf %216, %215 : vector<8x128xf32>
    %218 = arith.divf %216, %217 : vector<8x128xf32>
    %219 = vector.extract_strided_slice %190 {offsets = [0, 256], sizes = [8, 128], strides = [1, 1]} : vector<8x384xf32> to vector<8x128xf32>
    %220 = vector.extract_strided_slice %198 {offsets = [0, 256], sizes = [8, 128], strides = [1, 1]} : vector<8x384xf32> to vector<8x128xf32>
    %221 = arith.addf %220, %6 : vector<8x128xf32>
    %222 = arith.mulf %210, %221 : vector<8x128xf32>
    %223 = arith.addf %219, %222 : vector<8x128xf32>
    %224 = math.tanh %223 : vector<8x128xf32>
    %cst_94 = arith.constant 1.000000e+00 : f32
    %225 = vector.broadcast %cst_94 : f32 to vector<8x128xf32>
    %226 = arith.subf %225, %218 : vector<8x128xf32>
    %227 = arith.mulf %226, %224 : vector<8x128xf32>
    %228 = arith.mulf %218, %192 : vector<8x128xf32>
    %229 = arith.addf %227, %228 : vector<8x128xf32>
    %c0_95 = arith.constant 0 : index
    %c0_96 = arith.constant 0 : index
    %c0_97 = arith.constant 0 : index
    %230 = vector.load %arg10[%c0_95, %c0_96, %c0_97] : memref<2x8x128xf32, #tpu.memory_space<vmem>>, vector<1x8x128xf32>
    %231 = vector.shape_cast %230 : vector<1x8x128xf32> to vector<8x128xf32>
    %232 = vector.shape_cast %229 : vector<8x128xf32> to vector<1x8x128xf32>
    tpu.vector_store %arg10[%c0_95, %c0_96, %c0_97], %232 {strides = array<i32>} : memref<2x8x128xf32, #tpu.memory_space<vmem>>, vector<1x8x128xf32>,
    %233 = arith.truncf %229 : vector<8x128xf32> to vector<8x128xbf16>
    %c0_98 = arith.constant 0 : index
    %c0_99 = arith.constant 0 : index
    %c0_100 = arith.constant 0 : index
    %234 = vector.load %arg5[%c0_98, %c0_99, %c0_100] : memref<1x128x384xbf16, #tpu.memory_space<vmem>>, vector<1x128x384xbf16>
    %235 = vector.shape_cast %234 : vector<1x128x384xbf16> to vector<128x384xbf16>
    %cst_101 = arith.constant dense<0.000000e+00> : vector<8x384xf32>
    %236 = tpu.matmul %233, %235, %cst_101 {dimension_numbers = #tpu.dot_dimension_numbers<[1], [0], [0], [1], [0, 0, 1, 1], [], []>} : vector<8x128xbf16>, vector<128x384xbf16>, vector<8x384xf32> -> vector<8x384xf32>
    %237 = arith.addf %236, %14 : vector<8x384xf32>
    %238 = vector.extract_strided_slice %237 {offsets = [0, 0], sizes = [8, 128], strides = [1, 1]} : vector<8x384xf32> to vector<8x128xf32>
    %239 = vector.extract_strided_slice %202 {offsets = [0, 0], sizes = [8, 128], strides = [1, 1]} : vector<8x384xf32> to vector<8x128xf32>
    %240 = arith.addf %238, %239 : vector<8x128xf32>
    %241 = arith.negf %240 : vector<8x128xf32>
    %242 = math.exp %241 : vector<8x128xf32>
    %cst_102 = arith.constant 1.000000e+00 : f32
    %243 = vector.broadcast %cst_102 : f32 to vector<8x128xf32>
    %244 = arith.addf %243, %242 : vector<8x128xf32>
    %245 = arith.divf %243, %244 : vector<8x128xf32>
    %246 = vector.extract_strided_slice %237 {offsets = [0, 128], sizes = [8, 128], strides = [1, 1]} : vector<8x384xf32> to vector<8x128xf32>
    %247 = vector.extract_strided_slice %202 {offsets = [0, 128], sizes = [8, 128], strides = [1, 1]} : vector<8x384xf32> to vector<8x128xf32>
    %248 = arith.addf %246, %247 : vector<8x128xf32>
    %249 = arith.negf %248 : vector<8x128xf32>
    %250 = math.exp %249 : vector<8x128xf32>
    %cst_103 = arith.constant 1.000000e+00 : f32
    %251 = vector.broadcast %cst_103 : f32 to vector<8x128xf32>
    %252 = arith.addf %251, %250 : vector<8x128xf32>
    %253 = arith.divf %251, %252 : vector<8x128xf32>
    %254 = vector.extract_strided_slice %237 {offsets = [0, 256], sizes = [8, 128], strides = [1, 1]} : vector<8x384xf32> to vector<8x128xf32>
    %255 = vector.extract_strided_slice %202 {offsets = [0, 256], sizes = [8, 128], strides = [1, 1]} : vector<8x384xf32> to vector<8x128xf32>
    %256 = arith.addf %255, %10 : vector<8x128xf32>
    %257 = arith.mulf %245, %256 : vector<8x128xf32>
    %258 = arith.addf %254, %257 : vector<8x128xf32>
    %259 = math.tanh %258 : vector<8x128xf32>
    %cst_104 = arith.constant 1.000000e+00 : f32
    %260 = vector.broadcast %cst_104 : f32 to vector<8x128xf32>
    %261 = arith.subf %260, %253 : vector<8x128xf32>
    %262 = arith.mulf %261, %259 : vector<8x128xf32>
    %263 = arith.mulf %253, %194 : vector<8x128xf32>
    %264 = arith.addf %262, %263 : vector<8x128xf32>
    %c1_105 = arith.constant 1 : index
    %c0_106 = arith.constant 0 : index
    %c0_107 = arith.constant 0 : index
    %265 = vector.load %arg10[%c1_105, %c0_106, %c0_107] : memref<2x8x128xf32, #tpu.memory_space<vmem>>, vector<1x8x128xf32>
    %266 = vector.shape_cast %265 : vector<1x8x128xf32> to vector<8x128xf32>
    %267 = vector.shape_cast %264 : vector<8x128xf32> to vector<1x8x128xf32>
    tpu.vector_store %arg10[%c1_105, %c0_106, %c0_107], %267 {strides = array<i32>} : memref<2x8x128xf32, #tpu.memory_space<vmem>>, vector<1x8x128xf32>,
    %268 = arith.truncf %264 : vector<8x128xf32> to vector<8x128xbf16>
    %269 = arith.index_cast %c2_i32 : i32 to index
    %c0_108 = arith.constant 0 : index
    %c0_109 = arith.constant 0 : index
    %270 = vector.load %arg8[%269, %c0_108, %c0_109] : memref<4x8x128xbf16, #tpu.memory_space<vmem>>, vector<1x8x128xbf16>
    %271 = vector.shape_cast %270 : vector<1x8x128xbf16> to vector<8x128xbf16>
    %272 = vector.shape_cast %268 : vector<8x128xbf16> to vector<1x8x128xbf16>
    tpu.vector_store %arg8[%269, %c0_108, %c0_109], %272 {strides = array<i32>} : memref<4x8x128xbf16, #tpu.memory_space<vmem>>, vector<1x8x128xbf16>,
    %c3_i32 = arith.constant 3 : i32
    %273 = arith.index_cast %c3_i32 : i32 to index
    %c0_110 = arith.constant 0 : index
    %c0_111 = arith.constant 0 : index
    %274 = vector.load %arg2[%273, %c0_110, %c0_111] : memref<4x8x384xbf16, #tpu.memory_space<vmem>>, vector<1x8x384xbf16>
    %275 = vector.shape_cast %274 : vector<1x8x384xbf16> to vector<8x384xbf16>
    %276 = arith.extf %275 : vector<8x384xbf16> to vector<8x384xf32>
    %c0_112 = arith.constant 0 : index
    %c0_113 = arith.constant 0 : index
    %c0_114 = arith.constant 0 : index
    %277 = vector.load %arg10[%c0_112, %c0_113, %c0_114] : memref<2x8x128xf32, #tpu.memory_space<vmem>>, vector<1x8x128xf32>
    %278 = vector.shape_cast %277 : vector<1x8x128xf32> to vector<8x128xf32>
    %c1_115 = arith.constant 1 : index
    %c0_116 = arith.constant 0 : index
    %c0_117 = arith.constant 0 : index
    %279 = vector.load %arg10[%c1_115, %c0_116, %c0_117] : memref<2x8x128xf32, #tpu.memory_space<vmem>>, vector<1x8x128xf32>
    %280 = vector.shape_cast %279 : vector<1x8x128xf32> to vector<8x128xf32>
    %281 = arith.truncf %278 : vector<8x128xf32> to vector<8x128xbf16>
    %c0_118 = arith.constant 0 : index
    %c0_119 = arith.constant 0 : index
    %c0_120 = arith.constant 0 : index
    %282 = vector.load %arg4[%c0_118, %c0_119, %c0_120] : memref<2x128x384xbf16, #tpu.memory_space<vmem>>, vector<1x128x384xbf16>
    %283 = vector.shape_cast %282 : vector<1x128x384xbf16> to vector<128x384xbf16>
    %cst_121 = arith.constant dense<0.000000e+00> : vector<8x384xf32>
    %284 = tpu.matmul %281, %283, %cst_121 {dimension_numbers = #tpu.dot_dimension_numbers<[1], [0], [0], [1], [0, 0, 1, 1], [], []>} : vector<8x128xbf16>, vector<128x384xbf16>, vector<8x384xf32> -> vector<8x384xf32>
    %285 = arith.truncf %280 : vector<8x128xf32> to vector<8x128xbf16>
    %c1_122 = arith.constant 1 : index
    %c0_123 = arith.constant 0 : index
    %c0_124 = arith.constant 0 : index
    %286 = vector.load %arg4[%c1_122, %c0_123, %c0_124] : memref<2x128x384xbf16, #tpu.memory_space<vmem>>, vector<1x128x384xbf16>
    %287 = vector.shape_cast %286 : vector<1x128x384xbf16> to vector<128x384xbf16>
    %cst_125 = arith.constant dense<0.000000e+00> : vector<8x384xf32>
    %288 = tpu.matmul %285, %287, %cst_125 {dimension_numbers = #tpu.dot_dimension_numbers<[1], [0], [0], [1], [0, 0, 1, 1], [], []>} : vector<8x128xbf16>, vector<128x384xbf16>, vector<8x384xf32> -> vector<8x384xf32>
    %289 = vector.extract_strided_slice %276 {offsets = [0, 0], sizes = [8, 128], strides = [1, 1]} : vector<8x384xf32> to vector<8x128xf32>
    %290 = vector.extract_strided_slice %284 {offsets = [0, 0], sizes = [8, 128], strides = [1, 1]} : vector<8x384xf32> to vector<8x128xf32>
    %291 = arith.addf %289, %290 : vector<8x128xf32>
    %292 = arith.negf %291 : vector<8x128xf32>
    %293 = math.exp %292 : vector<8x128xf32>
    %cst_126 = arith.constant 1.000000e+00 : f32
    %294 = vector.broadcast %cst_126 : f32 to vector<8x128xf32>
    %295 = arith.addf %294, %293 : vector<8x128xf32>
    %296 = arith.divf %294, %295 : vector<8x128xf32>
    %297 = vector.extract_strided_slice %276 {offsets = [0, 128], sizes = [8, 128], strides = [1, 1]} : vector<8x384xf32> to vector<8x128xf32>
    %298 = vector.extract_strided_slice %284 {offsets = [0, 128], sizes = [8, 128], strides = [1, 1]} : vector<8x384xf32> to vector<8x128xf32>
    %299 = arith.addf %297, %298 : vector<8x128xf32>
    %300 = arith.negf %299 : vector<8x128xf32>
    %301 = math.exp %300 : vector<8x128xf32>
    %cst_127 = arith.constant 1.000000e+00 : f32
    %302 = vector.broadcast %cst_127 : f32 to vector<8x128xf32>
    %303 = arith.addf %302, %301 : vector<8x128xf32>
    %304 = arith.divf %302, %303 : vector<8x128xf32>
    %305 = vector.extract_strided_slice %276 {offsets = [0, 256], sizes = [8, 128], strides = [1, 1]} : vector<8x384xf32> to vector<8x128xf32>
    %306 = vector.extract_strided_slice %284 {offsets = [0, 256], sizes = [8, 128], strides = [1, 1]} : vector<8x384xf32> to vector<8x128xf32>
    %307 = arith.addf %306, %6 : vector<8x128xf32>
    %308 = arith.mulf %296, %307 : vector<8x128xf32>
    %309 = arith.addf %305, %308 : vector<8x128xf32>
    %310 = math.tanh %309 : vector<8x128xf32>
    %cst_128 = arith.constant 1.000000e+00 : f32
    %311 = vector.broadcast %cst_128 : f32 to vector<8x128xf32>
    %312 = arith.subf %311, %304 : vector<8x128xf32>
    %313 = arith.mulf %312, %310 : vector<8x128xf32>
    %314 = arith.mulf %304, %278 : vector<8x128xf32>
    %315 = arith.addf %313, %314 : vector<8x128xf32>
    %c0_129 = arith.constant 0 : index
    %c0_130 = arith.constant 0 : index
    %c0_131 = arith.constant 0 : index
    %316 = vector.load %arg10[%c0_129, %c0_130, %c0_131] : memref<2x8x128xf32, #tpu.memory_space<vmem>>, vector<1x8x128xf32>
    %317 = vector.shape_cast %316 : vector<1x8x128xf32> to vector<8x128xf32>
    %318 = vector.shape_cast %315 : vector<8x128xf32> to vector<1x8x128xf32>
    tpu.vector_store %arg10[%c0_129, %c0_130, %c0_131], %318 {strides = array<i32>} : memref<2x8x128xf32, #tpu.memory_space<vmem>>, vector<1x8x128xf32>,
    %319 = arith.truncf %315 : vector<8x128xf32> to vector<8x128xbf16>
    %c0_132 = arith.constant 0 : index
    %c0_133 = arith.constant 0 : index
    %c0_134 = arith.constant 0 : index
    %320 = vector.load %arg5[%c0_132, %c0_133, %c0_134] : memref<1x128x384xbf16, #tpu.memory_space<vmem>>, vector<1x128x384xbf16>
    %321 = vector.shape_cast %320 : vector<1x128x384xbf16> to vector<128x384xbf16>
    %cst_135 = arith.constant dense<0.000000e+00> : vector<8x384xf32>
    %322 = tpu.matmul %319, %321, %cst_135 {dimension_numbers = #tpu.dot_dimension_numbers<[1], [0], [0], [1], [0, 0, 1, 1], [], []>} : vector<8x128xbf16>, vector<128x384xbf16>, vector<8x384xf32> -> vector<8x384xf32>
    %323 = arith.addf %322, %14 : vector<8x384xf32>
    %324 = vector.extract_strided_slice %323 {offsets = [0, 0], sizes = [8, 128], strides = [1, 1]} : vector<8x384xf32> to vector<8x128xf32>
    %325 = vector.extract_strided_slice %288 {offsets = [0, 0], sizes = [8, 128], strides = [1, 1]} : vector<8x384xf32> to vector<8x128xf32>
    %326 = arith.addf %324, %325 : vector<8x128xf32>
    %327 = arith.negf %326 : vector<8x128xf32>
    %328 = math.exp %327 : vector<8x128xf32>
    %cst_136 = arith.constant 1.000000e+00 : f32
    %329 = vector.broadcast %cst_136 : f32 to vector<8x128xf32>
    %330 = arith.addf %329, %328 : vector<8x128xf32>
    %331 = arith.divf %329, %330 : vector<8x128xf32>
    %332 = vector.extract_strided_slice %323 {offsets = [0, 128], sizes = [8, 128], strides = [1, 1]} : vector<8x384xf32> to vector<8x128xf32>
    %333 = vector.extract_strided_slice %288 {offsets = [0, 128], sizes = [8, 128], strides = [1, 1]} : vector<8x384xf32> to vector<8x128xf32>
    %334 = arith.addf %332, %333 : vector<8x128xf32>
    %335 = arith.negf %334 : vector<8x128xf32>
    %336 = math.exp %335 : vector<8x128xf32>
    %cst_137 = arith.constant 1.000000e+00 : f32
    %337 = vector.broadcast %cst_137 : f32 to vector<8x128xf32>
    %338 = arith.addf %337, %336 : vector<8x128xf32>
    %339 = arith.divf %337, %338 : vector<8x128xf32>
    %340 = vector.extract_strided_slice %323 {offsets = [0, 256], sizes = [8, 128], strides = [1, 1]} : vector<8x384xf32> to vector<8x128xf32>
    %341 = vector.extract_strided_slice %288 {offsets = [0, 256], sizes = [8, 128], strides = [1, 1]} : vector<8x384xf32> to vector<8x128xf32>
    %342 = arith.addf %341, %10 : vector<8x128xf32>
    %343 = arith.mulf %331, %342 : vector<8x128xf32>
    %344 = arith.addf %340, %343 : vector<8x128xf32>
    %345 = math.tanh %344 : vector<8x128xf32>
    %cst_138 = arith.constant 1.000000e+00 : f32
    %346 = vector.broadcast %cst_138 : f32 to vector<8x128xf32>
    %347 = arith.subf %346, %339 : vector<8x128xf32>
    %348 = arith.mulf %347, %345 : vector<8x128xf32>
    %349 = arith.mulf %339, %280 : vector<8x128xf32>
    %350 = arith.addf %348, %349 : vector<8x128xf32>
    %c1_139 = arith.constant 1 : index
    %c0_140 = arith.constant 0 : index
    %c0_141 = arith.constant 0 : index
    %351 = vector.load %arg10[%c1_139, %c0_140, %c0_141] : memref<2x8x128xf32, #tpu.memory_space<vmem>>, vector<1x8x128xf32>
    %352 = vector.shape_cast %351 : vector<1x8x128xf32> to vector<8x128xf32>
    %353 = vector.shape_cast %350 : vector<8x128xf32> to vector<1x8x128xf32>
    tpu.vector_store %arg10[%c1_139, %c0_140, %c0_141], %353 {strides = array<i32>} : memref<2x8x128xf32, #tpu.memory_space<vmem>>, vector<1x8x128xf32>,
    %354 = arith.truncf %350 : vector<8x128xf32> to vector<8x128xbf16>
    %355 = arith.index_cast %c3_i32 : i32 to index
    %c0_142 = arith.constant 0 : index
    %c0_143 = arith.constant 0 : index
    %356 = vector.load %arg8[%355, %c0_142, %c0_143] : memref<4x8x128xbf16, #tpu.memory_space<vmem>>, vector<1x8x128xbf16>
    %357 = vector.shape_cast %356 : vector<1x8x128xbf16> to vector<8x128xbf16>
    %358 = vector.shape_cast %354 : vector<8x128xbf16> to vector<1x8x128xbf16>
    tpu.vector_store %arg8[%355, %c0_142, %c0_143], %358 {strides = array<i32>} : memref<4x8x128xbf16, #tpu.memory_space<vmem>>, vector<1x8x128xbf16>,
    %c4_i32 = arith.constant 4 : i32
    %c1_i32_144 = arith.constant 1 : i32
    %359 = arith.cmpi eq, %arg1, %c1_i32_144 : i32
    %360 = arith.extui %359 : i1 to i32
    %c0_i32_145 = arith.constant 0 : i32
    %361 = arith.cmpi ne, %360, %c0_i32_145 : i32
    scf.if %361 {
      %c0_146 = arith.constant 0 : index
      %c0_147 = arith.constant 0 : index
      %c0_148 = arith.constant 0 : index
      %362 = vector.load %arg10[%c0_146, %c0_147, %c0_148] : memref<2x8x128xf32, #tpu.memory_space<vmem>>, vector<2x8x128xf32>
      %c0_149 = arith.constant 0 : index
      %c0_150 = arith.constant 0 : index
      %c0_151 = arith.constant 0 : index
      %363 = vector.load %arg9[%c0_149, %c0_150, %c0_151] : memref<2x8x128xf32, #tpu.memory_space<vmem>>, vector<2x8x128xf32>
      tpu.vector_store %arg9[%c0_149, %c0_150, %c0_151], %362 {strides = array<i32>} : memref<2x8x128xf32, #tpu.memory_space<vmem>>, vector<2x8x128xf32>,
    } else {
    }
    return
  }
  func.func @transform_0(%arg0: i32, %arg1: i32) -> (i32, i32, i32) {
    %c0_i32 = arith.constant 0 : i32
    %c0_i32_0 = arith.constant 0 : i32
    return %arg1, %arg0, %c0_i32 : i32, i32, i32
  }
  func.func @transform_1(%arg0: i32, %arg1: i32) -> (i32, i32, i32) {
    %c0_i32 = arith.constant 0 : i32
    %c0_i32_0 = arith.constant 0 : i32
    %c0_i32_1 = arith.constant 0 : i32
    return %c0_i32, %arg0, %c0_i32_0 : i32, i32, i32
  }
  func.func @transform_2(%arg0: i32, %arg1: i32) -> (i32, i32, i32) {
    %c0_i32 = arith.constant 0 : i32
    %c0_i32_0 = arith.constant 0 : i32
    %c0_i32_1 = arith.constant 0 : i32
    %c0_i32_2 = arith.constant 0 : i32
    return %c0_i32, %c0_i32_0, %c0_i32_1 : i32, i32, i32
  }
  func.func @transform_3(%arg0: i32, %arg1: i32) -> (i32, i32, i32) {
    %c0_i32 = arith.constant 0 : i32
    %c0_i32_0 = arith.constant 0 : i32
    %c0_i32_1 = arith.constant 0 : i32
    %c0_i32_2 = arith.constant 0 : i32
    return %c0_i32, %c0_i32_0, %c0_i32_1 : i32, i32, i32
  }
  func.func @transform_4(%arg0: i32, %arg1: i32) -> (i32, i32, i32) {
    %c0_i32 = arith.constant 0 : i32
    %c0_i32_0 = arith.constant 0 : i32
    %c0_i32_1 = arith.constant 0 : i32
    %c0_i32_2 = arith.constant 0 : i32
    return %c0_i32, %c0_i32_0, %c0_i32_1 : i32, i32, i32
  }
  func.func @transform_5(%arg0: i32, %arg1: i32) -> (i32, i32, i32) {
    %c0_i32 = arith.constant 0 : i32
    %c0_i32_0 = arith.constant 0 : i32
    %c0_i32_1 = arith.constant 0 : i32
    %c0_i32_2 = arith.constant 0 : i32
    return %c0_i32, %c0_i32_0, %c0_i32_1 : i32, i32, i32
  }
  func.func @transform_6(%arg0: i32, %arg1: i32) -> (i32, i32, i32) {
    %c0_i32 = arith.constant 0 : i32
    %c0_i32_0 = arith.constant 0 : i32
    return %arg1, %arg0, %c0_i32 : i32, i32, i32
  }
  func.func @transform_7(%arg0: i32, %arg1: i32) -> (i32, i32, i32) {
    %c0_i32 = arith.constant 0 : i32
    %c0_i32_0 = arith.constant 0 : i32
    %c0_i32_1 = arith.constant 0 : i32
    return %c0_i32, %arg0, %c0_i32_0 : i32, i32, i32
  }
}

</mosaic_0001>

<llo_original>
// kernel: seq2seq_decoder_forward.3
$region0: #{seq2seq_decoder_forward.3}
  #allocation0 [shape = 'u32[]', space=smem, size = 0x4, offset = 0x4, fixed_abs, tag = 'smem constant byte address 0x4 - core index']
  #allocation1 [shape = 'u32[144,128]{1,0:T(1,128)}', space=vmem, size = 0x12000, scoped, tag = 'internal scratch']
  %s0 = inlined_call_operand.vmem [shape: bf16[64,128], index: 0, kind: input, shape index: {}]
  %s1 = inlined_call_operand.vmem [shape: bf16[128,128], index: 1, kind: input, shape index: {}]
  %s2 = inlined_call_operand.vmem [shape: f32[1,128], index: 2, kind: input, shape index: {}]
  %s3 = inlined_call_operand.vmem [shape: f32[64,128], index: 3, kind: output, shape index: {}]
  %s4 = sld [smem:[#allocation0]]
  $region22: #{seq2seq_decoder_forward.3} parent=0
    _
  %s6 = ssub.s32 1, %s4
  %s7 = scalar_select 0, %s6, %s4
  // Predicated region
  $region2: #{seq2seq_decoder_forward.3} parent=0 // pred_check
    _
  $region3: #{seq2seq_decoder_forward.3} parent=0 // pred_check_branch
    %9 = sbr.rel (0) target = $region5
  $region4: #{seq2seq_decoder_forward.3} parent=0 // pred_region
    _
  $region5: #{seq2seq_decoder_forward.3} parent=0 // pred_fallthru
    _
  // Predicated region
  $region6: #{seq2seq_decoder_forward.3} parent=0 // pred_check
    _
  $region7: #{seq2seq_decoder_forward.3} parent=0 // pred_check_branch
    %11 = sbr.rel (0) target = $region9
  $region8: #{seq2seq_decoder_forward.3} parent=0 // pred_region
    _
  $region9: #{seq2seq_decoder_forward.3} parent=0 // pred_fallthru
    _
  // Predicated region
  $region10: #{seq2seq_decoder_forward.3} parent=0 // pred_check
    _
  $region11: #{seq2seq_decoder_forward.3} parent=0 // pred_check_branch
    %13 = sbr.rel (0) target = $region13
  $region12: #{seq2seq_decoder_forward.3} parent=0 // pred_region
    _
  $region13: #{seq2seq_decoder_forward.3} parent=0 // pred_fallthru
    _
  %v15 = vld [vmem:[%s0] sm:$0xf]
  %v16 = vld [vmem:[%s0 + $0x4] sm:$0xf]
  %v17 = vld [vmem:[%s0 + $0x8] sm:$0xf]
  %v18 = vld [vmem:[%s0 + $0xc] sm:$0xf]
  %v19 = vld [vmem:[%s0 + $0x10] sm:$0xf]
  %v20 = vld [vmem:[%s0 + $0x14] sm:$0xf]
  %v21 = vld [vmem:[%s0 + $0x18] sm:$0xf]
  %v22 = vld [vmem:[%s0 + $0x1c] sm:$0xf]
  %v23 = vld [vmem:[%s1] sm:$0xf]
  %v24 = vld [vmem:[%s1 + $0x4] sm:$0xf]
  %v25 = vld [vmem:[%s1 + $0x8] sm:$0xf]
  %v26 = vld [vmem:[%s1 + $0xc] sm:$0xf]
  %v27 = vld [vmem:[%s1 + $0x10] sm:$0xf]
  %v28 = vld [vmem:[%s1 + $0x14] sm:$0xf]
  %v29 = vld [vmem:[%s1 + $0x18] sm:$0xf]
  %v30 = vld [vmem:[%s1 + $0x1c] sm:$0xf]
  %v31 = vld [vmem:[%s1 + $0x20] sm:$0xf]
  %v32 = vld [vmem:[%s1 + $0x24] sm:$0xf]
  %v33 = vld [vmem:[%s1 + $0x28] sm:$0xf]
  %v34 = vld [vmem:[%s1 + $0x2c] sm:$0xf]
  %v35 = vld [vmem:[%s1 + $0x30] sm:$0xf]
  %v36 = vld [vmem:[%s1 + $0x34] sm:$0xf]
  %v37 = vld [vmem:[%s1 + $0x38] sm:$0xf]
  %v38 = vld [vmem:[%s1 + $0x3c] sm:$0xf]
  %v39 = vld [vmem:[%s2] sm:$0x1]
  %v41 = vlaneseq
  %v42 = vshrl.u32 %v41, 7
  %v43 = vsub.s32 0, %v42
  %v44 = vrot.slane %v39, %v43
  %v54 = vunpack.c.l.b16 %v15
  %v55 = vunpack.c.l.b16 %v16
  %v56 = vunpack.c.l.b16 %v17
  %v57 = vunpack.c.l.b16 %v18
  %v58 = vunpack.c.l.b16 %v19
  %v59 = vunpack.c.l.b16 %v20
  %v60 = vunpack.c.l.b16 %v21
  %v61 = vunpack.c.l.b16 %v22
  %v62 = vpack.c.b16 %v55, %v54
  %v63 = vpack.c.b16 %v57, %v56
  %v64 = vpack.c.b16 %v59, %v58
  %v65 = vpack.c.b16 %v61, %v60
  %v86 = vunpack.c.l.b16 %v23
  %v87 = vunpack.c.l.b16 %v24
  %v88 = vunpack.c.l.b16 %v25
  %v89 = vunpack.c.l.b16 %v26
  %v90 = vunpack.c.l.b16 %v27
  %v91 = vunpack.c.l.b16 %v28
  %v92 = vunpack.c.l.b16 %v29
  %v93 = vunpack.c.l.b16 %v30
  %v94 = vunpack.c.l.b16 %v31
  %v95 = vunpack.c.l.b16 %v32
  %v96 = vunpack.c.l.b16 %v33
  %v97 = vunpack.c.l.b16 %v34
  %v98 = vunpack.c.l.b16 %v35
  %v99 = vunpack.c.l.b16 %v36
  %v100 = vunpack.c.l.b16 %v37
  %v101 = vunpack.c.l.b16 %v38
  %v102 = vpack.c.b16 %v87, %v86
  %v103 = vpack.c.b16 %v89, %v88
  %v104 = vpack.c.b16 %v91, %v90
  %v105 = vpack.c.b16 %v93, %v92
  %v106 = vpack.c.b16 %v95, %v94
  %v107 = vpack.c.b16 %v97, %v96
  %v108 = vpack.c.b16 %v99, %v98
  %v109 = vpack.c.b16 %v101, %v100
  %118 = vmatprep.subr.bf16.mxu0 0
  %119 = vmatpush1.bf16.msra.mxu0 %v109
  %120 = vmatprep.subr.bf16.mxu0 0
  %121 = vmatpush1.bf16.msra.mxu0 %v108
  %122 = vmatprep.subr.bf16.mxu0 0
  %123 = vmatpush1.bf16.msra.mxu0 %v107
  %124 = vmatprep.subr.bf16.mxu0 0
  %125 = vmatpush1.bf16.msra.mxu0 %v106
  %126 = vmatprep.subr.bf16.mxu0 0
  %127 = vmatpush1.bf16.msra.mxu0 %v105
  %128 = vmatprep.subr.bf16.mxu0 0
  %129 = vmatpush1.bf16.msra.mxu0 %v104
  %130 = vmatprep.subr.bf16.mxu0 0
  %131 = vmatpush1.bf16.msra.mxu0 %v103
  %132 = vmatprep.subr.bf16.mxu0 0
  %133 = vmatpush1.bf16.msra.mxu0 %v102
  %134 = vmatprep.subr.bf16.mxu0 0
  %135 = vmatpush2.bf16.msra.mxu0 0
  %136 = vmatprep.subr.bf16.mxu0 0
  %137 = vmatpush2.bf16.msra.mxu0 0
  %138 = vmatprep.subr.bf16.mxu0 0
  %139 = vmatpush2.bf16.msra.mxu0 0
  %140 = vmatprep.subr.bf16.mxu0 0
  %141 = vmatpush2.bf16.msra.mxu0 0
  %142 = vmatprep.subr.bf16.mxu0 0
  %143 = vmatpush2.bf16.msra.mxu0 0
  %144 = vmatprep.subr.bf16.mxu0 0
  %145 = vmatpush2.bf16.msra.mxu0 0
  %146 = vmatprep.subr.bf16.mxu0 0
  %147 = vmatpush2.bf16.msra.mxu0 0
  %148 = vmatprep.subr.bf16.mxu0 0
  %149 = vmatpush2.bf16.msra.mxu0 0
  %150 = vmatprep.mubr.bf16.mxu0 0
  %151 = vmatmul.mubr.bf16.gmra.mxu0 %v62
  %v152 = vpop.f32.mrf.mxu0
  %v153 = vadd.f32 %v44, %v152
  %v154 = vpop.f32.mrf.mxu0
  %v155 = vpop.f32.mrf.mxu0
  %v156 = vadd.f32 %v44, %v155
  %v157 = vpop.f32.mrf.mxu0
  %158 = vmatprep.mubr.bf16.mxu0 0
  %159 = vmatmul.mubr.bf16.gmra.mxu0 %v63
  %v160 = vpop.f32.mrf.mxu0
  %v161 = vadd.f32 %v44, %v160
  %v162 = vpop.f32.mrf.mxu0
  %v163 = vpop.f32.mrf.mxu0
  %v164 = vadd.f32 %v44, %v163
  %v165 = vpop.f32.mrf.mxu0
  %166 = vmatprep.mubr.bf16.mxu0 0
  %167 = vmatmul.mubr.bf16.gmra.mxu0 %v64
  %v168 = vpop.f32.mrf.mxu0
  %v169 = vadd.f32 %v44, %v168
  %v170 = vpop.f32.mrf.mxu0
  %v171 = vpop.f32.mrf.mxu0
  %v172 = vadd.f32 %v44, %v171
  %v173 = vpop.f32.mrf.mxu0
  %174 = vmatprep.mubr.bf16.mxu0 0
  %175 = vmatmul.mubr.bf16.gmra.mxu0 %v65
  %v176 = vpop.f32.mrf.mxu0
  %v177 = vadd.f32 %v44, %v176
  %v178 = vpop.f32.mrf.mxu0
  %v179 = vpop.f32.mrf.mxu0
  %v180 = vadd.f32 %v44, %v179
  %v181 = vpop.f32.mrf.mxu0
  %182 = vdwg.mxu0
  %183 = vst [vmem:[%s3] sm:$0xff] %v153
  %184 = vst [vmem:[%s3 + $0x8] sm:$0xff] %v156
  %185 = vst [vmem:[%s3 + $0x10] sm:$0xff] %v161
  %186 = vst [vmem:[%s3 + $0x18] sm:$0xff] %v164
  %187 = vst [vmem:[%s3 + $0x20] sm:$0xff] %v169
  %188 = vst [vmem:[%s3 + $0x28] sm:$0xff] %v172
  %189 = vst [vmem:[%s3 + $0x30] sm:$0xff] %v177
  %190 = vst [vmem:[%s3 + $0x38] sm:$0xff] %v180
  // Predicated region
  $region14: #{seq2seq_decoder_forward.3} parent=0 // pred_check
    _
  $region15: #{seq2seq_decoder_forward.3} parent=0 // pred_check_branch
    %192 = sbr.rel (0) target = $region17
  $region16: #{seq2seq_decoder_forward.3} parent=0 // pred_region
    _
  $region17: #{seq2seq_decoder_forward.3} parent=0 // pred_fallthru
    _
  // Predicated region
  $region18: #{seq2seq_decoder_forward.3} parent=0 // pred_check
    _
  $region19: #{seq2seq_decoder_forward.3} parent=0 // pred_check_branch
    %194 = sbr.rel (0) target = $region21
  $region20: #{seq2seq_decoder_forward.3} parent=0 // pred_region
    _
  $region21: #{seq2seq_decoder_forward.3} parent=0 // pred_fallthru
    _

// kernel: seq2seq_decoder_forward.2
$region0: #{seq2seq_decoder_forward.2}
  #allocation0 [shape = 'u32[]', space=smem, size = 0x4, offset = 0x4, fixed_abs, tag = 'smem constant byte address 0x4 - core index']
  #allocation1 [shape = 'u32[144,128]{1,0:T(1,128)}', space=vmem, size = 0x12000, scoped, tag = 'internal scratch']
  #allocation2 [shape = 'f32[2,8,128]{2,1,0:T(8,128)}', space=vmem, size = 0x2000, scoped, tag = 'scratch operand']
  %s0 = inlined_call_operand.vmem [shape: bf16[8,8,384], index: 0, kind: input, shape index: {}]
  %s1 = inlined_call_operand.vmem [shape: f32[2,8,128], index: 1, kind: input, shape index: {}]
  %s2 = inlined_call_operand.vmem [shape: bf16[2,128,384], index: 2, kind: input, shape index: {}]
  %s3 = inlined_call_operand.vmem [shape: bf16[1,128,384], index: 3, kind: input, shape index: {}]
  %s4 = inlined_call_operand.vmem [shape: f32[1,1,384], index: 4, kind: input, shape index: {}]
  %s5 = inlined_call_operand.vmem [shape: f32[2,1,128], index: 5, kind: input, shape index: {}]
  %s6 = inlined_call_operand.vmem [shape: bf16[8,8,128], index: 6, kind: output, shape index: {0}]
  %s7 = inlined_call_operand.vmem [shape: f32[2,8,128], index: 7, kind: output, shape index: {1}]
  %8 = xla_tuple %s6, %s7
  %s9 = sld [smem:[#allocation0]]
  $region73: #{seq2seq_decoder_forward.2} parent=0
    _
  %s11 = ssub.s32 1, %s9
  %s12 = scalar_select 0, %s11, %s9
  loop: start=0, step=1, limit=4
  $region2: #{seq2seq_decoder_forward.2} parent=0 // loop_pre_header
    _
  $region3: #{seq2seq_decoder_forward.2} parent=0 // loop_header
    %s14 = sphi 0, %s18
    %p15 = scmp.ge.s32.totalorder %s14, 4
    %s21 = sphi 0, %s33
    %s22 = sphi 0, %s29
    %s23 = sphi 0, %s21
    %s24 = sphi 0, %s22
    %s25 = sphi 0, %s23
    %s26 = sphi 0, %s24
    %s38 = sphi 0, %s40
    %s41 = sphi 0, %s38
    %s42 = sphi 0, %s41
    %s58 = sphi 0, %s42
    %s64 = sphi 0, %s66
    %s67 = sphi 0, %s64
    %s68 = sphi 0, %s67
    %s84 = sphi 0, %s68
    %s88 = sphi 0, %s88
    %s90 = sphi 0, %s88
    %s91 = sphi 0, %s90
    %s105 = sphi 0, %s91
    %s109 = sphi 0, %s109
    %s111 = sphi 0, %s109
    %s112 = sphi 0, %s111
    %s126 = sphi 0, %s112
    %s130 = sphi 0, %s130
    %s132 = sphi 0, %s130
    %s133 = sphi 0, %s132
    %s147 = sphi 0, %s133
    %s151 = sphi 0, %s151
    %s153 = sphi 0, %s151
    %s154 = sphi 0, %s153
    %s168 = sphi 0, %s154
    %s176 = sphi 0, %s178
    %s179 = sphi 0, %s176
    %s180 = sphi 0, %s179
    %s196 = sphi 0, %s180
    %s202 = sphi 0, %s204
    %s205 = sphi 0, %s202
    %s206 = sphi 0, %s205
    %s222 = sphi 0, %s206
  $region4: #{seq2seq_decoder_forward.2} parent=0 // loop_header_branch
    %17 = sbr.rel (%p15) target = $region8
  $region5: #{seq2seq_decoder_forward.2} parent=0 // loop_body
    %s19 = ssub.s32 %s14, 1
    %s20 = ssub.s32 %s14, 2
    %s27 = sadd.s32 1, %s22
    %p28 = scmp.ge.s32.totalorder %s27, 2
    %s29 = scalar_select %p28, 0, %s27
    %s30 = sadd.s32 1, %s21
    %s31 = scalar_select %p28, %s30, %s21
    %p32 = scmp.ge.s32.totalorder %s31, 1
    %s33 = scalar_select %p32, 0, %s31
    %s34 = ssub.s32 %s22, %s29
    %s35 = ssub.s32 %s21, %s33
    %s36 = sor.u32 %s34, %s35
    %p37 = scmp.eq.s32.totalorder %s36, 0
    %s39 = sadd.s32 %s38, 1
    %s40 = scalar_select %p37, %s38, %s39
    %p43 = pneg %p37
    %p44 = scmp.eq.s32.totalorder %s14, 1
    %p45 = por %p43, %p44
    %p46 = scmp.ne.s32.totalorder %s38, %s41
    %p47 = scmp.eq.s32.totalorder %s14, 0
    %p48 = por %p46, %p47
    %p49 = scmp.ne.s32.totalorder %s38, %s41
    %p50 = scmp.eq.s32.totalorder %s19, 1
    %p51 = por %p49, %p50
    %p52 = scmp.ne.s32.totalorder %s41, %s42
    %p53 = scmp.eq.s32.totalorder %s19, 0
    %p54 = por %p52, %p53
    %p55 = scmp.ne.s32.totalorder %s41, %s42
    %p56 = scmp.eq.s32.totalorder %s20, 1
    %p57 = por %p55, %p56
    %p59 = scmp.ne.s32.totalorder %s42, %s58
    %p60 = scmp.eq.s32.totalorder %s20, 0
    %p61 = por %p59, %p60
    %s62 = ssub.s32 %s21, %s33
    %p63 = scmp.eq.s32.totalorder %s62, 0
    %s65 = sadd.s32 %s64, 1
    %s66 = scalar_select %p63, %s64, %s65
    %p69 = pneg %p63
    %p70 = scmp.eq.s32.totalorder %s14, 1
    %p71 = por %p69, %p70
    %p72 = scmp.ne.s32.totalorder %s64, %s67
    %p73 = scmp.eq.s32.totalorder %s14, 0
    %p74 = por %p72, %p73
    %p75 = scmp.ne.s32.totalorder %s64, %s67
    %p76 = scmp.eq.s32.totalorder %s19, 1
    %p77 = por %p75, %p76
    %p78 = scmp.ne.s32.totalorder %s67, %s68
    %p79 = scmp.eq.s32.totalorder %s19, 0
    %p80 = por %p78, %p79
    %p81 = scmp.ne.s32.totalorder %s67, %s68
    %p82 = scmp.eq.s32.totalorder %s20, 1
    %p83 = por %p81, %p82
    %p85 = scmp.ne.s32.totalorder %s68, %s84
    %p86 = scmp.eq.s32.totalorder %s20, 0
    %p87 = por %p85, %p86
    %s89 = sadd.s32 %s88, 1
    %p92 = scmp.eq.s32.totalorder %s14, 1
    %p93 = scmp.ne.s32.totalorder %s88, %s90
    %p94 = scmp.eq.s32.totalorder %s14, 0
    %p95 = por %p93, %p94
    %p96 = scmp.ne.s32.totalorder %s88, %s90
    %p97 = scmp.eq.s32.totalorder %s19, 1
    %p98 = por %p96, %p97
    %p99 = scmp.ne.s32.totalorder %s90, %s91
    %p100 = scmp.eq.s32.totalorder %s19, 0
    %p101 = por %p99, %p100
    %p102 = scmp.ne.s32.totalorder %s90, %s91
    %p103 = scmp.eq.s32.totalorder %s20, 1
    %p104 = por %p102, %p103
    %p106 = scmp.ne.s32.totalorder %s91, %s105
    %p107 = scmp.eq.s32.totalorder %s20, 0
    %p108 = por %p106, %p107
    %s110 = sadd.s32 %s109, 1
    %p113 = scmp.eq.s32.totalorder %s14, 1
    %p114 = scmp.ne.s32.totalorder %s109, %s111
    %p115 = scmp.eq.s32.totalorder %s14, 0
    %p116 = por %p114, %p115
    %p117 = scmp.ne.s32.totalorder %s109, %s111
    %p118 = scmp.eq.s32.totalorder %s19, 1
    %p119 = por %p117, %p118
    %p120 = scmp.ne.s32.totalorder %s111, %s112
    %p121 = scmp.eq.s32.totalorder %s19, 0
    %p122 = por %p120, %p121
    %p123 = scmp.ne.s32.totalorder %s111, %s112
    %p124 = scmp.eq.s32.totalorder %s20, 1
    %p125 = por %p123, %p124
    %p127 = scmp.ne.s32.totalorder %s112, %s126
    %p128 = scmp.eq.s32.totalorder %s20, 0
    %p129 = por %p127, %p128
    %s131 = sadd.s32 %s130, 1
    %p134 = scmp.eq.s32.totalorder %s14, 1
    %p135 = scmp.ne.s32.totalorder %s130, %s132
    %p136 = scmp.eq.s32.totalorder %s14, 0
    %p137 = por %p135, %p136
    %p138 = scmp.ne.s32.totalorder %s130, %s132
    %p139 = scmp.eq.s32.totalorder %s19, 1
    %p140 = por %p138, %p139
    %p141 = scmp.ne.s32.totalorder %s132, %s133
    %p142 = scmp.eq.s32.totalorder %s19, 0
    %p143 = por %p141, %p142
    %p144 = scmp.ne.s32.totalorder %s132, %s133
    %p145 = scmp.eq.s32.totalorder %s20, 1
    %p146 = por %p144, %p145
    %p148 = scmp.ne.s32.totalorder %s133, %s147
    %p149 = scmp.eq.s32.totalorder %s20, 0
    %p150 = por %p148, %p149
    %s152 = sadd.s32 %s151, 1
    %p155 = scmp.eq.s32.totalorder %s14, 1
    %p156 = scmp.ne.s32.totalorder %s151, %s153
    %p157 = scmp.eq.s32.totalorder %s14, 0
    %p158 = por %p156, %p157
    %p159 = scmp.ne.s32.totalorder %s151, %s153
    %p160 = scmp.eq.s32.totalorder %s19, 1
    %p161 = por %p159, %p160
    %p162 = scmp.ne.s32.totalorder %s153, %s154
    %p163 = scmp.eq.s32.totalorder %s19, 0
    %p164 = por %p162, %p163
    %p165 = scmp.ne.s32.totalorder %s153, %s154
    %p166 = scmp.eq.s32.totalorder %s20, 1
    %p167 = por %p165, %p166
    %p169 = scmp.ne.s32.totalorder %s154, %s168
    %p170 = scmp.eq.s32.totalorder %s20, 0
    %p171 = por %p169, %p170
    %s172 = ssub.s32 %s22, %s29
    %s173 = ssub.s32 %s21, %s33
    %s174 = sor.u32 %s172, %s173
    %p175 = scmp.eq.s32.totalorder %s174, 0
    %s177 = sadd.s32 %s176, 1
    %s178 = scalar_select %p175, %s176, %s177
    %p181 = pneg %p175
    %p182 = scmp.eq.s32.totalorder %s14, 1
    %p183 = por %p181, %p182
    %p184 = scmp.ne.s32.totalorder %s176, %s179
    %p185 = scmp.eq.s32.totalorder %s14, 0
    %p186 = por %p184, %p185
    %p187 = scmp.ne.s32.totalorder %s176, %s179
    %p188 = scmp.eq.s32.totalorder %s19, 1
    %p189 = por %p187, %p188
    %p190 = scmp.ne.s32.totalorder %s179, %s180
    %p191 = scmp.eq.s32.totalorder %s19, 0
    %p192 = por %p190, %p191
    %p193 = scmp.ne.s32.totalorder %s179, %s180
    %p194 = scmp.eq.s32.totalorder %s20, 1
    %p195 = por %p193, %p194
    %p197 = scmp.ne.s32.totalorder %s180, %s196
    %p198 = scmp.eq.s32.totalorder %s20, 0
    %p199 = por %p197, %p198
    %s200 = ssub.s32 %s21, %s33
    %p201 = scmp.eq.s32.totalorder %s200, 0
    %s203 = sadd.s32 %s202, 1
    %s204 = scalar_select %p201, %s202, %s203
    %p207 = pneg %p201
    %p208 = scmp.eq.s32.totalorder %s14, 1
    %p209 = por %p207, %p208
    %p210 = scmp.ne.s32.totalorder %s202, %s205
    %p211 = scmp.eq.s32.totalorder %s14, 0
    %p212 = por %p210, %p211
    %p213 = scmp.ne.s32.totalorder %s202, %s205
    %p214 = scmp.eq.s32.totalorder %s19, 1
    %p215 = por %p213, %p214
    %p216 = scmp.ne.s32.totalorder %s205, %s206
    %p217 = scmp.eq.s32.totalorder %s19, 0
    %p218 = por %p216, %p217
    %p219 = scmp.ne.s32.totalorder %s205, %s206
    %p220 = scmp.eq.s32.totalorder %s20, 1
    %p221 = por %p219, %p220
    %p223 = scmp.ne.s32.totalorder %s206, %s222
    %p224 = scmp.eq.s32.totalorder %s20, 0
    %p225 = por %p223, %p224
    %p226 = scmp.le.s32.totalorder 1, %s14
    %p227 = scmp.lt.s32.totalorder %s14, 3
    %p228 = pnand %p226, %p227
    %p229 = pneg %p228
    // Predicated region
    $region9: #{seq2seq_decoder_forward.2} parent=5 // pred_check
      _
    $region10: #{seq2seq_decoder_forward.2} parent=5 // pred_check_branch
      %231 = sbr.rel (%p228) target = $region12
    $region11: #{seq2seq_decoder_forward.2} parent=5 // pred_region
      %s232 = ssub.s32 %s14, 1
      // Predicated region
      $region13: #{seq2seq_decoder_forward.2} parent=11 // pred_check
        %p233 = pneg %p80
      $region14: #{seq2seq_decoder_forward.2} parent=11 // pred_check_branch
        %235 = sbr.rel (%p233) target = $region16
      $region15: #{seq2seq_decoder_forward.2} parent=11 // pred_region
        %p236 = scmp.lt.s32.totalorder %s23, 0
        %s237 = scalar_select %p236, %s23, 0
        %s238 = smul.addr %s237, 8
        %s239 = scalar_lea.vmem %s1, %s238
      $region16: #{seq2seq_decoder_forward.2} parent=11 // pred_fallthru
        _
      // Predicated region
      $region17: #{seq2seq_decoder_forward.2} parent=11 // pred_check
        %p240 = pneg %p101
      $region18: #{seq2seq_decoder_forward.2} parent=11 // pred_check_branch
        %242 = sbr.rel (%p240) target = $region20
      $region19: #{seq2seq_decoder_forward.2} parent=11 // pred_region
        _
      $region20: #{seq2seq_decoder_forward.2} parent=11 // pred_fallthru
        _
      // Predicated region
      $region21: #{seq2seq_decoder_forward.2} parent=11 // pred_check
        %p243 = pneg %p122
      $region22: #{seq2seq_decoder_forward.2} parent=11 // pred_check_branch
        %245 = sbr.rel (%p243) target = $region24
      $region23: #{seq2seq_decoder_forward.2} parent=11 // pred_region
        _
      $region24: #{seq2seq_decoder_forward.2} parent=11 // pred_fallthru
        _
      // Predicated region
      $region25: #{seq2seq_decoder_forward.2} parent=11 // pred_check
        %p246 = pneg %p143
      $region26: #{seq2seq_decoder_forward.2} parent=11 // pred_check_branch
        %248 = sbr.rel (%p246) target = $region28
      $region27: #{seq2seq_decoder_forward.2} parent=11 // pred_region
        _
      $region28: #{seq2seq_decoder_forward.2} parent=11 // pred_fallthru
        _
      // Predicated region
      $region29: #{seq2seq_decoder_forward.2} parent=11 // pred_check
        %p249 = pneg %p164
      $region30: #{seq2seq_decoder_forward.2} parent=11 // pred_check_branch
        %251 = sbr.rel (%p249) target = $region32
      $region31: #{seq2seq_decoder_forward.2} parent=11 // pred_region
        _
      $region32: #{seq2seq_decoder_forward.2} parent=11 // pred_fallthru
        _
    $region12: #{seq2seq_decoder_forward.2} parent=5 // pred_fallthru
      _
    %p252 = scmp.lt.s32.totalorder %s14, 2
    // Predicated region
    $region33: #{seq2seq_decoder_forward.2} parent=5 // pred_check
      %p253 = pneg %p252
    $region34: #{seq2seq_decoder_forward.2} parent=5 // pred_check_branch
      %255 = sbr.rel (%p253) target = $region36
    $region35: #{seq2seq_decoder_forward.2} parent=5 // pred_region
      // Predicated region
      $region37: #{seq2seq_decoder_forward.2} parent=35 // pred_check
        %p256 = pneg %p48
      $region38: #{seq2seq_decoder_forward.2} parent=35 // pred_check_branch
        %258 = sbr.rel (%p256) target = $region40
      $region39: #{seq2seq_decoder_forward.2} parent=35 // pred_region
        %s259 = smul.u32 4, %s22
        %p260 = scmp.lt.s32.totalorder %s259, 7
        %s261 = scalar_select %p260, %s259, 7
        %p262 = scmp.lt.s32.totalorder %s21, 0
        %s263 = scalar_select %p262, %s21, 0
        %s264 = smul.addr %s263, 3
        %s265 = smul.addr %s261, 3
        %s266 = sadd.s32 %s264, %s265
        %s267 = smul.addr %s266, 4
        %s268 = scalar_lea.vmem %s0, %s267
        %s269 = smul.u32 4, %s22
      $region40: #{seq2seq_decoder_forward.2} parent=35 // pred_fallthru
        _
    $region36: #{seq2seq_decoder_forward.2} parent=5 // pred_fallthru
      _
    %p270 = scmp.le.s32.totalorder 1, %s14
    %p271 = scmp.lt.s32.totalorder %s14, 3
    %p272 = pnand %p270, %p271
    %p273 = pneg %p272
    // Predicated region
    $region41: #{seq2seq_decoder_forward.2} parent=5 // pred_check
      _
    $region42: #{seq2seq_decoder_forward.2} parent=5 // pred_check_branch
      %275 = sbr.rel (%p272) target = $region44
    $region43: #{seq2seq_decoder_forward.2} parent=5 // pred_region
      %s276 = ssub.s32 %s14, 1
      %s277 = smul.u32 4, %s24
      %p278 = scmp.lt.s32.totalorder %s277, 7
      %s279 = scalar_select %p278, %s277, 7
      %p280 = scmp.lt.s32.totalorder %s23, 0
      %s281 = scalar_select %p280, %s23, 0
      %s282 = smul.addr %s281, 3
      %s283 = smul.addr %s279, 3
      %s284 = sadd.s32 %s282, %s283
      %s285 = smul.addr %s284, 4
      %s286 = scalar_lea.vmem %s0, %s285
      %p287 = pneg %p54
      %p288 = pneg %p51
      %p289 = scmp.lt.s32.totalorder %s23, 0
      %s290 = scalar_select %p289, %s23, 0
      %s291 = smul.addr %s290, 8
      %s292 = scalar_lea.vmem %s1, %s291
      %p293 = pneg %p80
      %p294 = pneg %p77
      %p295 = pneg %p101
      %p296 = pneg %p98
      %p297 = pneg %p122
      %p298 = pneg %p119
      %p299 = pneg %p143
      %p300 = pneg %p140
      %p301 = pneg %p164
      %p302 = pneg %p161
      %p303 = pneg %p192
      %p304 = pneg %p189
      %s305 = smul.u32 4, %s24
      %p306 = scmp.lt.s32.totalorder %s305, 7
      %s307 = scalar_select %p306, %s305, 7
      %p308 = scmp.lt.s32.totalorder %s23, 0
      %s309 = scalar_select %p308, %s23, 0
      %s310 = sadd.s32 %s309, %s307
      %s311 = smul.addr %s310, 4
      %s312 = scalar_lea.vmem %s6, %s311
      %p313 = pneg %p218
      %p314 = pneg %p215
      %p315 = scmp.lt.s32.totalorder %s23, 0
      %s316 = scalar_select %p315, %s23, 0
      %s317 = smul.addr %s316, 8
      %s318 = scalar_lea.vmem %s7, %s317
      %s319 = smul.u32 4, %s24
      %p320 = scmp.lt.s32.totalorder %s319, 7
      %s321 = scalar_select %p320, %s319, 7
      %p322 = scmp.lt.s32.totalorder %s23, 0
      %s323 = scalar_select %p322, %s23, 0
      %s324 = smul.addr %s323, 3
      %s325 = smul.addr %s321, 3
      %s326 = sadd.s32 %s324, %s325
      %s327 = smul.addr %s326, 4
      %s328 = scalar_lea.vmem %s0, %s327
      %s329 = smul.u32 4, %s24
      %p330 = scmp.lt.s32.totalorder %s23, 0
      %s331 = scalar_select %p330, %s23, 0
      %s332 = smul.addr %s331, 8
      %s333 = scalar_lea.vmem %s1, %s332
      %s334 = smul.u32 4, %s24
      %p335 = scmp.lt.s32.totalorder %s334, 7
      %s336 = scalar_select %p335, %s334, 7
      %p337 = scmp.lt.s32.totalorder %s23, 0
      %s338 = scalar_select %p337, %s23, 0
      %s339 = sadd.s32 %s338, %s336
      %s340 = smul.addr %s339, 4
      %s341 = scalar_lea.vmem %s6, %s340
      %s342 = smul.u32 4, %s24
      %p343 = scmp.lt.s32.totalorder %s23, 0
      %s344 = scalar_select %p343, %s23, 0
      %s345 = smul.addr %s344, 8
      %s346 = scalar_lea.vmem %s7, %s345
      %p348 = scmp.eq.s32.totalorder %s24, 0
      // Predicated region
      $region45: #{seq2seq_decoder_forward.2} parent=43 // pred_check
        %p349 = pneg %p348
      $region46: #{seq2seq_decoder_forward.2} parent=43 // pred_check_branch
        %351 = sbr.rel (%p349) target = $region48
      $region47: #{seq2seq_decoder_forward.2} parent=43 // pred_region
        %v352 = vld [vmem:[%s333] sm:$0xff]
        %v353 = vld [vmem:[%s333 + $0x8] sm:$0xff]
        %354 = vst [vmem:[#allocation2] sm:$0xff] %v352
        %355 = vst [vmem:[#allocation2 + $0x8] sm:$0xff] %v353
      $region48: #{seq2seq_decoder_forward.2} parent=43 // pred_fallthru
        _
      %v356 = vld [vmem:[%s5] sm:$0x1]
      %v358 = vlaneseq
      %v359 = vshrl.u32 %v358, 7
      %v360 = vsub.s32 0, %v359
      %v361 = vrot.slane %v356, %v360
      %s363 = scalar_lea.vmem %s5, 1
      %v364 = vld [vmem:[%s363] sm:$0x1]
      %v366 = vlaneseq
      %v367 = vshrl.u32 %v366, 7
      %v368 = vsub.s32 0, %v367
      %v369 = vrot.slane %v364, %v368
      %v371 = vld [vmem:[%s4] sm:$0x7]
      %v373 = vlaneseq
      %v374 = vshrl.u32 %v373, 7
      %v375 = vsub.s32 0, %v374
      %v376 = vrot.slane %v371, %v375
      %v377 = vlaneseq
      %v378 = vshrl.u32 %v377, 7
      %v379 = vsub.s32 1, %v378
      %v380 = vrot.slane %v371, %v379
      %v381 = vlaneseq
      %v382 = vshrl.u32 %v381, 7
      %v383 = vsub.s32 2, %v382
      %v384 = vrot.slane %v371, %v383
      %v388 = vld [vmem:[%s328] sm:$0xff]
      %v389 = vld [vmem:[%s328 + $0x8] sm:$0xf]
      %v390 = vunpack.c.l.bf16 %v388
      %v391 = vunpack.c.h.bf16 %v388
      %v392 = vunpack.c.l.bf16 %v389
      %v393 = vld [vmem:[#allocation2] sm:$0xff]
      %s394 = scalar_lea.vmem [#allocation2], 8
      %v395 = vld [vmem:[%s394] sm:$0xff]
      %v396 = vpack.c.bf16 %v393, %v393
      %v397 = vld [vmem:[%s2] sm:$0xff]
      %v398 = vld [vmem:[%s2 + $0x8] sm:$0xf]
      %v399 = vld [vmem:[%s2 + $0xc] sm:$0xff]
      %v400 = vld [vmem:[%s2 + $0x14] sm:$0xf]
      %v401 = vld [vmem:[%s2 + $0x18] sm:$0xff]
      %v402 = vld [vmem:[%s2 + $0x20] sm:$0xf]
      %v403 = vld [vmem:[%s2 + $0x24] sm:$0xff]
      %v404 = vld [vmem:[%s2 + $0x2c] sm:$0xf]
      %v405 = vld [vmem:[%s2 + $0x30] sm:$0xff]
      %v406 = vld [vmem:[%s2 + $0x38] sm:$0xf]
      %v407 = vld [vmem:[%s2 + $0x3c] sm:$0xff]
      %v408 = vld [vmem:[%s2 + $0x44] sm:$0xf]
      %v409 = vld [vmem:[%s2 + $0x48] sm:$0xff]
      %v410 = vld [vmem:[%s2 + $0x50] sm:$0xf]
      %v411 = vld [vmem:[%s2 + $0x54] sm:$0xff]
      %v412 = vld [vmem:[%s2 + $0x5c] sm:$0xf]
      %v413 = vld [vmem:[%s2 + $0x60] sm:$0xff]
      %v414 = vld [vmem:[%s2 + $0x68] sm:$0xf]
      %v415 = vld [vmem:[%s2 + $0x6c] sm:$0xff]
      %v416 = vld [vmem:[%s2 + $0x74] sm:$0xf]
      %v417 = vld [vmem:[%s2 + $0x78] sm:$0xff]
      %v418 = vld [vmem:[%s2 + $0x80] sm:$0xf]
      %v419 = vld [vmem:[%s2 + $0x84] sm:$0xff]
      %v420 = vld [vmem:[%s2 + $0x8c] sm:$0xf]
      %v421 = vld [vmem:[%s2 + $0x90] sm:$0xff]
      %v422 = vld [vmem:[%s2 + $0x98] sm:$0xf]
      %v423 = vld [vmem:[%s2 + $0x9c] sm:$0xff]
      %v424 = vld [vmem:[%s2 + $0xa4] sm:$0xf]
      %v425 = vld [vmem:[%s2 + $0xa8] sm:$0xff]
      %v426 = vld [vmem:[%s2 + $0xb0] sm:$0xf]
      %v427 = vld [vmem:[%s2 + $0xb4] sm:$0xff]
      %v428 = vld [vmem:[%s2 + $0xbc] sm:$0xf]
      %v461 = vunpack.c.l.b16 %v397
      %v462 = vunpack.c.h.b16 %v397
      %v463 = vunpack.c.l.b16 %v398
      %v464 = vunpack.c.l.b16 %v399
      %v465 = vunpack.c.h.b16 %v399
      %v466 = vunpack.c.l.b16 %v400
      %v467 = vunpack.c.l.b16 %v401
      %v468 = vunpack.c.h.b16 %v401
      %v469 = vunpack.c.l.b16 %v402
      %v470 = vunpack.c.l.b16 %v403
      %v471 = vunpack.c.h.b16 %v403
      %v472 = vunpack.c.l.b16 %v404
      %v473 = vunpack.c.l.b16 %v405
      %v474 = vunpack.c.h.b16 %v405
      %v475 = vunpack.c.l.b16 %v406
      %v476 = vunpack.c.l.b16 %v407
      %v477 = vunpack.c.h.b16 %v407
      %v478 = vunpack.c.l.b16 %v408
      %v479 = vunpack.c.l.b16 %v409
      %v480 = vunpack.c.h.b16 %v409
      %v481 = vunpack.c.l.b16 %v410
      %v482 = vunpack.c.l.b16 %v411
      %v483 = vunpack.c.h.b16 %v411
      %v484 = vunpack.c.l.b16 %v412
      %v485 = vunpack.c.l.b16 %v413
      %v486 = vunpack.c.h.b16 %v413
      %v487 = vunpack.c.l.b16 %v414
      %v488 = vunpack.c.l.b16 %v415
      %v489 = vunpack.c.h.b16 %v415
      %v490 = vunpack.c.l.b16 %v416
      %v491 = vunpack.c.l.b16 %v417
      %v492 = vunpack.c.h.b16 %v417
      %v493 = vunpack.c.l.b16 %v418
      %v494 = vunpack.c.l.b16 %v419
      %v495 = vunpack.c.h.b16 %v419
      %v496 = vunpack.c.l.b16 %v420
      %v497 = vunpack.c.l.b16 %v421
      %v498 = vunpack.c.h.b16 %v421
      %v499 = vunpack.c.l.b16 %v422
      %v500 = vunpack.c.l.b16 %v423
      %v501 = vunpack.c.h.b16 %v423
      %v502 = vunpack.c.l.b16 %v424
      %v503 = vunpack.c.l.b16 %v425
      %v504 = vunpack.c.h.b16 %v425
      %v505 = vunpack.c.l.b16 %v426
      %v506 = vunpack.c.l.b16 %v427
      %v507 = vunpack.c.h.b16 %v427
      %v508 = vunpack.c.l.b16 %v428
      %v509 = vpack.c.b16 %v464, %v461
      %v510 = vpack.c.b16 %v465, %v462
      %v511 = vpack.c.b16 %v466, %v463
      %v512 = vpack.c.b16 %v470, %v467
      %v513 = vpack.c.b16 %v471, %v468
      %v514 = vpack.c.b16 %v472, %v469
      %v515 = vpack.c.b16 %v476, %v473
      %v516 = vpack.c.b16 %v477, %v474
      %v517 = vpack.c.b16 %v478, %v475
      %v518 = vpack.c.b16 %v482, %v479
      %v519 = vpack.c.b16 %v483, %v480
      %v520 = vpack.c.b16 %v484, %v481
      %v521 = vpack.c.b16 %v488, %v485
      %v522 = vpack.c.b16 %v489, %v486
      %v523 = vpack.c.b16 %v490, %v487
      %v524 = vpack.c.b16 %v494, %v491
      %v525 = vpack.c.b16 %v495, %v492
      %v526 = vpack.c.b16 %v496, %v493
      %v527 = vpack.c.b16 %v500, %v497
      %v528 = vpack.c.b16 %v501, %v498
      %v529 = vpack.c.b16 %v502, %v499
      %v530 = vpack.c.b16 %v506, %v503
      %v531 = vpack.c.b16 %v507, %v504
      %v532 = vpack.c.b16 %v508, %v505
      %557 = vmatprep.subr.bf16.mxu0 %v531
      %558 = vmatpush1.bf16.msra.mxu0 %v530
      %559 = vmatprep.subr.bf16.mxu0 %v528
      %560 = vmatpush1.bf16.msra.mxu0 %v527
      %561 = vmatprep.subr.bf16.mxu0 %v525
      %562 = vmatpush1.bf16.msra.mxu0 %v524
      %563 = vmatprep.subr.bf16.mxu0 %v522
      %564 = vmatpush1.bf16.msra.mxu0 %v521
      %565 = vmatprep.subr.bf16.mxu0 %v519
      %566 = vmatpush1.bf16.msra.mxu0 %v518
      %567 = vmatprep.subr.bf16.mxu0 %v516
      %568 = vmatpush1.bf16.msra.mxu0 %v515
      %569 = vmatprep.subr.bf16.mxu0 %v513
      %570 = vmatpush1.bf16.msra.mxu0 %v512
      %571 = vmatprep.subr.bf16.mxu0 %v510
      %572 = vmatpush1.bf16.msra.mxu0 %v509
      %573 = vmatprep.subr.bf16.mxu0 0
      %574 = vmatpush2.bf16.msra.mxu0 0
      %575 = vmatprep.subr.bf16.mxu0 0
      %576 = vmatpush2.bf16.msra.mxu0 0
      %577 = vmatprep.subr.bf16.mxu0 0
      %578 = vmatpush2.bf16.msra.mxu0 0
      %579 = vmatprep.subr.bf16.mxu0 0
      %580 = vmatpush2.bf16.msra.mxu0 0
      %581 = vmatprep.subr.bf16.mxu0 0
      %582 = vmatpush2.bf16.msra.mxu0 0
      %583 = vmatprep.subr.bf16.mxu0 0
      %584 = vmatpush2.bf16.msra.mxu0 0
      %585 = vmatprep.subr.bf16.mxu0 0
      %586 = vmatpush2.bf16.msra.mxu0 0
      %587 = vmatprep.subr.bf16.mxu0 0
      %588 = vmatpush2.bf16.msra.mxu0 0
      %589 = vmatprep.mubr.bf16.mxu0 0
      %590 = vmatmul.mubr.bf16.gmra.mxu0 %v396
      %v591 = vpop.f32.mrf.mxu0
      %v592 = vadd.f32 0.0, %v591
      %v593 = vpop.f32.mrf.mxu0
      %v594 = vadd.f32 0.0, %v593
      %v595 = vpop.f32.mrf.mxu0
      %v596 = vpop.f32.mrf.mxu0
      %597 = vdwg.mxu0
      %598 = vmatprep.subr.bf16.mxu0 0
      %599 = vmatpush1.bf16.msra.mxu0 %v532
      %600 = vmatprep.subr.bf16.mxu0 0
      %601 = vmatpush1.bf16.msra.mxu0 %v529
      %602 = vmatprep.subr.bf16.mxu0 0
      %603 = vmatpush1.bf16.msra.mxu0 %v526
      %604 = vmatprep.subr.bf16.mxu0 0
      %605 = vmatpush1.bf16.msra.mxu0 %v523
      %606 = vmatprep.subr.bf16.mxu0 0
      %607 = vmatpush1.bf16.msra.mxu0 %v520
      %608 = vmatprep.subr.bf16.mxu0 0
      %609 = vmatpush1.bf16.msra.mxu0 %v517
      %610 = vmatprep.subr.bf16.mxu0 0
      %611 = vmatpush1.bf16.msra.mxu0 %v514
      %612 = vmatprep.subr.bf16.mxu0 0
      %613 = vmatpush1.bf16.msra.mxu0 %v511
      %614 = vmatprep.subr.bf16.mxu0 0
      %615 = vmatpush2.bf16.msra.mxu0 0
      %616 = vmatprep.subr.bf16.mxu0 0
      %617 = vmatpush2.bf16.msra.mxu0 0
      %618 = vmatprep.subr.bf16.mxu0 0
      %619 = vmatpush2.bf16.msra.mxu0 0
      %620 = vmatprep.subr.bf16.mxu0 0
      %621 = vmatpush2.bf16.msra.mxu0 0
      %622 = vmatprep.subr.bf16.mxu0 0
      %623 = vmatpush2.bf16.msra.mxu0 0
      %624 = vmatprep.subr.bf16.mxu0 0
      %625 = vmatpush2.bf16.msra.mxu0 0
      %626 = vmatprep.subr.bf16.mxu0 0
      %627 = vmatpush2.bf16.msra.mxu0 0
      %628 = vmatprep.subr.bf16.mxu0 0
      %629 = vmatpush2.bf16.msra.mxu0 0
      %630 = vmatprep.mubr.bf16.mxu0 0
      %631 = vmatmul.mubr.bf16.gmra.mxu0 %v396
      %v632 = vpop.f32.mrf.mxu0
      %v633 = vadd.f32 0.0, %v632
      %v634 = vpop.f32.mrf.mxu0
      %v635 = vpop.f32.mrf.mxu0
      %v636 = vpop.f32.mrf.mxu0
      %637 = vdwg.mxu0
      %v638 = vpack.c.bf16 %v395, %v395
      %s639 = scalar_lea.vmem %s2, 192
      %v640 = vld [vmem:[%s639] sm:$0xff]
      %v641 = vld [vmem:[%s639 + $0x8] sm:$0xf]
      %v642 = vld [vmem:[%s639 + $0xc] sm:$0xff]
      %v643 = vld [vmem:[%s639 + $0x14] sm:$0xf]
      %v644 = vld [vmem:[%s639 + $0x18] sm:$0xff]
      %v645 = vld [vmem:[%s639 + $0x20] sm:$0xf]
      %v646 = vld [vmem:[%s639 + $0x24] sm:$0xff]
      %v647 = vld [vmem:[%s639 + $0x2c] sm:$0xf]
      %v648 = vld [vmem:[%s639 + $0x30] sm:$0xff]
      %v649 = vld [vmem:[%s639 + $0x38] sm:$0xf]
      %v650 = vld [vmem:[%s639 + $0x3c] sm:$0xff]
      %v651 = vld [vmem:[%s639 + $0x44] sm:$0xf]
      %v652 = vld [vmem:[%s639 + $0x48] sm:$0xff]
      %v653 = vld [vmem:[%s639 + $0x50] sm:$0xf]
      %v654 = vld [vmem:[%s639 + $0x54] sm:$0xff]
      %v655 = vld [vmem:[%s639 + $0x5c] sm:$0xf]
      %v656 = vld [vmem:[%s639 + $0x60] sm:$0xff]
      %v657 = vld [vmem:[%s639 + $0x68] sm:$0xf]
      %v658 = vld [vmem:[%s639 + $0x6c] sm:$0xff]
      %v659 = vld [vmem:[%s639 + $0x74] sm:$0xf]
      %v660 = vld [vmem:[%s639 + $0x78] sm:$0xff]
      %v661 = vld [vmem:[%s639 + $0x80] sm:$0xf]
      %v662 = vld [vmem:[%s639 + $0x84] sm:$0xff]
      %v663 = vld [vmem:[%s639 + $0x8c] sm:$0xf]
      %v664 = vld [vmem:[%s639 + $0x90] sm:$0xff]
      %v665 = vld [vmem:[%s639 + $0x98] sm:$0xf]
      %v666 = vld [vmem:[%s639 + $0x9c] sm:$0xff]
      %v667 = vld [vmem:[%s639 + $0xa4] sm:$0xf]
      %v668 = vld [vmem:[%s639 + $0xa8] sm:$0xff]
      %v669 = vld [vmem:[%s639 + $0xb0] sm:$0xf]
      %v670 = vld [vmem:[%s639 + $0xb4] sm:$0xff]
      %v671 = vld [vmem:[%s639 + $0xbc] sm:$0xf]
      %v704 = vunpack.c.l.b16 %v640
      %v705 = vunpack.c.h.b16 %v640
      %v706 = vunpack.c.l.b16 %v641
      %v707 = vunpack.c.l.b16 %v642
      %v708 = vunpack.c.h.b16 %v642
      %v709 = vunpack.c.l.b16 %v643
      %v710 = vunpack.c.l.b16 %v644
      %v711 = vunpack.c.h.b16 %v644
      %v712 = vunpack.c.l.b16 %v645
      %v713 = vunpack.c.l.b16 %v646
      %v714 = vunpack.c.h.b16 %v646
      %v715 = vunpack.c.l.b16 %v647
      %v716 = vunpack.c.l.b16 %v648
      %v717 = vunpack.c.h.b16 %v648
      %v718 = vunpack.c.l.b16 %v649
      %v719 = vunpack.c.l.b16 %v650
      %v720 = vunpack.c.h.b16 %v650
      %v721 = vunpack.c.l.b16 %v651
      %v722 = vunpack.c.l.b16 %v652
      %v723 = vunpack.c.h.b16 %v652
      %v724 = vunpack.c.l.b16 %v653
      %v725 = vunpack.c.l.b16 %v654
      %v726 = vunpack.c.h.b16 %v654
      %v727 = vunpack.c.l.b16 %v655
      %v728 = vunpack.c.l.b16 %v656
      %v729 = vunpack.c.h.b16 %v656
      %v730 = vunpack.c.l.b16 %v657
      %v731 = vunpack.c.l.b16 %v658
      %v732 = vunpack.c.h.b16 %v658
      %v733 = vunpack.c.l.b16 %v659
      %v734 = vunpack.c.l.b16 %v660
      %v735 = vunpack.c.h.b16 %v660
      %v736 = vunpack.c.l.b16 %v661
      %v737 = vunpack.c.l.b16 %v662
      %v738 = vunpack.c.h.b16 %v662
      %v739 = vunpack.c.l.b16 %v663
      %v740 = vunpack.c.l.b16 %v664
      %v741 = vunpack.c.h.b16 %v664
      %v742 = vunpack.c.l.b16 %v665
      %v743 = vunpack.c.l.b16 %v666
      %v744 = vunpack.c.h.b16 %v666
      %v745 = vunpack.c.l.b16 %v667
      %v746 = vunpack.c.l.b16 %v668
      %v747 = vunpack.c.h.b16 %v668
      %v748 = vunpack.c.l.b16 %v669
      %v749 = vunpack.c.l.b16 %v670
      %v750 = vunpack.c.h.b16 %v670
      %v751 = vunpack.c.l.b16 %v671
      %v752 = vpack.c.b16 %v707, %v704
      %v753 = vpack.c.b16 %v708, %v705
      %v754 = vpack.c.b16 %v709, %v706
      %v755 = vpack.c.b16 %v713, %v710
      %v756 = vpack.c.b16 %v714, %v711
      %v757 = vpack.c.b16 %v715, %v712
      %v758 = vpack.c.b16 %v719, %v716
      %v759 = vpack.c.b16 %v720, %v717
      %v760 = vpack.c.b16 %v721, %v718
      %v761 = vpack.c.b16 %v725, %v722
      %v762 = vpack.c.b16 %v726, %v723
      %v763 = vpack.c.b16 %v727, %v724
      %v764 = vpack.c.b16 %v731, %v728
      %v765 = vpack.c.b16 %v732, %v729
      %v766 = vpack.c.b16 %v733, %v730
      %v767 = vpack.c.b16 %v737, %v734
      %v768 = vpack.c.b16 %v738, %v735
      %v769 = vpack.c.b16 %v739, %v736
      %v770 = vpack.c.b16 %v743, %v740
      %v771 = vpack.c.b16 %v744, %v741
      %v772 = vpack.c.b16 %v745, %v742
      %v773 = vpack.c.b16 %v749, %v746
      %v774 = vpack.c.b16 %v750, %v747
      %v775 = vpack.c.b16 %v751, %v748
      %800 = vmatprep.subr.bf16.mxu0 %v774
      %801 = vmatpush1.bf16.msra.mxu0 %v773
      %802 = vmatprep.subr.bf16.mxu0 %v771
      %803 = vmatpush1.bf16.msra.mxu0 %v770
      %804 = vmatprep.subr.bf16.mxu0 %v768
      %805 = vmatpush1.bf16.msra.mxu0 %v767
      %806 = vmatprep.subr.bf16.mxu0 %v765
      %807 = vmatpush1.bf16.msra.mxu0 %v764
      %808 = vmatprep.subr.bf16.mxu0 %v762
      %809 = vmatpush1.bf16.msra.mxu0 %v761
      %810 = vmatprep.subr.bf16.mxu0 %v759
      %811 = vmatpush1.bf16.msra.mxu0 %v758
      %812 = vmatprep.subr.bf16.mxu0 %v756
      %813 = vmatpush1.bf16.msra.mxu0 %v755
      %814 = vmatprep.subr.bf16.mxu0 %v753
      %815 = vmatpush1.bf16.msra.mxu0 %v752
      %816 = vmatprep.subr.bf16.mxu0 0
      %817 = vmatpush2.bf16.msra.mxu0 0
      %818 = vmatprep.subr.bf16.mxu0 0
      %819 = vmatpush2.bf16.msra.mxu0 0
      %820 = vmatprep.subr.bf16.mxu0 0
      %821 = vmatpush2.bf16.msra.mxu0 0
      %822 = vmatprep.subr.bf16.mxu0 0
      %823 = vmatpush2.bf16.msra.mxu0 0
      %824 = vmatprep.subr.bf16.mxu0 0
      %825 = vmatpush2.bf16.msra.mxu0 0
      %826 = vmatprep.subr.bf16.mxu0 0
      %827 = vmatpush2.bf16.msra.mxu0 0
      %828 = vmatprep.subr.bf16.mxu0 0
      %829 = vmatpush2.bf16.msra.mxu0 0
      %830 = vmatprep.subr.bf16.mxu0 0
      %831 = vmatpush2.bf16.msra.mxu0 0
      %832 = vmatprep.mubr.bf16.mxu0 0
      %833 = vmatmul.mubr.bf16.gmra.mxu0 %v638
      %v834 = vpop.f32.mrf.mxu0
      %v835 = vadd.f32 0.0, %v834
      %v836 = vpop.f32.mrf.mxu0
      %v837 = vadd.f32 0.0, %v836
      %v838 = vpop.f32.mrf.mxu0
      %v839 = vpop.f32.mrf.mxu0
      %840 = vdwg.mxu0
      %841 = vmatprep.subr.bf16.mxu0 0
      %842 = vmatpush1.bf16.msra.mxu0 %v775
      %843 = vmatprep.subr.bf16.mxu0 0
      %844 = vmatpush1.bf16.msra.mxu0 %v772
      %845 = vmatprep.subr.bf16.mxu0 0
      %846 = vmatpush1.bf16.msra.mxu0 %v769
      %847 = vmatprep.subr.bf16.mxu0 0
      %848 = vmatpush1.bf16.msra.mxu0 %v766
      %849 = vmatprep.subr.bf16.mxu0 0
      %850 = vmatpush1.bf16.msra.mxu0 %v763
      %851 = vmatprep.subr.bf16.mxu0 0
      %852 = vmatpush1.bf16.msra.mxu0 %v760
      %853 = vmatprep.subr.bf16.mxu0 0
      %854 = vmatpush1.bf16.msra.mxu0 %v757
      %855 = vmatprep.subr.bf16.mxu0 0
      %856 = vmatpush1.bf16.msra.mxu0 %v754
      %857 = vmatprep.subr.bf16.mxu0 0
      %858 = vmatpush2.bf16.msra.mxu0 0
      %859 = vmatprep.subr.bf16.mxu0 0
      %860 = vmatpush2.bf16.msra.mxu0 0
      %861 = vmatprep.subr.bf16.mxu0 0
      %862 = vmatpush2.bf16.msra.mxu0 0
      %863 = vmatprep.subr.bf16.mxu0 0
      %864 = vmatpush2.bf16.msra.mxu0 0
      %865 = vmatprep.subr.bf16.mxu0 0
      %866 = vmatpush2.bf16.msra.mxu0 0
      %867 = vmatprep.subr.bf16.mxu0 0
      %868 = vmatpush2.bf16.msra.mxu0 0
      %869 = vmatprep.subr.bf16.mxu0 0
      %870 = vmatpush2.bf16.msra.mxu0 0
      %871 = vmatprep.subr.bf16.mxu0 0
      %872 = vmatpush2.bf16.msra.mxu0 0
      %873 = vmatprep.mubr.bf16.mxu0 0
      %874 = vmatmul.mubr.bf16.gmra.mxu0 %v638
      %v875 = vpop.f32.mrf.mxu0
      %v876 = vadd.f32 0.0, %v875
      %v877 = vpop.f32.mrf.mxu0
      %v878 = vpop.f32.mrf.mxu0
      %v879 = vpop.f32.mrf.mxu0
      %880 = vdwg.mxu0
      %v881 = vadd.f32 %v390, %v592
      %v882 = vxor.u32 %v881, 2147483648
      %v883 = vmul.f32 %v882, 1.442695
      %v884 = vpow.pop %v883
      %v885 = vadd.f32 %v884, 1.0
      %v886 = vrcp.pop %v885
      %v887 = vmul.f32 1.0, %v886
      %v888 = vadd.f32 %v391, %v594
      %v889 = vxor.u32 %v888, 2147483648
      %v890 = vmul.f32 %v889, 1.442695
      %v891 = vpow.pop %v890
      %v892 = vadd.f32 %v891, 1.0
      %v893 = vrcp.pop %v892
      %v894 = vmul.f32 1.0, %v893
      %v895 = vadd.f32 %v633, %v361
      %v896 = vmul.f32 %v887, %v895
      %v897 = vadd.f32 %v392, %v896
      %v898 = vtanh.pop %v897
      %v899 = vsub.f32 1.0, %v894
      %v900 = vmul.f32 %v899, %v898
      %v901 = vmul.f32 %v894, %v393
      %v902 = vadd.f32 %v900, %v901
      %903 = vst [vmem:[#allocation2] sm:$0xff] %v902
      %v904 = vpack.c.bf16 %v902, %v902
      %v905 = vld [vmem:[%s3] sm:$0xff]
      %v906 = vld [vmem:[%s3 + $0x8] sm:$0xf]
      %v907 = vld [vmem:[%s3 + $0xc] sm:$0xff]
      %v908 = vld [vmem:[%s3 + $0x14] sm:$0xf]
      %v909 = vld [vmem:[%s3 + $0x18] sm:$0xff]
      %v910 = vld [vmem:[%s3 + $0x20] sm:$0xf]
      %v911 = vld [vmem:[%s3 + $0x24] sm:$0xff]
      %v912 = vld [vmem:[%s3 + $0x2c] sm:$0xf]
      %v913 = vld [vmem:[%s3 + $0x30] sm:$0xff]
      %v914 = vld [vmem:[%s3 + $0x38] sm:$0xf]
      %v915 = vld [vmem:[%s3 + $0x3c] sm:$0xff]
      %v916 = vld [vmem:[%s3 + $0x44] sm:$0xf]
      %v917 = vld [vmem:[%s3 + $0x48] sm:$0xff]
      %v918 = vld [vmem:[%s3 + $0x50] sm:$0xf]
      %v919 = vld [vmem:[%s3 + $0x54] sm:$0xff]
      %v920 = vld [vmem:[%s3 + $0x5c] sm:$0xf]
      %v921 = vld [vmem:[%s3 + $0x60] sm:$0xff]
      %v922 = vld [vmem:[%s3 + $0x68] sm:$0xf]
      %v923 = vld [vmem:[%s3 + $0x6c] sm:$0xff]
      %v924 = vld [vmem:[%s3 + $0x74] sm:$0xf]
      %v925 = vld [vmem:[%s3 + $0x78] sm:$0xff]
      %v926 = vld [vmem:[%s3 + $0x80] sm:$0xf]
      %v927 = vld [vmem:[%s3 + $0x84] sm:$0xff]
      %v928 = vld [vmem:[%s3 + $0x8c] sm:$0xf]
      %v929 = vld [vmem:[%s3 + $0x90] sm:$0xff]
      %v930 = vld [vmem:[%s3 + $0x98] sm:$0xf]
      %v931 = vld [vmem:[%s3 + $0x9c] sm:$0xff]
      %v932 = vld [vmem:[%s3 + $0xa4] sm:$0xf]
      %v933 = vld [vmem:[%s3 + $0xa8] sm:$0xff]
      %v934 = vld [vmem:[%s3 + $0xb0] sm:$0xf]
      %v935 = vld [vmem:[%s3 + $0xb4] sm:$0xff]
      %v936 = vld [vmem:[%s3 + $0xbc] sm:$0xf]
      %v969 = vunpack.c.l.b16 %v905
      %v970 = vunpack.c.h.b16 %v905
      %v971 = vunpack.c.l.b16 %v906
      %v972 = vunpack.c.l.b16 %v907
      %v973 = vunpack.c.h.b16 %v907
      %v974 = vunpack.c.l.b16 %v908
      %v975 = vunpack.c.l.b16 %v909
      %v976 = vunpack.c.h.b16 %v909
      %v977 = vunpack.c.l.b16 %v910
      %v978 = vunpack.c.l.b16 %v911
      %v979 = vunpack.c.h.b16 %v911
      %v980 = vunpack.c.l.b16 %v912
      %v981 = vunpack.c.l.b16 %v913
      %v982 = vunpack.c.h.b16 %v913
      %v983 = vunpack.c.l.b16 %v914
      %v984 = vunpack.c.l.b16 %v915
      %v985 = vunpack.c.h.b16 %v915
      %v986 = vunpack.c.l.b16 %v916
      %v987 = vunpack.c.l.b16 %v917
      %v988 = vunpack.c.h.b16 %v917
      %v989 = vunpack.c.l.b16 %v918
      %v990 = vunpack.c.l.b16 %v919
      %v991 = vunpack.c.h.b16 %v919
      %v992 = vunpack.c.l.b16 %v920
      %v993 = vunpack.c.l.b16 %v921
      %v994 = vunpack.c.h.b16 %v921
      %v995 = vunpack.c.l.b16 %v922
      %v996 = vunpack.c.l.b16 %v923
      %v997 = vunpack.c.h.b16 %v923
      %v998 = vunpack.c.l.b16 %v924
      %v999 = vunpack.c.l.b16 %v925
      %v1000 = vunpack.c.h.b16 %v925
      %v1001 = vunpack.c.l.b16 %v926
      %v1002 = vunpack.c.l.b16 %v927
      %v1003 = vunpack.c.h.b16 %v927
      %v1004 = vunpack.c.l.b16 %v928
      %v1005 = vunpack.c.l.b16 %v929
      %v1006 = vunpack.c.h.b16 %v929
      %v1007 = vunpack.c.l.b16 %v930
      %v1008 = vunpack.c.l.b16 %v931
      %v1009 = vunpack.c.h.b16 %v931
      %v1010 = vunpack.c.l.b16 %v932
      %v1011 = vunpack.c.l.b16 %v933
      %v1012 = vunpack.c.h.b16 %v933
      %v1013 = vunpack.c.l.b16 %v934
      %v1014 = vunpack.c.l.b16 %v935
      %v1015 = vunpack.c.h.b16 %v935
      %v1016 = vunpack.c.l.b16 %v936
      %v1017 = vpack.c.b16 %v972, %v969
      %v1018 = vpack.c.b16 %v973, %v970
      %v1019 = vpack.c.b16 %v974, %v971
      %v1020 = vpack.c.b16 %v978, %v975
      %v1021 = vpack.c.b16 %v979, %v976
      %v1022 = vpack.c.b16 %v980, %v977
      %v1023 = vpack.c.b16 %v984, %v981
      %v1024 = vpack.c.b16 %v985, %v982
      %v1025 = vpack.c.b16 %v986, %v983
      %v1026 = vpack.c.b16 %v990, %v987
      %v1027 = vpack.c.b16 %v991, %v988
      %v1028 = vpack.c.b16 %v992, %v989
      %v1029 = vpack.c.b16 %v996, %v993
      %v1030 = vpack.c.b16 %v997, %v994
      %v1031 = vpack.c.b16 %v998, %v995
      %v1032 = vpack.c.b16 %v1002, %v999
      %v1033 = vpack.c.b16 %v1003, %v1000
      %v1034 = vpack.c.b16 %v1004, %v1001
      %v1035 = vpack.c.b16 %v1008, %v1005
      %v1036 = vpack.c.b16 %v1009, %v1006
      %v1037 = vpack.c.b16 %v1010, %v1007
      %v1038 = vpack.c.b16 %v1014, %v1011
      %v1039 = vpack.c.b16 %v1015, %v1012
      %v1040 = vpack.c.b16 %v1016, %v1013
      %1065 = vmatprep.subr.bf16.mxu0 %v1039
      %1066 = vmatpush1.bf16.msra.mxu0 %v1038
      %1067 = vmatprep.subr.bf16.mxu0 %v1036
      %1068 = vmatpush1.bf16.msra.mxu0 %v1035
      %1069 = vmatprep.subr.bf16.mxu0 %v1033
      %1070 = vmatpush1.bf16.msra.mxu0 %v1032
      %1071 = vmatprep.subr.bf16.mxu0 %v1030
      %1072 = vmatpush1.bf16.msra.mxu0 %v1029
      %1073 = vmatprep.subr.bf16.mxu0 %v1027
      %1074 = vmatpush1.bf16.msra.mxu0 %v1026
      %1075 = vmatprep.subr.bf16.mxu0 %v1024
      %1076 = vmatpush1.bf16.msra.mxu0 %v1023
      %1077 = vmatprep.subr.bf16.mxu0 %v1021
      %1078 = vmatpush1.bf16.msra.mxu0 %v1020
      %1079 = vmatprep.subr.bf16.mxu0 %v1018
      %1080 = vmatpush1.bf16.msra.mxu0 %v1017
      %1081 = vmatprep.subr.bf16.mxu0 0
      %1082 = vmatpush2.bf16.msra.mxu0 0
      %1083 = vmatprep.subr.bf16.mxu0 0
      %1084 = vmatpush2.bf16.msra.mxu0 0
      %1085 = vmatprep.subr.bf16.mxu0 0
      %1086 = vmatpush2.bf16.msra.mxu0 0
      %1087 = vmatprep.subr.bf16.mxu0 0
      %1088 = vmatpush2.bf16.msra.mxu0 0
      %1089 = vmatprep.subr.bf16.mxu0 0
      %1090 = vmatpush2.bf16.msra.mxu0 0
      %1091 = vmatprep.subr.bf16.mxu0 0
      %1092 = vmatpush2.bf16.msra.mxu0 0
      %1093 = vmatprep.subr.bf16.mxu0 0
      %1094 = vmatpush2.bf16.msra.mxu0 0
      %1095 = vmatprep.subr.bf16.mxu0 0
      %1096 = vmatpush2.bf16.msra.mxu0 0
      %1097 = vmatprep.mubr.bf16.mxu0 0
      %1098 = vmatmul.mubr.bf16.gmra.mxu0 %v904
      %v1099 = vpop.f32.mrf.mxu0
      %v1100 = vadd.f32 %v376, %v1099
      %v1101 = vpop.f32.mrf.mxu0
      %v1102 = vadd.f32 %v380, %v1101
      %v1103 = vpop.f32.mrf.mxu0
      %v1104 = vpop.f32.mrf.mxu0
      %1105 = vdwg.mxu0
      %1106 = vmatprep.subr.bf16.mxu0 0
      %1107 = vmatpush1.bf16.msra.mxu0 %v1040
      %1108 = vmatprep.subr.bf16.mxu0 0
      %1109 = vmatpush1.bf16.msra.mxu0 %v1037
      %1110 = vmatprep.subr.bf16.mxu0 0
      %1111 = vmatpush1.bf16.msra.mxu0 %v1034
      %1112 = vmatprep.subr.bf16.mxu0 0
      %1113 = vmatpush1.bf16.msra.mxu0 %v1031
      %1114 = vmatprep.subr.bf16.mxu0 0
      %1115 = vmatpush1.bf16.msra.mxu0 %v1028
      %1116 = vmatprep.subr.bf16.mxu0 0
      %1117 = vmatpush1.bf16.msra.mxu0 %v1025
      %1118 = vmatprep.subr.bf16.mxu0 0
      %1119 = vmatpush1.bf16.msra.mxu0 %v1022
      %1120 = vmatprep.subr.bf16.mxu0 0
      %1121 = vmatpush1.bf16.msra.mxu0 %v1019
      %1122 = vmatprep.subr.bf16.mxu0 0
      %1123 = vmatpush2.bf16.msra.mxu0 0
      %1124 = vmatprep.subr.bf16.mxu0 0
      %1125 = vmatpush2.bf16.msra.mxu0 0
      %1126 = vmatprep.subr.bf16.mxu0 0
      %1127 = vmatpush2.bf16.msra.mxu0 0
      %1128 = vmatprep.subr.bf16.mxu0 0
      %1129 = vmatpush2.bf16.msra.mxu0 0
      %1130 = vmatprep.subr.bf16.mxu0 0
      %1131 = vmatpush2.bf16.msra.mxu0 0
      %1132 = vmatprep.subr.bf16.mxu0 0
      %1133 = vmatpush2.bf16.msra.mxu0 0
      %1134 = vmatprep.subr.bf16.mxu0 0
      %1135 = vmatpush2.bf16.msra.mxu0 0
      %1136 = vmatprep.subr.bf16.mxu0 0
      %1137 = vmatpush2.bf16.msra.mxu0 0
      %1138 = vmatprep.mubr.bf16.mxu0 0
      %1139 = vmatmul.mubr.bf16.gmra.mxu0 %v904
      %v1140 = vpop.f32.mrf.mxu0
      %v1141 = vadd.f32 %v384, %v1140
      %v1142 = vpop.f32.mrf.mxu0
      %v1143 = vpop.f32.mrf.mxu0
      %v1144 = vpop.f32.mrf.mxu0
      %1145 = vdwg.mxu0
      %v1146 = vadd.f32 %v1100, %v835
      %v1147 = vxor.u32 %v1146, 2147483648
      %v1148 = vmul.f32 %v1147, 1.442695
      %v1149 = vpow.pop %v1148
      %v1150 = vadd.f32 %v1149, 1.0
      %v1151 = vrcp.pop %v1150
      %v1152 = vmul.f32 1.0, %v1151
      %v1153 = vadd.f32 %v1102, %v837
      %v1154 = vxor.u32 %v1153, 2147483648
      %v1155 = vmul.f32 %v1154, 1.442695
      %v1156 = vpow.pop %v1155
      %v1157 = vadd.f32 %v1156, 1.0
      %v1158 = vrcp.pop %v1157
      %v1159 = vmul.f32 1.0, %v1158
      %v1160 = vadd.f32 %v876, %v369
      %v1161 = vmul.f32 %v1152, %v1160
      %v1162 = vadd.f32 %v1141, %v1161
      %v1163 = vtanh.pop %v1162
      %v1164 = vsub.f32 1.0, %v1159
      %v1165 = vmul.f32 %v1164, %v1163
      %v1166 = vmul.f32 %v1159, %v395
      %v1167 = vadd.f32 %v1165, %v1166
      %1168 = vst [vmem:[%s394] sm:$0xff] %v1167
      %v1169 = vpack.c.bf16 %v1167, %v1167
      %1170 = vst [vmem:[%s341] sm:$0xf] %v1169
      %s1171 = scalar_lea.vmem %s328, 12
      %v1172 = vld [vmem:[%s1171] sm:$0xff]
      %v1173 = vld [vmem:[%s1171 + $0x8] sm:$0xf]
      %v1174 = vunpack.c.l.bf16 %v1172
      %v1175 = vunpack.c.h.bf16 %v1172
      %v1176 = vunpack.c.l.bf16 %v1173
      %v1177 = vld [vmem:[#allocation2] sm:$0xff]
      %v1178 = vld [vmem:[%s394] sm:$0xff]
      %v1179 = vpack.c.bf16 %v1177, %v1177
      %v1180 = vld [vmem:[%s2] sm:$0xff]
      %v1181 = vld [vmem:[%s2 + $0x8] sm:$0xf]
      %v1182 = vld [vmem:[%s2 + $0xc] sm:$0xff]
      %v1183 = vld [vmem:[%s2 + $0x14] sm:$0xf]
      %v1184 = vld [vmem:[%s2 + $0x18] sm:$0xff]
      %v1185 = vld [vmem:[%s2 + $0x20] sm:$0xf]
      %v1186 = vld [vmem:[%s2 + $0x24] sm:$0xff]
      %v1187 = vld [vmem:[%s2 + $0x2c] sm:$0xf]
      %v1188 = vld [vmem:[%s2 + $0x30] sm:$0xff]
      %v1189 = vld [vmem:[%s2 + $0x38] sm:$0xf]
      %v1190 = vld [vmem:[%s2 + $0x3c] sm:$0xff]
      %v1191 = vld [vmem:[%s2 + $0x44] sm:$0xf]
      %v1192 = vld [vmem:[%s2 + $0x48] sm:$0xff]
      %v1193 = vld [vmem:[%s2 + $0x50] sm:$0xf]
      %v1194 = vld [vmem:[%s2 + $0x54] sm:$0xff]
      %v1195 = vld [vmem:[%s2 + $0x5c] sm:$0xf]
      %v1196 = vld [vmem:[%s2 + $0x60] sm:$0xff]
      %v1197 = vld [vmem:[%s2 + $0x68] sm:$0xf]
      %v1198 = vld [vmem:[%s2 + $0x6c] sm:$0xff]
      %v1199 = vld [vmem:[%s2 + $0x74] sm:$0xf]
      %v1200 = vld [vmem:[%s2 + $0x78] sm:$0xff]
      %v1201 = vld [vmem:[%s2 + $0x80] sm:$0xf]
      %v1202 = vld [vmem:[%s2 + $0x84] sm:$0xff]
      %v1203 = vld [vmem:[%s2 + $0x8c] sm:$0xf]
      %v1204 = vld [vmem:[%s2 + $0x90] sm:$0xff]
      %v1205 = vld [vmem:[%s2 + $0x98] sm:$0xf]
      %v1206 = vld [vmem:[%s2 + $0x9c] sm:$0xff]
      %v1207 = vld [vmem:[%s2 + $0xa4] sm:$0xf]
      %v1208 = vld [vmem:[%s2 + $0xa8] sm:$0xff]
      %v1209 = vld [vmem:[%s2 + $0xb0] sm:$0xf]
      %v1210 = vld [vmem:[%s2 + $0xb4] sm:$0xff]
      %v1211 = vld [vmem:[%s2 + $0xbc] sm:$0xf]
      %v1244 = vunpack.c.l.b16 %v1180
      %v1245 = vunpack.c.h.b16 %v1180
      %v1246 = vunpack.c.l.b16 %v1181
      %v1247 = vunpack.c.l.b16 %v1182
      %v1248 = vunpack.c.h.b16 %v1182
      %v1249 = vunpack.c.l.b16 %v1183
      %v1250 = vunpack.c.l.b16 %v1184
      %v1251 = vunpack.c.h.b16 %v1184
      %v1252 = vunpack.c.l.b16 %v1185
      %v1253 = vunpack.c.l.b16 %v1186
      %v1254 = vunpack.c.h.b16 %v1186
      %v1255 = vunpack.c.l.b16 %v1187
      %v1256 = vunpack.c.l.b16 %v1188
      %v1257 = vunpack.c.h.b16 %v1188
      %v1258 = vunpack.c.l.b16 %v1189
      %v1259 = vunpack.c.l.b16 %v1190
      %v1260 = vunpack.c.h.b16 %v1190
      %v1261 = vunpack.c.l.b16 %v1191
      %v1262 = vunpack.c.l.b16 %v1192
      %v1263 = vunpack.c.h.b16 %v1192
      %v1264 = vunpack.c.l.b16 %v1193
      %v1265 = vunpack.c.l.b16 %v1194
      %v1266 = vunpack.c.h.b16 %v1194
      %v1267 = vunpack.c.l.b16 %v1195
      %v1268 = vunpack.c.l.b16 %v1196
      %v1269 = vunpack.c.h.b16 %v1196
      %v1270 = vunpack.c.l.b16 %v1197
      %v1271 = vunpack.c.l.b16 %v1198
      %v1272 = vunpack.c.h.b16 %v1198
      %v1273 = vunpack.c.l.b16 %v1199
      %v1274 = vunpack.c.l.b16 %v1200
      %v1275 = vunpack.c.h.b16 %v1200
      %v1276 = vunpack.c.l.b16 %v1201
      %v1277 = vunpack.c.l.b16 %v1202
      %v1278 = vunpack.c.h.b16 %v1202
      %v1279 = vunpack.c.l.b16 %v1203
      %v1280 = vunpack.c.l.b16 %v1204
      %v1281 = vunpack.c.h.b16 %v1204
      %v1282 = vunpack.c.l.b16 %v1205
      %v1283 = vunpack.c.l.b16 %v1206
      %v1284 = vunpack.c.h.b16 %v1206
      %v1285 = vunpack.c.l.b16 %v1207
      %v1286 = vunpack.c.l.b16 %v1208
      %v1287 = vunpack.c.h.b16 %v1208
      %v1288 = vunpack.c.l.b16 %v1209
      %v1289 = vunpack.c.l.b16 %v1210
      %v1290 = vunpack.c.h.b16 %v1210
      %v1291 = vunpack.c.l.b16 %v1211
      %v1292 = vpack.c.b16 %v1247, %v1244
      %v1293 = vpack.c.b16 %v1248, %v1245
      %v1294 = vpack.c.b16 %v1249, %v1246
      %v1295 = vpack.c.b16 %v1253, %v1250
      %v1296 = vpack.c.b16 %v1254, %v1251
      %v1297 = vpack.c.b16 %v1255, %v1252
      %v1298 = vpack.c.b16 %v1259, %v1256
      %v1299 = vpack.c.b16 %v1260, %v1257
      %v1300 = vpack.c.b16 %v1261, %v1258
      %v1301 = vpack.c.b16 %v1265, %v1262
      %v1302 = vpack.c.b16 %v1266, %v1263
      %v1303 = vpack.c.b16 %v1267, %v1264
      %v1304 = vpack.c.b16 %v1271, %v1268
      %v1305 = vpack.c.b16 %v1272, %v1269
      %v1306 = vpack.c.b16 %v1273, %v1270
      %v1307 = vpack.c.b16 %v1277, %v1274
      %v1308 = vpack.c.b16 %v1278, %v1275
      %v1309 = vpack.c.b16 %v1279, %v1276
      %v1310 = vpack.c.b16 %v1283, %v1280
      %v1311 = vpack.c.b16 %v1284, %v1281
      %v1312 = vpack.c.b16 %v1285, %v1282
      %v1313 = vpack.c.b16 %v1289, %v1286
      %v1314 = vpack.c.b16 %v1290, %v1287
      %v1315 = vpack.c.b16 %v1291, %v1288
      %1340 = vmatprep.subr.bf16.mxu0 %v1314
      %1341 = vmatpush1.bf16.msra.mxu0 %v1313
      %1342 = vmatprep.subr.bf16.mxu0 %v1311
      %1343 = vmatpush1.bf16.msra.mxu0 %v1310
      %1344 = vmatprep.subr.bf16.mxu0 %v1308
      %1345 = vmatpush1.bf16.msra.mxu0 %v1307
      %1346 = vmatprep.subr.bf16.mxu0 %v1305
      %1347 = vmatpush1.bf16.msra.mxu0 %v1304
      %1348 = vmatprep.subr.bf16.mxu0 %v1302
      %1349 = vmatpush1.bf16.msra.mxu0 %v1301
      %1350 = vmatprep.subr.bf16.mxu0 %v1299
      %1351 = vmatpush1.bf16.msra.mxu0 %v1298
      %1352 = vmatprep.subr.bf16.mxu0 %v1296
      %1353 = vmatpush1.bf16.msra.mxu0 %v1295
      %1354 = vmatprep.subr.bf16.mxu0 %v1293
      %1355 = vmatpush1.bf16.msra.mxu0 %v1292
      %1356 = vmatprep.subr.bf16.mxu0 0
      %1357 = vmatpush2.bf16.msra.mxu0 0
      %1358 = vmatprep.subr.bf16.mxu0 0
      %1359 = vmatpush2.bf16.msra.mxu0 0
      %1360 = vmatprep.subr.bf16.mxu0 0
      %1361 = vmatpush2.bf16.msra.mxu0 0
      %1362 = vmatprep.subr.bf16.mxu0 0
      %1363 = vmatpush2.bf16.msra.mxu0 0
      %1364 = vmatprep.subr.bf16.mxu0 0
      %1365 = vmatpush2.bf16.msra.mxu0 0
      %1366 = vmatprep.subr.bf16.mxu0 0
      %1367 = vmatpush2.bf16.msra.mxu0 0
      %1368 = vmatprep.subr.bf16.mxu0 0
      %1369 = vmatpush2.bf16.msra.mxu0 0
      %1370 = vmatprep.subr.bf16.mxu0 0
      %1371 = vmatpush2.bf16.msra.mxu0 0
      %1372 = vmatprep.mubr.bf16.mxu0 0
      %1373 = vmatmul.mubr.bf16.gmra.mxu0 %v1179
      %v1374 = vpop.f32.mrf.mxu0
      %v1375 = vadd.f32 0.0, %v1374
      %v1376 = vpop.f32.mrf.mxu0
      %v1377 = vadd.f32 0.0, %v1376
      %v1378 = vpop.f32.mrf.mxu0
      %v1379 = vpop.f32.mrf.mxu0
      %1380 = vdwg.mxu0
      %1381 = vmatprep.subr.bf16.mxu0 0
      %1382 = vmatpush1.bf16.msra.mxu0 %v1315
      %1383 = vmatprep.subr.bf16.mxu0 0
      %1384 = vmatpush1.bf16.msra.mxu0 %v1312
      %1385 = vmatprep.subr.bf16.mxu0 0
      %1386 = vmatpush1.bf16.msra.mxu0 %v1309
      %1387 = vmatprep.subr.bf16.mxu0 0
      %1388 = vmatpush1.bf16.msra.mxu0 %v1306
      %1389 = vmatprep.subr.bf16.mxu0 0
      %1390 = vmatpush1.bf16.msra.mxu0 %v1303
      %1391 = vmatprep.subr.bf16.mxu0 0
      %1392 = vmatpush1.bf16.msra.mxu0 %v1300
      %1393 = vmatprep.subr.bf16.mxu0 0
      %1394 = vmatpush1.bf16.msra.mxu0 %v1297
      %1395 = vmatprep.subr.bf16.mxu0 0
      %1396 = vmatpush1.bf16.msra.mxu0 %v1294
      %1397 = vmatprep.subr.bf16.mxu0 0
      %1398 = vmatpush2.bf16.msra.mxu0 0
      %1399 = vmatprep.subr.bf16.mxu0 0
      %1400 = vmatpush2.bf16.msra.mxu0 0
      %1401 = vmatprep.subr.bf16.mxu0 0
      %1402 = vmatpush2.bf16.msra.mxu0 0
      %1403 = vmatprep.subr.bf16.mxu0 0
      %1404 = vmatpush2.bf16.msra.mxu0 0
      %1405 = vmatprep.subr.bf16.mxu0 0
      %1406 = vmatpush2.bf16.msra.mxu0 0
      %1407 = vmatprep.subr.bf16.mxu0 0
      %1408 = vmatpush2.bf16.msra.mxu0 0
      %1409 = vmatprep.subr.bf16.mxu0 0
      %1410 = vmatpush2.bf16.msra.mxu0 0
      %1411 = vmatprep.subr.bf16.mxu0 0
      %1412 = vmatpush2.bf16.msra.mxu0 0
      %1413 = vmatprep.mubr.bf16.mxu0 0
      %1414 = vmatmul.mubr.bf16.gmra.mxu0 %v1179
      %v1415 = vpop.f32.mrf.mxu0
      %v1416 = vadd.f32 0.0, %v1415
      %v1417 = vpop.f32.mrf.mxu0
      %v1418 = vpop.f32.mrf.mxu0
      %v1419 = vpop.f32.mrf.mxu0
      %1420 = vdwg.mxu0
      %v1421 = vpack.c.bf16 %v1178, %v1178
      %v1422 = vld [vmem:[%s639] sm:$0xff]
      %v1423 = vld [vmem:[%s639 + $0x8] sm:$0xf]
      %v1424 = vld [vmem:[%s639 + $0xc] sm:$0xff]
      %v1425 = vld [vmem:[%s639 + $0x14] sm:$0xf]
      %v1426 = vld [vmem:[%s639 + $0x18] sm:$0xff]
      %v1427 = vld [vmem:[%s639 + $0x20] sm:$0xf]
      %v1428 = vld [vmem:[%s639 + $0x24] sm:$0xff]
      %v1429 = vld [vmem:[%s639 + $0x2c] sm:$0xf]
      %v1430 = vld [vmem:[%s639 + $0x30] sm:$0xff]
      %v1431 = vld [vmem:[%s639 + $0x38] sm:$0xf]
      %v1432 = vld [vmem:[%s639 + $0x3c] sm:$0xff]
      %v1433 = vld [vmem:[%s639 + $0x44] sm:$0xf]
      %v1434 = vld [vmem:[%s639 + $0x48] sm:$0xff]
      %v1435 = vld [vmem:[%s639 + $0x50] sm:$0xf]
      %v1436 = vld [vmem:[%s639 + $0x54] sm:$0xff]
      %v1437 = vld [vmem:[%s639 + $0x5c] sm:$0xf]
      %v1438 = vld [vmem:[%s639 + $0x60] sm:$0xff]
      %v1439 = vld [vmem:[%s639 + $0x68] sm:$0xf]
      %v1440 = vld [vmem:[%s639 + $0x6c] sm:$0xff]
      %v1441 = vld [vmem:[%s639 + $0x74] sm:$0xf]
      %v1442 = vld [vmem:[%s639 + $0x78] sm:$0xff]
      %v1443 = vld [vmem:[%s639 + $0x80] sm:$0xf]
      %v1444 = vld [vmem:[%s639 + $0x84] sm:$0xff]
      %v1445 = vld [vmem:[%s639 + $0x8c] sm:$0xf]
      %v1446 = vld [vmem:[%s639 + $0x90] sm:$0xff]
      %v1447 = vld [vmem:[%s639 + $0x98] sm:$0xf]
      %v1448 = vld [vmem:[%s639 + $0x9c] sm:$0xff]
      %v1449 = vld [vmem:[%s639 + $0xa4] sm:$0xf]
      %v1450 = vld [vmem:[%s639 + $0xa8] sm:$0xff]
      %v1451 = vld [vmem:[%s639 + $0xb0] sm:$0xf]
      %v1452 = vld [vmem:[%s639 + $0xb4] sm:$0xff]
      %v1453 = vld [vmem:[%s639 + $0xbc] sm:$0xf]
      %v1486 = vunpack.c.l.b16 %v1422
      %v1487 = vunpack.c.h.b16 %v1422
      %v1488 = vunpack.c.l.b16 %v1423
      %v1489 = vunpack.c.l.b16 %v1424
      %v1490 = vunpack.c.h.b16 %v1424
      %v1491 = vunpack.c.l.b16 %v1425
      %v1492 = vunpack.c.l.b16 %v1426
      %v1493 = vunpack.c.h.b16 %v1426
      %v1494 = vunpack.c.l.b16 %v1427
      %v1495 = vunpack.c.l.b16 %v1428
      %v1496 = vunpack.c.h.b16 %v1428
      %v1497 = vunpack.c.l.b16 %v1429
      %v1498 = vunpack.c.l.b16 %v1430
      %v1499 = vunpack.c.h.b16 %v1430
      %v1500 = vunpack.c.l.b16 %v1431
      %v1501 = vunpack.c.l.b16 %v1432
      %v1502 = vunpack.c.h.b16 %v1432
      %v1503 = vunpack.c.l.b16 %v1433
      %v1504 = vunpack.c.l.b16 %v1434
      %v1505 = vunpack.c.h.b16 %v1434
      %v1506 = vunpack.c.l.b16 %v1435
      %v1507 = vunpack.c.l.b16 %v1436
      %v1508 = vunpack.c.h.b16 %v1436
      %v1509 = vunpack.c.l.b16 %v1437
      %v1510 = vunpack.c.l.b16 %v1438
      %v1511 = vunpack.c.h.b16 %v1438
      %v1512 = vunpack.c.l.b16 %v1439
      %v1513 = vunpack.c.l.b16 %v1440
      %v1514 = vunpack.c.h.b16 %v1440
      %v1515 = vunpack.c.l.b16 %v1441
      %v1516 = vunpack.c.l.b16 %v1442
      %v1517 = vunpack.c.h.b16 %v1442
      %v1518 = vunpack.c.l.b16 %v1443
      %v1519 = vunpack.c.l.b16 %v1444
      %v1520 = vunpack.c.h.b16 %v1444
      %v1521 = vunpack.c.l.b16 %v1445
      %v1522 = vunpack.c.l.b16 %v1446
      %v1523 = vunpack.c.h.b16 %v1446
      %v1524 = vunpack.c.l.b16 %v1447
      %v1525 = vunpack.c.l.b16 %v1448
      %v1526 = vunpack.c.h.b16 %v1448
      %v1527 = vunpack.c.l.b16 %v1449
      %v1528 = vunpack.c.l.b16 %v1450
      %v1529 = vunpack.c.h.b16 %v1450
      %v1530 = vunpack.c.l.b16 %v1451
      %v1531 = vunpack.c.l.b16 %v1452
      %v1532 = vunpack.c.h.b16 %v1452
      %v1533 = vunpack.c.l.b16 %v1453
      %v1534 = vpack.c.b16 %v1489, %v1486
      %v1535 = vpack.c.b16 %v1490, %v1487
      %v1536 = vpack.c.b16 %v1491, %v1488
      %v1537 = vpack.c.b16 %v1495, %v1492
      %v1538 = vpack.c.b16 %v1496, %v1493
      %v1539 = vpack.c.b16 %v1497, %v1494
      %v1540 = vpack.c.b16 %v1501, %v1498
      %v1541 = vpack.c.b16 %v1502, %v1499
      %v1542 = vpack.c.b16 %v1503, %v1500
      %v1543 = vpack.c.b16 %v1507, %v1504
      %v1544 = vpack.c.b16 %v1508, %v1505
      %v1545 = vpack.c.b16 %v1509, %v1506
      %v1546 = vpack.c.b16 %v1513, %v1510
      %v1547 = vpack.c.b16 %v1514, %v1511
      %v1548 = vpack.c.b16 %v1515, %v1512
      %v1549 = vpack.c.b16 %v1519, %v1516
      %v1550 = vpack.c.b16 %v1520, %v1517
      %v1551 = vpack.c.b16 %v1521, %v1518
      %v1552 = vpack.c.b16 %v1525, %v1522
      %v1553 = vpack.c.b16 %v1526, %v1523
      %v1554 = vpack.c.b16 %v1527, %v1524
      %v1555 = vpack.c.b16 %v1531, %v1528
      %v1556 = vpack.c.b16 %v1532, %v1529
      %v1557 = vpack.c.b16 %v1533, %v1530
      %1582 = vmatprep.subr.bf16.mxu0 %v1556
      %1583 = vmatpush1.bf16.msra.mxu0 %v1555
      %1584 = vmatprep.subr.bf16.mxu0 %v1553
      %1585 = vmatpush1.bf16.msra.mxu0 %v1552
      %1586 = vmatprep.subr.bf16.mxu0 %v1550
      %1587 = vmatpush1.bf16.msra.mxu0 %v1549
      %1588 = vmatprep.subr.bf16.mxu0 %v1547
      %1589 = vmatpush1.bf16.msra.mxu0 %v1546
      %1590 = vmatprep.subr.bf16.mxu0 %v1544
      %1591 = vmatpush1.bf16.msra.mxu0 %v1543
      %1592 = vmatprep.subr.bf16.mxu0 %v1541
      %1593 = vmatpush1.bf16.msra.mxu0 %v1540
      %1594 = vmatprep.subr.bf16.mxu0 %v1538
      %1595 = vmatpush1.bf16.msra.mxu0 %v1537
      %1596 = vmatprep.subr.bf16.mxu0 %v1535
      %1597 = vmatpush1.bf16.msra.mxu0 %v1534
      %1598 = vmatprep.subr.bf16.mxu0 0
      %1599 = vmatpush2.bf16.msra.mxu0 0
      %1600 = vmatprep.subr.bf16.mxu0 0
      %1601 = vmatpush2.bf16.msra.mxu0 0
      %1602 = vmatprep.subr.bf16.mxu0 0
      %1603 = vmatpush2.bf16.msra.mxu0 0
      %1604 = vmatprep.subr.bf16.mxu0 0
      %1605 = vmatpush2.bf16.msra.mxu0 0
      %1606 = vmatprep.subr.bf16.mxu0 0
      %1607 = vmatpush2.bf16.msra.mxu0 0
      %1608 = vmatprep.subr.bf16.mxu0 0
      %1609 = vmatpush2.bf16.msra.mxu0 0
      %1610 = vmatprep.subr.bf16.mxu0 0
      %1611 = vmatpush2.bf16.msra.mxu0 0
      %1612 = vmatprep.subr.bf16.mxu0 0
      %1613 = vmatpush2.bf16.msra.mxu0 0
      %1614 = vmatprep.mubr.bf16.mxu0 0
      %1615 = vmatmul.mubr.bf16.gmra.mxu0 %v1421
      %v1616 = vpop.f32.mrf.mxu0
      %v1617 = vadd.f32 0.0, %v1616
      %v1618 = vpop.f32.mrf.mxu0
      %v1619 = vadd.f32 0.0, %v1618
      %v1620 = vpop.f32.mrf.mxu0
      %v1621 = vpop.f32.mrf.mxu0
      %1622 = vdwg.mxu0
      %1623 = vmatprep.subr.bf16.mxu0 0
      %1624 = vmatpush1.bf16.msra.mxu0 %v1557
      %1625 = vmatprep.subr.bf16.mxu0 0
      %1626 = vmatpush1.bf16.msra.mxu0 %v1554
      %1627 = vmatprep.subr.bf16.mxu0 0
      %1628 = vmatpush1.bf16.msra.mxu0 %v1551
      %1629 = vmatprep.subr.bf16.mxu0 0
      %1630 = vmatpush1.bf16.msra.mxu0 %v1548
      %1631 = vmatprep.subr.bf16.mxu0 0
      %1632 = vmatpush1.bf16.msra.mxu0 %v1545
      %1633 = vmatprep.subr.bf16.mxu0 0
      %1634 = vmatpush1.bf16.msra.mxu0 %v1542
      %1635 = vmatprep.subr.bf16.mxu0 0
      %1636 = vmatpush1.bf16.msra.mxu0 %v1539
      %1637 = vmatprep.subr.bf16.mxu0 0
      %1638 = vmatpush1.bf16.msra.mxu0 %v1536
      %1639 = vmatprep.subr.bf16.mxu0 0
      %1640 = vmatpush2.bf16.msra.mxu0 0
      %1641 = vmatprep.subr.bf16.mxu0 0
      %1642 = vmatpush2.bf16.msra.mxu0 0
      %1643 = vmatprep.subr.bf16.mxu0 0
      %1644 = vmatpush2.bf16.msra.mxu0 0
      %1645 = vmatprep.subr.bf16.mxu0 0
      %1646 = vmatpush2.bf16.msra.mxu0 0
      %1647 = vmatprep.subr.bf16.mxu0 0
      %1648 = vmatpush2.bf16.msra.mxu0 0
      %1649 = vmatprep.subr.bf16.mxu0 0
      %1650 = vmatpush2.bf16.msra.mxu0 0
      %1651 = vmatprep.subr.bf16.mxu0 0
      %1652 = vmatpush2.bf16.msra.mxu0 0
      %1653 = vmatprep.subr.bf16.mxu0 0
      %1654 = vmatpush2.bf16.msra.mxu0 0
      %1655 = vmatprep.mubr.bf16.mxu0 0
      %1656 = vmatmul.mubr.bf16.gmra.mxu0 %v1421
      %v1657 = vpop.f32.mrf.mxu0
      %v1658 = vadd.f32 0.0, %v1657
      %v1659 = vpop.f32.mrf.mxu0
      %v1660 = vpop.f32.mrf.mxu0
      %v1661 = vpop.f32.mrf.mxu0
      %1662 = vdwg.mxu0
      %v1663 = vadd.f32 %v1174, %v1375
      %v1664 = vxor.u32 %v1663, 2147483648
      %v1665 = vmul.f32 %v1664, 1.442695
      %v1666 = vpow.pop %v1665
      %v1667 = vadd.f32 %v1666, 1.0
      %v1668 = vrcp.pop %v1667
      %v1669 = vmul.f32 1.0, %v1668
      %v1670 = vadd.f32 %v1175, %v1377
      %v1671 = vxor.u32 %v1670, 2147483648
      %v1672 = vmul.f32 %v1671, 1.442695
      %v1673 = vpow.pop %v1672
      %v1674 = vadd.f32 %v1673, 1.0
      %v1675 = vrcp.pop %v1674
      %v1676 = vmul.f32 1.0, %v1675
      %v1677 = vadd.f32 %v1416, %v361
      %v1678 = vmul.f32 %v1669, %v1677
      %v1679 = vadd.f32 %v1176, %v1678
      %v1680 = vtanh.pop %v1679
      %v1681 = vsub.f32 1.0, %v1676
      %v1682 = vmul.f32 %v1681, %v1680
      %v1683 = vmul.f32 %v1676, %v1177
      %v1684 = vadd.f32 %v1682, %v1683
      %1685 = vst [vmem:[#allocation2] sm:$0xff] %v1684
      %v1686 = vpack.c.bf16 %v1684, %v1684
      %v1687 = vld [vmem:[%s3] sm:$0xff]
      %v1688 = vld [vmem:[%s3 + $0x8] sm:$0xf]
      %v1689 = vld [vmem:[%s3 + $0xc] sm:$0xff]
      %v1690 = vld [vmem:[%s3 + $0x14] sm:$0xf]
      %v1691 = vld [vmem:[%s3 + $0x18] sm:$0xff]
      %v1692 = vld [vmem:[%s3 + $0x20] sm:$0xf]
      %v1693 = vld [vmem:[%s3 + $0x24] sm:$0xff]
      %v1694 = vld [vmem:[%s3 + $0x2c] sm:$0xf]
      %v1695 = vld [vmem:[%s3 + $0x30] sm:$0xff]
      %v1696 = vld [vmem:[%s3 + $0x38] sm:$0xf]
      %v1697 = vld [vmem:[%s3 + $0x3c] sm:$0xff]
      %v1698 = vld [vmem:[%s3 + $0x44] sm:$0xf]
      %v1699 = vld [vmem:[%s3 + $0x48] sm:$0xff]
      %v1700 = vld [vmem:[%s3 + $0x50] sm:$0xf]
      %v1701 = vld [vmem:[%s3 + $0x54] sm:$0xff]
      %v1702 = vld [vmem:[%s3 + $0x5c] sm:$0xf]
      %v1703 = vld [vmem:[%s3 + $0x60] sm:$0xff]
      %v1704 = vld [vmem:[%s3 + $0x68] sm:$0xf]
      %v1705 = vld [vmem:[%s3 + $0x6c] sm:$0xff]
      %v1706 = vld [vmem:[%s3 + $0x74] sm:$0xf]
      %v1707 = vld [vmem:[%s3 + $0x78] sm:$0xff]
      %v1708 = vld [vmem:[%s3 + $0x80] sm:$0xf]
      %v1709 = vld [vmem:[%s3 + $0x84] sm:$0xff]
      %v1710 = vld [vmem:[%s3 + $0x8c] sm:$0xf]
      %v1711 = vld [vmem:[%s3 + $0x90] sm:$0xff]
      %v1712 = vld [vmem:[%s3 + $0x98] sm:$0xf]
      %v1713 = vld [vmem:[%s3 + $0x9c] sm:$0xff]
      %v1714 = vld [vmem:[%s3 + $0xa4] sm:$0xf]
      %v1715 = vld [vmem:[%s3 + $0xa8] sm:$0xff]
      %v1716 = vld [vmem:[%s3 + $0xb0] sm:$0xf]
      %v1717 = vld [vmem:[%s3 + $0xb4] sm:$0xff]
      %v1718 = vld [vmem:[%s3 + $0xbc] sm:$0xf]
      %v1751 = vunpack.c.l.b16 %v1687
      %v1752 = vunpack.c.h.b16 %v1687
      %v1753 = vunpack.c.l.b16 %v1688
      %v1754 = vunpack.c.l.b16 %v1689
      %v1755 = vunpack.c.h.b16 %v1689
      %v1756 = vunpack.c.l.b16 %v1690
      %v1757 = vunpack.c.l.b16 %v1691
      %v1758 = vunpack.c.h.b16 %v1691
      %v1759 = vunpack.c.l.b16 %v1692
      %v1760 = vunpack.c.l.b16 %v1693
      %v1761 = vunpack.c.h.b16 %v1693
      %v1762 = vunpack.c.l.b16 %v1694
      %v1763 = vunpack.c.l.b16 %v1695
      %v1764 = vunpack.c.h.b16 %v1695
      %v1765 = vunpack.c.l.b16 %v1696
      %v1766 = vunpack.c.l.b16 %v1697
      %v1767 = vunpack.c.h.b16 %v1697
      %v1768 = vunpack.c.l.b16 %v1698
      %v1769 = vunpack.c.l.b16 %v1699
      %v1770 = vunpack.c.h.b16 %v1699
      %v1771 = vunpack.c.l.b16 %v1700
      %v1772 = vunpack.c.l.b16 %v1701
      %v1773 = vunpack.c.h.b16 %v1701
      %v1774 = vunpack.c.l.b16 %v1702
      %v1775 = vunpack.c.l.b16 %v1703
      %v1776 = vunpack.c.h.b16 %v1703
      %v1777 = vunpack.c.l.b16 %v1704
      %v1778 = vunpack.c.l.b16 %v1705
      %v1779 = vunpack.c.h.b16 %v1705
      %v1780 = vunpack.c.l.b16 %v1706
      %v1781 = vunpack.c.l.b16 %v1707
      %v1782 = vunpack.c.h.b16 %v1707
      %v1783 = vunpack.c.l.b16 %v1708
      %v1784 = vunpack.c.l.b16 %v1709
      %v1785 = vunpack.c.h.b16 %v1709
      %v1786 = vunpack.c.l.b16 %v1710
      %v1787 = vunpack.c.l.b16 %v1711
      %v1788 = vunpack.c.h.b16 %v1711
      %v1789 = vunpack.c.l.b16 %v1712
      %v1790 = vunpack.c.l.b16 %v1713
      %v1791 = vunpack.c.h.b16 %v1713
      %v1792 = vunpack.c.l.b16 %v1714
      %v1793 = vunpack.c.l.b16 %v1715
      %v1794 = vunpack.c.h.b16 %v1715
      %v1795 = vunpack.c.l.b16 %v1716
      %v1796 = vunpack.c.l.b16 %v1717
      %v1797 = vunpack.c.h.b16 %v1717
      %v1798 = vunpack.c.l.b16 %v1718
      %v1799 = vpack.c.b16 %v1754, %v1751
      %v1800 = vpack.c.b16 %v1755, %v1752
      %v1801 = vpack.c.b16 %v1756, %v1753
      %v1802 = vpack.c.b16 %v1760, %v1757
      %v1803 = vpack.c.b16 %v1761, %v1758
      %v1804 = vpack.c.b16 %v1762, %v1759
      %v1805 = vpack.c.b16 %v1766, %v1763
      %v1806 = vpack.c.b16 %v1767, %v1764
      %v1807 = vpack.c.b16 %v1768, %v1765
      %v1808 = vpack.c.b16 %v1772, %v1769
      %v1809 = vpack.c.b16 %v1773, %v1770
      %v1810 = vpack.c.b16 %v1774, %v1771
      %v1811 = vpack.c.b16 %v1778, %v1775
      %v1812 = vpack.c.b16 %v1779, %v1776
      %v1813 = vpack.c.b16 %v1780, %v1777
      %v1814 = vpack.c.b16 %v1784, %v1781
      %v1815 = vpack.c.b16 %v1785, %v1782
      %v1816 = vpack.c.b16 %v1786, %v1783
      %v1817 = vpack.c.b16 %v1790, %v1787
      %v1818 = vpack.c.b16 %v1791, %v1788
      %v1819 = vpack.c.b16 %v1792, %v1789
      %v1820 = vpack.c.b16 %v1796, %v1793
      %v1821 = vpack.c.b16 %v1797, %v1794
      %v1822 = vpack.c.b16 %v1798, %v1795
      %1847 = vmatprep.subr.bf16.mxu0 %v1821
      %1848 = vmatpush1.bf16.msra.mxu0 %v1820
      %1849 = vmatprep.subr.bf16.mxu0 %v1818
      %1850 = vmatpush1.bf16.msra.mxu0 %v1817
      %1851 = vmatprep.subr.bf16.mxu0 %v1815
      %1852 = vmatpush1.bf16.msra.mxu0 %v1814
      %1853 = vmatprep.subr.bf16.mxu0 %v1812
      %1854 = vmatpush1.bf16.msra.mxu0 %v1811
      %1855 = vmatprep.subr.bf16.mxu0 %v1809
      %1856 = vmatpush1.bf16.msra.mxu0 %v1808
      %1857 = vmatprep.subr.bf16.mxu0 %v1806
      %1858 = vmatpush1.bf16.msra.mxu0 %v1805
      %1859 = vmatprep.subr.bf16.mxu0 %v1803
      %1860 = vmatpush1.bf16.msra.mxu0 %v1802
      %1861 = vmatprep.subr.bf16.mxu0 %v1800
      %1862 = vmatpush1.bf16.msra.mxu0 %v1799
      %1863 = vmatprep.subr.bf16.mxu0 0
      %1864 = vmatpush2.bf16.msra.mxu0 0
      %1865 = vmatprep.subr.bf16.mxu0 0
      %1866 = vmatpush2.bf16.msra.mxu0 0
      %1867 = vmatprep.subr.bf16.mxu0 0
      %1868 = vmatpush2.bf16.msra.mxu0 0
      %1869 = vmatprep.subr.bf16.mxu0 0
      %1870 = vmatpush2.bf16.msra.mxu0 0
      %1871 = vmatprep.subr.bf16.mxu0 0
      %1872 = vmatpush2.bf16.msra.mxu0 0
      %1873 = vmatprep.subr.bf16.mxu0 0
      %1874 = vmatpush2.bf16.msra.mxu0 0
      %1875 = vmatprep.subr.bf16.mxu0 0
      %1876 = vmatpush2.bf16.msra.mxu0 0
      %1877 = vmatprep.subr.bf16.mxu0 0
      %1878 = vmatpush2.bf16.msra.mxu0 0
      %1879 = vmatprep.mubr.bf16.mxu0 0
      %1880 = vmatmul.mubr.bf16.gmra.mxu0 %v1686
      %v1881 = vpop.f32.mrf.mxu0
      %v1882 = vadd.f32 %v376, %v1881
      %v1883 = vpop.f32.mrf.mxu0
      %v1884 = vadd.f32 %v380, %v1883
      %v1885 = vpop.f32.mrf.mxu0
      %v1886 = vpop.f32.mrf.mxu0
      %1887 = vdwg.mxu0
      %1888 = vmatprep.subr.bf16.mxu0 0
      %1889 = vmatpush1.bf16.msra.mxu0 %v1822
      %1890 = vmatprep.subr.bf16.mxu0 0
      %1891 = vmatpush1.bf16.msra.mxu0 %v1819
      %1892 = vmatprep.subr.bf16.mxu0 0
      %1893 = vmatpush1.bf16.msra.mxu0 %v1816
      %1894 = vmatprep.subr.bf16.mxu0 0
      %1895 = vmatpush1.bf16.msra.mxu0 %v1813
      %1896 = vmatprep.subr.bf16.mxu0 0
      %1897 = vmatpush1.bf16.msra.mxu0 %v1810
      %1898 = vmatprep.subr.bf16.mxu0 0
      %1899 = vmatpush1.bf16.msra.mxu0 %v1807
      %1900 = vmatprep.subr.bf16.mxu0 0
      %1901 = vmatpush1.bf16.msra.mxu0 %v1804
      %1902 = vmatprep.subr.bf16.mxu0 0
      %1903 = vmatpush1.bf16.msra.mxu0 %v1801
      %1904 = vmatprep.subr.bf16.mxu0 0
      %1905 = vmatpush2.bf16.msra.mxu0 0
      %1906 = vmatprep.subr.bf16.mxu0 0
      %1907 = vmatpush2.bf16.msra.mxu0 0
      %1908 = vmatprep.subr.bf16.mxu0 0
      %1909 = vmatpush2.bf16.msra.mxu0 0
      %1910 = vmatprep.subr.bf16.mxu0 0
      %1911 = vmatpush2.bf16.msra.mxu0 0
      %1912 = vmatprep.subr.bf16.mxu0 0
      %1913 = vmatpush2.bf16.msra.mxu0 0
      %1914 = vmatprep.subr.bf16.mxu0 0
      %1915 = vmatpush2.bf16.msra.mxu0 0
      %1916 = vmatprep.subr.bf16.mxu0 0
      %1917 = vmatpush2.bf16.msra.mxu0 0
      %1918 = vmatprep.subr.bf16.mxu0 0
      %1919 = vmatpush2.bf16.msra.mxu0 0
      %1920 = vmatprep.mubr.bf16.mxu0 0
      %1921 = vmatmul.mubr.bf16.gmra.mxu0 %v1686
      %v1922 = vpop.f32.mrf.mxu0
      %v1923 = vadd.f32 %v384, %v1922
      %v1924 = vpop.f32.mrf.mxu0
      %v1925 = vpop.f32.mrf.mxu0
      %v1926 = vpop.f32.mrf.mxu0
      %1927 = vdwg.mxu0
      %v1928 = vadd.f32 %v1882, %v1617
      %v1929 = vxor.u32 %v1928, 2147483648
      %v1930 = vmul.f32 %v1929, 1.442695
      %v1931 = vpow.pop %v1930
      %v1932 = vadd.f32 %v1931, 1.0
      %v1933 = vrcp.pop %v1932
      %v1934 = vmul.f32 1.0, %v1933
      %v1935 = vadd.f32 %v1884, %v1619
      %v1936 = vxor.u32 %v1935, 2147483648
      %v1937 = vmul.f32 %v1936, 1.442695
      %v1938 = vpow.pop %v1937
      %v1939 = vadd.f32 %v1938, 1.0
      %v1940 = vrcp.pop %v1939
      %v1941 = vmul.f32 1.0, %v1940
      %v1942 = vadd.f32 %v1658, %v369
      %v1943 = vmul.f32 %v1934, %v1942
      %v1944 = vadd.f32 %v1923, %v1943
      %v1945 = vtanh.pop %v1944
      %v1946 = vsub.f32 1.0, %v1941
      %v1947 = vmul.f32 %v1946, %v1945
      %v1948 = vmul.f32 %v1941, %v1178
      %v1949 = vadd.f32 %v1947, %v1948
      %1950 = vst [vmem:[%s394] sm:$0xff] %v1949
      %v1951 = vpack.c.bf16 %v1949, %v1949
      %s1952 = scalar_lea.vmem %s341, 4
      %1953 = vst [vmem:[%s1952] sm:$0xf] %v1951
      %s1954 = scalar_lea.vmem %s328, 24
      %v1955 = vld [vmem:[%s1954] sm:$0xff]
      %v1956 = vld [vmem:[%s1954 + $0x8] sm:$0xf]
      %v1957 = vunpack.c.l.bf16 %v1955
      %v1958 = vunpack.c.h.bf16 %v1955
      %v1959 = vunpack.c.l.bf16 %v1956
      %v1960 = vld [vmem:[#allocation2] sm:$0xff]
      %v1961 = vld [vmem:[%s394] sm:$0xff]
      %v1962 = vpack.c.bf16 %v1960, %v1960
      %v1963 = vld [vmem:[%s2] sm:$0xff]
      %v1964 = vld [vmem:[%s2 + $0x8] sm:$0xf]
      %v1965 = vld [vmem:[%s2 + $0xc] sm:$0xff]
      %v1966 = vld [vmem:[%s2 + $0x14] sm:$0xf]
      %v1967 = vld [vmem:[%s2 + $0x18] sm:$0xff]
      %v1968 = vld [vmem:[%s2 + $0x20] sm:$0xf]
      %v1969 = vld [vmem:[%s2 + $0x24] sm:$0xff]
      %v1970 = vld [vmem:[%s2 + $0x2c] sm:$0xf]
      %v1971 = vld [vmem:[%s2 + $0x30] sm:$0xff]
      %v1972 = vld [vmem:[%s2 + $0x38] sm:$0xf]
      %v1973 = vld [vmem:[%s2 + $0x3c] sm:$0xff]
      %v1974 = vld [vmem:[%s2 + $0x44] sm:$0xf]
      %v1975 = vld [vmem:[%s2 + $0x48] sm:$0xff]
      %v1976 = vld [vmem:[%s2 + $0x50] sm:$0xf]
      %v1977 = vld [vmem:[%s2 + $0x54] sm:$0xff]
      %v1978 = vld [vmem:[%s2 + $0x5c] sm:$0xf]
      %v1979 = vld [vmem:[%s2 + $0x60] sm:$0xff]
      %v1980 = vld [vmem:[%s2 + $0x68] sm:$0xf]
      %v1981 = vld [vmem:[%s2 + $0x6c] sm:$0xff]
      %v1982 = vld [vmem:[%s2 + $0x74] sm:$0xf]
      %v1983 = vld [vmem:[%s2 + $0x78] sm:$0xff]
      %v1984 = vld [vmem:[%s2 + $0x80] sm:$0xf]
      %v1985 = vld [vmem:[%s2 + $0x84] sm:$0xff]
      %v1986 = vld [vmem:[%s2 + $0x8c] sm:$0xf]
      %v1987 = vld [vmem:[%s2 + $0x90] sm:$0xff]
      %v1988 = vld [vmem:[%s2 + $0x98] sm:$0xf]
      %v1989 = vld [vmem:[%s2 + $0x9c] sm:$0xff]
      %v1990 = vld [vmem:[%s2 + $0xa4] sm:$0xf]
      %v1991 = vld [vmem:[%s2 + $0xa8] sm:$0xff]
      %v1992 = vld [vmem:[%s2 + $0xb0] sm:$0xf]
      %v1993 = vld [vmem:[%s2 + $0xb4] sm:$0xff]
      %v1994 = vld [vmem:[%s2 + $0xbc] sm:$0xf]
      %v2027 = vunpack.c.l.b16 %v1963
      %v2028 = vunpack.c.h.b16 %v1963
      %v2029 = vunpack.c.l.b16 %v1964
      %v2030 = vunpack.c.l.b16 %v1965
      %v2031 = vunpack.c.h.b16 %v1965
      %v2032 = vunpack.c.l.b16 %v1966
      %v2033 = vunpack.c.l.b16 %v1967
      %v2034 = vunpack.c.h.b16 %v1967
      %v2035 = vunpack.c.l.b16 %v1968
      %v2036 = vunpack.c.l.b16 %v1969
      %v2037 = vunpack.c.h.b16 %v1969
      %v2038 = vunpack.c.l.b16 %v1970
      %v2039 = vunpack.c.l.b16 %v1971
      %v2040 = vunpack.c.h.b16 %v1971
      %v2041 = vunpack.c.l.b16 %v1972
      %v2042 = vunpack.c.l.b16 %v1973
      %v2043 = vunpack.c.h.b16 %v1973
      %v2044 = vunpack.c.l.b16 %v1974
      %v2045 = vunpack.c.l.b16 %v1975
      %v2046 = vunpack.c.h.b16 %v1975
      %v2047 = vunpack.c.l.b16 %v1976
      %v2048 = vunpack.c.l.b16 %v1977
      %v2049 = vunpack.c.h.b16 %v1977
      %v2050 = vunpack.c.l.b16 %v1978
      %v2051 = vunpack.c.l.b16 %v1979
      %v2052 = vunpack.c.h.b16 %v1979
      %v2053 = vunpack.c.l.b16 %v1980
      %v2054 = vunpack.c.l.b16 %v1981
      %v2055 = vunpack.c.h.b16 %v1981
      %v2056 = vunpack.c.l.b16 %v1982
      %v2057 = vunpack.c.l.b16 %v1983
      %v2058 = vunpack.c.h.b16 %v1983
      %v2059 = vunpack.c.l.b16 %v1984
      %v2060 = vunpack.c.l.b16 %v1985
      %v2061 = vunpack.c.h.b16 %v1985
      %v2062 = vunpack.c.l.b16 %v1986
      %v2063 = vunpack.c.l.b16 %v1987
      %v2064 = vunpack.c.h.b16 %v1987
      %v2065 = vunpack.c.l.b16 %v1988
      %v2066 = vunpack.c.l.b16 %v1989
      %v2067 = vunpack.c.h.b16 %v1989
      %v2068 = vunpack.c.l.b16 %v1990
      %v2069 = vunpack.c.l.b16 %v1991
      %v2070 = vunpack.c.h.b16 %v1991
      %v2071 = vunpack.c.l.b16 %v1992
      %v2072 = vunpack.c.l.b16 %v1993
      %v2073 = vunpack.c.h.b16 %v1993
      %v2074 = vunpack.c.l.b16 %v1994
      %v2075 = vpack.c.b16 %v2030, %v2027
      %v2076 = vpack.c.b16 %v2031, %v2028
      %v2077 = vpack.c.b16 %v2032, %v2029
      %v2078 = vpack.c.b16 %v2036, %v2033
      %v2079 = vpack.c.b16 %v2037, %v2034
      %v2080 = vpack.c.b16 %v2038, %v2035
      %v2081 = vpack.c.b16 %v2042, %v2039
      %v2082 = vpack.c.b16 %v2043, %v2040
      %v2083 = vpack.c.b16 %v2044, %v2041
      %v2084 = vpack.c.b16 %v2048, %v2045
      %v2085 = vpack.c.b16 %v2049, %v2046
      %v2086 = vpack.c.b16 %v2050, %v2047
      %v2087 = vpack.c.b16 %v2054, %v2051
      %v2088 = vpack.c.b16 %v2055, %v2052
      %v2089 = vpack.c.b16 %v2056, %v2053
      %v2090 = vpack.c.b16 %v2060, %v2057
      %v2091 = vpack.c.b16 %v2061, %v2058
      %v2092 = vpack.c.b16 %v2062, %v2059
      %v2093 = vpack.c.b16 %v2066, %v2063
      %v2094 = vpack.c.b16 %v2067, %v2064
      %v2095 = vpack.c.b16 %v2068, %v2065
      %v2096 = vpack.c.b16 %v2072, %v2069
      %v2097 = vpack.c.b16 %v2073, %v2070
      %v2098 = vpack.c.b16 %v2074, %v2071
      %2123 = vmatprep.subr.bf16.mxu0 %v2097
      %2124 = vmatpush1.bf16.msra.mxu0 %v2096
      %2125 = vmatprep.subr.bf16.mxu0 %v2094
      %2126 = vmatpush1.bf16.msra.mxu0 %v2093
      %2127 = vmatprep.subr.bf16.mxu0 %v2091
      %2128 = vmatpush1.bf16.msra.mxu0 %v2090
      %2129 = vmatprep.subr.bf16.mxu0 %v2088
      %2130 = vmatpush1.bf16.msra.mxu0 %v2087
      %2131 = vmatprep.subr.bf16.mxu0 %v2085
      %2132 = vmatpush1.bf16.msra.mxu0 %v2084
      %2133 = vmatprep.subr.bf16.mxu0 %v2082
      %2134 = vmatpush1.bf16.msra.mxu0 %v2081
      %2135 = vmatprep.subr.bf16.mxu0 %v2079
      %2136 = vmatpush1.bf16.msra.mxu0 %v2078
      %2137 = vmatprep.subr.bf16.mxu0 %v2076
      %2138 = vmatpush1.bf16.msra.mxu0 %v2075
      %2139 = vmatprep.subr.bf16.mxu0 0
      %2140 = vmatpush2.bf16.msra.mxu0 0
      %2141 = vmatprep.subr.bf16.mxu0 0
      %2142 = vmatpush2.bf16.msra.mxu0 0
      %2143 = vmatprep.subr.bf16.mxu0 0
      %2144 = vmatpush2.bf16.msra.mxu0 0
      %2145 = vmatprep.subr.bf16.mxu0 0
      %2146 = vmatpush2.bf16.msra.mxu0 0
      %2147 = vmatprep.subr.bf16.mxu0 0
      %2148 = vmatpush2.bf16.msra.mxu0 0
      %2149 = vmatprep.subr.bf16.mxu0 0
      %2150 = vmatpush2.bf16.msra.mxu0 0
      %2151 = vmatprep.subr.bf16.mxu0 0
      %2152 = vmatpush2.bf16.msra.mxu0 0
      %2153 = vmatprep.subr.bf16.mxu0 0
      %2154 = vmatpush2.bf16.msra.mxu0 0
      %2155 = vmatprep.mubr.bf16.mxu0 0
      %2156 = vmatmul.mubr.bf16.gmra.mxu0 %v1962
      %v2157 = vpop.f32.mrf.mxu0
      %v2158 = vadd.f32 0.0, %v2157
      %v2159 = vpop.f32.mrf.mxu0
      %v2160 = vadd.f32 0.0, %v2159
      %v2161 = vpop.f32.mrf.mxu0
      %v2162 = vpop.f32.mrf.mxu0
      %2163 = vdwg.mxu0
      %2164 = vmatprep.subr.bf16.mxu0 0
      %2165 = vmatpush1.bf16.msra.mxu0 %v2098
      %2166 = vmatprep.subr.bf16.mxu0 0
      %2167 = vmatpush1.bf16.msra.mxu0 %v2095
      %2168 = vmatprep.subr.bf16.mxu0 0
      %2169 = vmatpush1.bf16.msra.mxu0 %v2092
      %2170 = vmatprep.subr.bf16.mxu0 0
      %2171 = vmatpush1.bf16.msra.mxu0 %v2089
      %2172 = vmatprep.subr.bf16.mxu0 0
      %2173 = vmatpush1.bf16.msra.mxu0 %v2086
      %2174 = vmatprep.subr.bf16.mxu0 0
      %2175 = vmatpush1.bf16.msra.mxu0 %v2083
      %2176 = vmatprep.subr.bf16.mxu0 0
      %2177 = vmatpush1.bf16.msra.mxu0 %v2080
      %2178 = vmatprep.subr.bf16.mxu0 0
      %2179 = vmatpush1.bf16.msra.mxu0 %v2077
      %2180 = vmatprep.subr.bf16.mxu0 0
      %2181 = vmatpush2.bf16.msra.mxu0 0
      %2182 = vmatprep.subr.bf16.mxu0 0
      %2183 = vmatpush2.bf16.msra.mxu0 0
      %2184 = vmatprep.subr.bf16.mxu0 0
      %2185 = vmatpush2.bf16.msra.mxu0 0
      %2186 = vmatprep.subr.bf16.mxu0 0
      %2187 = vmatpush2.bf16.msra.mxu0 0
      %2188 = vmatprep.subr.bf16.mxu0 0
      %2189 = vmatpush2.bf16.msra.mxu0 0
      %2190 = vmatprep.subr.bf16.mxu0 0
      %2191 = vmatpush2.bf16.msra.mxu0 0
      %2192 = vmatprep.subr.bf16.mxu0 0
      %2193 = vmatpush2.bf16.msra.mxu0 0
      %2194 = vmatprep.subr.bf16.mxu0 0
      %2195 = vmatpush2.bf16.msra.mxu0 0
      %2196 = vmatprep.mubr.bf16.mxu0 0
      %2197 = vmatmul.mubr.bf16.gmra.mxu0 %v1962
      %v2198 = vpop.f32.mrf.mxu0
      %v2199 = vadd.f32 0.0, %v2198
      %v2200 = vpop.f32.mrf.mxu0
      %v2201 = vpop.f32.mrf.mxu0
      %v2202 = vpop.f32.mrf.mxu0
      %2203 = vdwg.mxu0
      %v2204 = vpack.c.bf16 %v1961, %v1961
      %v2205 = vld [vmem:[%s639] sm:$0xff]
      %v2206 = vld [vmem:[%s639 + $0x8] sm:$0xf]
      %v2207 = vld [vmem:[%s639 + $0xc] sm:$0xff]
      %v2208 = vld [vmem:[%s639 + $0x14] sm:$0xf]
      %v2209 = vld [vmem:[%s639 + $0x18] sm:$0xff]
      %v2210 = vld [vmem:[%s639 + $0x20] sm:$0xf]
      %v2211 = vld [vmem:[%s639 + $0x24] sm:$0xff]
      %v2212 = vld [vmem:[%s639 + $0x2c] sm:$0xf]
      %v2213 = vld [vmem:[%s639 + $0x30] sm:$0xff]
      %v2214 = vld [vmem:[%s639 + $0x38] sm:$0xf]
      %v2215 = vld [vmem:[%s639 + $0x3c] sm:$0xff]
      %v2216 = vld [vmem:[%s639 + $0x44] sm:$0xf]
      %v2217 = vld [vmem:[%s639 + $0x48] sm:$0xff]
      %v2218 = vld [vmem:[%s639 + $0x50] sm:$0xf]
      %v2219 = vld [vmem:[%s639 + $0x54] sm:$0xff]
      %v2220 = vld [vmem:[%s639 + $0x5c] sm:$0xf]
      %v2221 = vld [vmem:[%s639 + $0x60] sm:$0xff]
      %v2222 = vld [vmem:[%s639 + $0x68] sm:$0xf]
      %v2223 = vld [vmem:[%s639 + $0x6c] sm:$0xff]
      %v2224 = vld [vmem:[%s639 + $0x74] sm:$0xf]
      %v2225 = vld [vmem:[%s639 + $0x78] sm:$0xff]
      %v2226 = vld [vmem:[%s639 + $0x80] sm:$0xf]
      %v2227 = vld [vmem:[%s639 + $0x84] sm:$0xff]
      %v2228 = vld [vmem:[%s639 + $0x8c] sm:$0xf]
      %v2229 = vld [vmem:[%s639 + $0x90] sm:$0xff]
      %v2230 = vld [vmem:[%s639 + $0x98] sm:$0xf]
      %v2231 = vld [vmem:[%s639 + $0x9c] sm:$0xff]
      %v2232 = vld [vmem:[%s639 + $0xa4] sm:$0xf]
      %v2233 = vld [vmem:[%s639 + $0xa8] sm:$0xff]
      %v2234 = vld [vmem:[%s639 + $0xb0] sm:$0xf]
      %v2235 = vld [vmem:[%s639 + $0xb4] sm:$0xff]
      %v2236 = vld [vmem:[%s639 + $0xbc] sm:$0xf]
      %v2269 = vunpack.c.l.b16 %v2205
      %v2270 = vunpack.c.h.b16 %v2205
      %v2271 = vunpack.c.l.b16 %v2206
      %v2272 = vunpack.c.l.b16 %v2207
      %v2273 = vunpack.c.h.b16 %v2207
      %v2274 = vunpack.c.l.b16 %v2208
      %v2275 = vunpack.c.l.b16 %v2209
      %v2276 = vunpack.c.h.b16 %v2209
      %v2277 = vunpack.c.l.b16 %v2210
      %v2278 = vunpack.c.l.b16 %v2211
      %v2279 = vunpack.c.h.b16 %v2211
      %v2280 = vunpack.c.l.b16 %v2212
      %v2281 = vunpack.c.l.b16 %v2213
      %v2282 = vunpack.c.h.b16 %v2213
      %v2283 = vunpack.c.l.b16 %v2214
      %v2284 = vunpack.c.l.b16 %v2215
      %v2285 = vunpack.c.h.b16 %v2215
      %v2286 = vunpack.c.l.b16 %v2216
      %v2287 = vunpack.c.l.b16 %v2217
      %v2288 = vunpack.c.h.b16 %v2217
      %v2289 = vunpack.c.l.b16 %v2218
      %v2290 = vunpack.c.l.b16 %v2219
      %v2291 = vunpack.c.h.b16 %v2219
      %v2292 = vunpack.c.l.b16 %v2220
      %v2293 = vunpack.c.l.b16 %v2221
      %v2294 = vunpack.c.h.b16 %v2221
      %v2295 = vunpack.c.l.b16 %v2222
      %v2296 = vunpack.c.l.b16 %v2223
      %v2297 = vunpack.c.h.b16 %v2223
      %v2298 = vunpack.c.l.b16 %v2224
      %v2299 = vunpack.c.l.b16 %v2225
      %v2300 = vunpack.c.h.b16 %v2225
      %v2301 = vunpack.c.l.b16 %v2226
      %v2302 = vunpack.c.l.b16 %v2227
      %v2303 = vunpack.c.h.b16 %v2227
      %v2304 = vunpack.c.l.b16 %v2228
      %v2305 = vunpack.c.l.b16 %v2229
      %v2306 = vunpack.c.h.b16 %v2229
      %v2307 = vunpack.c.l.b16 %v2230
      %v2308 = vunpack.c.l.b16 %v2231
      %v2309 = vunpack.c.h.b16 %v2231
      %v2310 = vunpack.c.l.b16 %v2232
      %v2311 = vunpack.c.l.b16 %v2233
      %v2312 = vunpack.c.h.b16 %v2233
      %v2313 = vunpack.c.l.b16 %v2234
      %v2314 = vunpack.c.l.b16 %v2235
      %v2315 = vunpack.c.h.b16 %v2235
      %v2316 = vunpack.c.l.b16 %v2236
      %v2317 = vpack.c.b16 %v2272, %v2269
      %v2318 = vpack.c.b16 %v2273, %v2270
      %v2319 = vpack.c.b16 %v2274, %v2271
      %v2320 = vpack.c.b16 %v2278, %v2275
      %v2321 = vpack.c.b16 %v2279, %v2276
      %v2322 = vpack.c.b16 %v2280, %v2277
      %v2323 = vpack.c.b16 %v2284, %v2281
      %v2324 = vpack.c.b16 %v2285, %v2282
      %v2325 = vpack.c.b16 %v2286, %v2283
      %v2326 = vpack.c.b16 %v2290, %v2287
      %v2327 = vpack.c.b16 %v2291, %v2288
      %v2328 = vpack.c.b16 %v2292, %v2289
      %v2329 = vpack.c.b16 %v2296, %v2293
      %v2330 = vpack.c.b16 %v2297, %v2294
      %v2331 = vpack.c.b16 %v2298, %v2295
      %v2332 = vpack.c.b16 %v2302, %v2299
      %v2333 = vpack.c.b16 %v2303, %v2300
      %v2334 = vpack.c.b16 %v2304, %v2301
      %v2335 = vpack.c.b16 %v2308, %v2305
      %v2336 = vpack.c.b16 %v2309, %v2306
      %v2337 = vpack.c.b16 %v2310, %v2307
      %v2338 = vpack.c.b16 %v2314, %v2311
      %v2339 = vpack.c.b16 %v2315, %v2312
      %v2340 = vpack.c.b16 %v2316, %v2313
      %2365 = vmatprep.subr.bf16.mxu0 %v2339
      %2366 = vmatpush1.bf16.msra.mxu0 %v2338
      %2367 = vmatprep.subr.bf16.mxu0 %v2336
      %2368 = vmatpush1.bf16.msra.mxu0 %v2335
      %2369 = vmatprep.subr.bf16.mxu0 %v2333
      %2370 = vmatpush1.bf16.msra.mxu0 %v2332
      %2371 = vmatprep.subr.bf16.mxu0 %v2330
      %2372 = vmatpush1.bf16.msra.mxu0 %v2329
      %2373 = vmatprep.subr.bf16.mxu0 %v2327
      %2374 = vmatpush1.bf16.msra.mxu0 %v2326
      %2375 = vmatprep.subr.bf16.mxu0 %v2324
      %2376 = vmatpush1.bf16.msra.mxu0 %v2323
      %2377 = vmatprep.subr.bf16.mxu0 %v2321
      %2378 = vmatpush1.bf16.msra.mxu0 %v2320
      %2379 = vmatprep.subr.bf16.mxu0 %v2318
      %2380 = vmatpush1.bf16.msra.mxu0 %v2317
      %2381 = vmatprep.subr.bf16.mxu0 0
      %2382 = vmatpush2.bf16.msra.mxu0 0
      %2383 = vmatprep.subr.bf16.mxu0 0
      %2384 = vmatpush2.bf16.msra.mxu0 0
      %2385 = vmatprep.subr.bf16.mxu0 0
      %2386 = vmatpush2.bf16.msra.mxu0 0
      %2387 = vmatprep.subr.bf16.mxu0 0
      %2388 = vmatpush2.bf16.msra.mxu0 0
      %2389 = vmatprep.subr.bf16.mxu0 0
      %2390 = vmatpush2.bf16.msra.mxu0 0
      %2391 = vmatprep.subr.bf16.mxu0 0
      %2392 = vmatpush2.bf16.msra.mxu0 0
      %2393 = vmatprep.subr.bf16.mxu0 0
      %2394 = vmatpush2.bf16.msra.mxu0 0
      %2395 = vmatprep.subr.bf16.mxu0 0
      %2396 = vmatpush2.bf16.msra.mxu0 0
      %2397 = vmatprep.mubr.bf16.mxu0 0
      %2398 = vmatmul.mubr.bf16.gmra.mxu0 %v2204
      %v2399 = vpop.f32.mrf.mxu0
      %v2400 = vadd.f32 0.0, %v2399
      %v2401 = vpop.f32.mrf.mxu0
      %v2402 = vadd.f32 0.0, %v2401
      %v2403 = vpop.f32.mrf.mxu0
      %v2404 = vpop.f32.mrf.mxu0
      %2405 = vdwg.mxu0
      %2406 = vmatprep.subr.bf16.mxu0 0
      %2407 = vmatpush1.bf16.msra.mxu0 %v2340
      %2408 = vmatprep.subr.bf16.mxu0 0
      %2409 = vmatpush1.bf16.msra.mxu0 %v2337
      %2410 = vmatprep.subr.bf16.mxu0 0
      %2411 = vmatpush1.bf16.msra.mxu0 %v2334
      %2412 = vmatprep.subr.bf16.mxu0 0
      %2413 = vmatpush1.bf16.msra.mxu0 %v2331
      %2414 = vmatprep.subr.bf16.mxu0 0
      %2415 = vmatpush1.bf16.msra.mxu0 %v2328
      %2416 = vmatprep.subr.bf16.mxu0 0
      %2417 = vmatpush1.bf16.msra.mxu0 %v2325
      %2418 = vmatprep.subr.bf16.mxu0 0
      %2419 = vmatpush1.bf16.msra.mxu0 %v2322
      %2420 = vmatprep.subr.bf16.mxu0 0
      %2421 = vmatpush1.bf16.msra.mxu0 %v2319
      %2422 = vmatprep.subr.bf16.mxu0 0
      %2423 = vmatpush2.bf16.msra.mxu0 0
      %2424 = vmatprep.subr.bf16.mxu0 0
      %2425 = vmatpush2.bf16.msra.mxu0 0
      %2426 = vmatprep.subr.bf16.mxu0 0
      %2427 = vmatpush2.bf16.msra.mxu0 0
      %2428 = vmatprep.subr.bf16.mxu0 0
      %2429 = vmatpush2.bf16.msra.mxu0 0
      %2430 = vmatprep.subr.bf16.mxu0 0
      %2431 = vmatpush2.bf16.msra.mxu0 0
      %2432 = vmatprep.subr.bf16.mxu0 0
      %2433 = vmatpush2.bf16.msra.mxu0 0
      %2434 = vmatprep.subr.bf16.mxu0 0
      %2435 = vmatpush2.bf16.msra.mxu0 0
      %2436 = vmatprep.subr.bf16.mxu0 0
      %2437 = vmatpush2.bf16.msra.mxu0 0
      %2438 = vmatprep.mubr.bf16.mxu0 0
      %2439 = vmatmul.mubr.bf16.gmra.mxu0 %v2204
      %v2440 = vpop.f32.mrf.mxu0
      %v2441 = vadd.f32 0.0, %v2440
      %v2442 = vpop.f32.mrf.mxu0
      %v2443 = vpop.f32.mrf.mxu0
      %v2444 = vpop.f32.mrf.mxu0
      %2445 = vdwg.mxu0
      %v2446 = vadd.f32 %v1957, %v2158
      %v2447 = vxor.u32 %v2446, 2147483648
      %v2448 = vmul.f32 %v2447, 1.442695
      %v2449 = vpow.pop %v2448
      %v2450 = vadd.f32 %v2449, 1.0
      %v2451 = vrcp.pop %v2450
      %v2452 = vmul.f32 1.0, %v2451
      %v2453 = vadd.f32 %v1958, %v2160
      %v2454 = vxor.u32 %v2453, 2147483648
      %v2455 = vmul.f32 %v2454, 1.442695
      %v2456 = vpow.pop %v2455
      %v2457 = vadd.f32 %v2456, 1.0
      %v2458 = vrcp.pop %v2457
      %v2459 = vmul.f32 1.0, %v2458
      %v2460 = vadd.f32 %v2199, %v361
      %v2461 = vmul.f32 %v2452, %v2460
      %v2462 = vadd.f32 %v1959, %v2461
      %v2463 = vtanh.pop %v2462
      %v2464 = vsub.f32 1.0, %v2459
      %v2465 = vmul.f32 %v2464, %v2463
      %v2466 = vmul.f32 %v2459, %v1960
      %v2467 = vadd.f32 %v2465, %v2466
      %2468 = vst [vmem:[#allocation2] sm:$0xff] %v2467
      %v2469 = vpack.c.bf16 %v2467, %v2467
      %v2470 = vld [vmem:[%s3] sm:$0xff]
      %v2471 = vld [vmem:[%s3 + $0x8] sm:$0xf]
      %v2472 = vld [vmem:[%s3 + $0xc] sm:$0xff]
      %v2473 = vld [vmem:[%s3 + $0x14] sm:$0xf]
      %v2474 = vld [vmem:[%s3 + $0x18] sm:$0xff]
      %v2475 = vld [vmem:[%s3 + $0x20] sm:$0xf]
      %v2476 = vld [vmem:[%s3 + $0x24] sm:$0xff]
      %v2477 = vld [vmem:[%s3 + $0x2c] sm:$0xf]
      %v2478 = vld [vmem:[%s3 + $0x30] sm:$0xff]
      %v2479 = vld [vmem:[%s3 + $0x38] sm:$0xf]
      %v2480 = vld [vmem:[%s3 + $0x3c] sm:$0xff]
      %v2481 = vld [vmem:[%s3 + $0x44] sm:$0xf]
      %v2482 = vld [vmem:[%s3 + $0x48] sm:$0xff]
      %v2483 = vld [vmem:[%s3 + $0x50] sm:$0xf]
      %v2484 = vld [vmem:[%s3 + $0x54] sm:$0xff]
      %v2485 = vld [vmem:[%s3 + $0x5c] sm:$0xf]
      %v2486 = vld [vmem:[%s3 + $0x60] sm:$0xff]
      %v2487 = vld [vmem:[%s3 + $0x68] sm:$0xf]
      %v2488 = vld [vmem:[%s3 + $0x6c] sm:$0xff]
      %v2489 = vld [vmem:[%s3 + $0x74] sm:$0xf]
      %v2490 = vld [vmem:[%s3 + $0x78] sm:$0xff]
      %v2491 = vld [vmem:[%s3 + $0x80] sm:$0xf]
      %v2492 = vld [vmem:[%s3 + $0x84] sm:$0xff]
      %v2493 = vld [vmem:[%s3 + $0x8c] sm:$0xf]
      %v2494 = vld [vmem:[%s3 + $0x90] sm:$0xff]
      %v2495 = vld [vmem:[%s3 + $0x98] sm:$0xf]
      %v2496 = vld [vmem:[%s3 + $0x9c] sm:$0xff]
      %v2497 = vld [vmem:[%s3 + $0xa4] sm:$0xf]
      %v2498 = vld [vmem:[%s3 + $0xa8] sm:$0xff]
      %v2499 = vld [vmem:[%s3 + $0xb0] sm:$0xf]
      %v2500 = vld [vmem:[%s3 + $0xb4] sm:$0xff]
      %v2501 = vld [vmem:[%s3 + $0xbc] sm:$0xf]
      %v2534 = vunpack.c.l.b16 %v2470
      %v2535 = vunpack.c.h.b16 %v2470
      %v2536 = vunpack.c.l.b16 %v2471
      %v2537 = vunpack.c.l.b16 %v2472
      %v2538 = vunpack.c.h.b16 %v2472
      %v2539 = vunpack.c.l.b16 %v2473
      %v2540 = vunpack.c.l.b16 %v2474
      %v2541 = vunpack.c.h.b16 %v2474
      %v2542 = vunpack.c.l.b16 %v2475
      %v2543 = vunpack.c.l.b16 %v2476
      %v2544 = vunpack.c.h.b16 %v2476
      %v2545 = vunpack.c.l.b16 %v2477
      %v2546 = vunpack.c.l.b16 %v2478
      %v2547 = vunpack.c.h.b16 %v2478
      %v2548 = vunpack.c.l.b16 %v2479
      %v2549 = vunpack.c.l.b16 %v2480
      %v2550 = vunpack.c.h.b16 %v2480
      %v2551 = vunpack.c.l.b16 %v2481
      %v2552 = vunpack.c.l.b16 %v2482
      %v2553 = vunpack.c.h.b16 %v2482
      %v2554 = vunpack.c.l.b16 %v2483
      %v2555 = vunpack.c.l.b16 %v2484
      %v2556 = vunpack.c.h.b16 %v2484
      %v2557 = vunpack.c.l.b16 %v2485
      %v2558 = vunpack.c.l.b16 %v2486
      %v2559 = vunpack.c.h.b16 %v2486
      %v2560 = vunpack.c.l.b16 %v2487
      %v2561 = vunpack.c.l.b16 %v2488
      %v2562 = vunpack.c.h.b16 %v2488
      %v2563 = vunpack.c.l.b16 %v2489
      %v2564 = vunpack.c.l.b16 %v2490
      %v2565 = vunpack.c.h.b16 %v2490
      %v2566 = vunpack.c.l.b16 %v2491
      %v2567 = vunpack.c.l.b16 %v2492
      %v2568 = vunpack.c.h.b16 %v2492
      %v2569 = vunpack.c.l.b16 %v2493
      %v2570 = vunpack.c.l.b16 %v2494
      %v2571 = vunpack.c.h.b16 %v2494
      %v2572 = vunpack.c.l.b16 %v2495
      %v2573 = vunpack.c.l.b16 %v2496
      %v2574 = vunpack.c.h.b16 %v2496
      %v2575 = vunpack.c.l.b16 %v2497
      %v2576 = vunpack.c.l.b16 %v2498
      %v2577 = vunpack.c.h.b16 %v2498
      %v2578 = vunpack.c.l.b16 %v2499
      %v2579 = vunpack.c.l.b16 %v2500
      %v2580 = vunpack.c.h.b16 %v2500
      %v2581 = vunpack.c.l.b16 %v2501
      %v2582 = vpack.c.b16 %v2537, %v2534
      %v2583 = vpack.c.b16 %v2538, %v2535
      %v2584 = vpack.c.b16 %v2539, %v2536
      %v2585 = vpack.c.b16 %v2543, %v2540
      %v2586 = vpack.c.b16 %v2544, %v2541
      %v2587 = vpack.c.b16 %v2545, %v2542
      %v2588 = vpack.c.b16 %v2549, %v2546
      %v2589 = vpack.c.b16 %v2550, %v2547
      %v2590 = vpack.c.b16 %v2551, %v2548
      %v2591 = vpack.c.b16 %v2555, %v2552
      %v2592 = vpack.c.b16 %v2556, %v2553
      %v2593 = vpack.c.b16 %v2557, %v2554
      %v2594 = vpack.c.b16 %v2561, %v2558
      %v2595 = vpack.c.b16 %v2562, %v2559
      %v2596 = vpack.c.b16 %v2563, %v2560
      %v2597 = vpack.c.b16 %v2567, %v2564
      %v2598 = vpack.c.b16 %v2568, %v2565
      %v2599 = vpack.c.b16 %v2569, %v2566
      %v2600 = vpack.c.b16 %v2573, %v2570
      %v2601 = vpack.c.b16 %v2574, %v2571
      %v2602 = vpack.c.b16 %v2575, %v2572
      %v2603 = vpack.c.b16 %v2579, %v2576
      %v2604 = vpack.c.b16 %v2580, %v2577
      %v2605 = vpack.c.b16 %v2581, %v2578
      %2630 = vmatprep.subr.bf16.mxu0 %v2604
      %2631 = vmatpush1.bf16.msra.mxu0 %v2603
      %2632 = vmatprep.subr.bf16.mxu0 %v2601
      %2633 = vmatpush1.bf16.msra.mxu0 %v2600
      %2634 = vmatprep.subr.bf16.mxu0 %v2598
      %2635 = vmatpush1.bf16.msra.mxu0 %v2597
      %2636 = vmatprep.subr.bf16.mxu0 %v2595
      %2637 = vmatpush1.bf16.msra.mxu0 %v2594
      %2638 = vmatprep.subr.bf16.mxu0 %v2592
      %2639 = vmatpush1.bf16.msra.mxu0 %v2591
      %2640 = vmatprep.subr.bf16.mxu0 %v2589
      %2641 = vmatpush1.bf16.msra.mxu0 %v2588
      %2642 = vmatprep.subr.bf16.mxu0 %v2586
      %2643 = vmatpush1.bf16.msra.mxu0 %v2585
      %2644 = vmatprep.subr.bf16.mxu0 %v2583
      %2645 = vmatpush1.bf16.msra.mxu0 %v2582
      %2646 = vmatprep.subr.bf16.mxu0 0
      %2647 = vmatpush2.bf16.msra.mxu0 0
      %2648 = vmatprep.subr.bf16.mxu0 0
      %2649 = vmatpush2.bf16.msra.mxu0 0
      %2650 = vmatprep.subr.bf16.mxu0 0
      %2651 = vmatpush2.bf16.msra.mxu0 0
      %2652 = vmatprep.subr.bf16.mxu0 0
      %2653 = vmatpush2.bf16.msra.mxu0 0
      %2654 = vmatprep.subr.bf16.mxu0 0
      %2655 = vmatpush2.bf16.msra.mxu0 0
      %2656 = vmatprep.subr.bf16.mxu0 0
      %2657 = vmatpush2.bf16.msra.mxu0 0
      %2658 = vmatprep.subr.bf16.mxu0 0
      %2659 = vmatpush2.bf16.msra.mxu0 0
      %2660 = vmatprep.subr.bf16.mxu0 0
      %2661 = vmatpush2.bf16.msra.mxu0 0
      %2662 = vmatprep.mubr.bf16.mxu0 0
      %2663 = vmatmul.mubr.bf16.gmra.mxu0 %v2469
      %v2664 = vpop.f32.mrf.mxu0
      %v2665 = vadd.f32 %v376, %v2664
      %v2666 = vpop.f32.mrf.mxu0
      %v2667 = vadd.f32 %v380, %v2666
      %v2668 = vpop.f32.mrf.mxu0
      %v2669 = vpop.f32.mrf.mxu0
      %2670 = vdwg.mxu0
      %2671 = vmatprep.subr.bf16.mxu0 0
      %2672 = vmatpush1.bf16.msra.mxu0 %v2605
      %2673 = vmatprep.subr.bf16.mxu0 0
      %2674 = vmatpush1.bf16.msra.mxu0 %v2602
      %2675 = vmatprep.subr.bf16.mxu0 0
      %2676 = vmatpush1.bf16.msra.mxu0 %v2599
      %2677 = vmatprep.subr.bf16.mxu0 0
      %2678 = vmatpush1.bf16.msra.mxu0 %v2596
      %2679 = vmatprep.subr.bf16.mxu0 0
      %2680 = vmatpush1.bf16.msra.mxu0 %v2593
      %2681 = vmatprep.subr.bf16.mxu0 0
      %2682 = vmatpush1.bf16.msra.mxu0 %v2590
      %2683 = vmatprep.subr.bf16.mxu0 0
      %2684 = vmatpush1.bf16.msra.mxu0 %v2587
      %2685 = vmatprep.subr.bf16.mxu0 0
      %2686 = vmatpush1.bf16.msra.mxu0 %v2584
      %2687 = vmatprep.subr.bf16.mxu0 0
      %2688 = vmatpush2.bf16.msra.mxu0 0
      %2689 = vmatprep.subr.bf16.mxu0 0
      %2690 = vmatpush2.bf16.msra.mxu0 0
      %2691 = vmatprep.subr.bf16.mxu0 0
      %2692 = vmatpush2.bf16.msra.mxu0 0
      %2693 = vmatprep.subr.bf16.mxu0 0
      %2694 = vmatpush2.bf16.msra.mxu0 0
      %2695 = vmatprep.subr.bf16.mxu0 0
      %2696 = vmatpush2.bf16.msra.mxu0 0
      %2697 = vmatprep.subr.bf16.mxu0 0
      %2698 = vmatpush2.bf16.msra.mxu0 0
      %2699 = vmatprep.subr.bf16.mxu0 0
      %2700 = vmatpush2.bf16.msra.mxu0 0
      %2701 = vmatprep.subr.bf16.mxu0 0
      %2702 = vmatpush2.bf16.msra.mxu0 0
      %2703 = vmatprep.mubr.bf16.mxu0 0
      %2704 = vmatmul.mubr.bf16.gmra.mxu0 %v2469
      %v2705 = vpop.f32.mrf.mxu0
      %v2706 = vadd.f32 %v384, %v2705
      %v2707 = vpop.f32.mrf.mxu0
      %v2708 = vpop.f32.mrf.mxu0
      %v2709 = vpop.f32.mrf.mxu0
      %2710 = vdwg.mxu0
      %v2711 = vadd.f32 %v2665, %v2400
      %v2712 = vxor.u32 %v2711, 2147483648
      %v2713 = vmul.f32 %v2712, 1.442695
      %v2714 = vpow.pop %v2713
      %v2715 = vadd.f32 %v2714, 1.0
      %v2716 = vrcp.pop %v2715
      %v2717 = vmul.f32 1.0, %v2716
      %v2718 = vadd.f32 %v2667, %v2402
      %v2719 = vxor.u32 %v2718, 2147483648
      %v2720 = vmul.f32 %v2719, 1.442695
      %v2721 = vpow.pop %v2720
      %v2722 = vadd.f32 %v2721, 1.0
      %v2723 = vrcp.pop %v2722
      %v2724 = vmul.f32 1.0, %v2723
      %v2725 = vadd.f32 %v2441, %v369
      %v2726 = vmul.f32 %v2717, %v2725
      %v2727 = vadd.f32 %v2706, %v2726
      %v2728 = vtanh.pop %v2727
      %v2729 = vsub.f32 1.0, %v2724
      %v2730 = vmul.f32 %v2729, %v2728
      %v2731 = vmul.f32 %v2724, %v1961
      %v2732 = vadd.f32 %v2730, %v2731
      %2733 = vst [vmem:[%s394] sm:$0xff] %v2732
      %v2734 = vpack.c.bf16 %v2732, %v2732
      %s2735 = scalar_lea.vmem %s341, 8
      %2736 = vst [vmem:[%s2735] sm:$0xf] %v2734
      %s2737 = scalar_lea.vmem %s328, 36
      %v2738 = vld [vmem:[%s2737] sm:$0xff]
      %v2739 = vld [vmem:[%s2737 + $0x8] sm:$0xf]
      %v2740 = vunpack.c.l.bf16 %v2738
      %v2741 = vunpack.c.h.bf16 %v2738
      %v2742 = vunpack.c.l.bf16 %v2739
      %v2743 = vld [vmem:[#allocation2] sm:$0xff]
      %v2744 = vld [vmem:[%s394] sm:$0xff]
      %v2745 = vpack.c.bf16 %v2743, %v2743
      %v2746 = vld [vmem:[%s2] sm:$0xff]
      %v2747 = vld [vmem:[%s2 + $0x8] sm:$0xf]
      %v2748 = vld [vmem:[%s2 + $0xc] sm:$0xff]
      %v2749 = vld [vmem:[%s2 + $0x14] sm:$0xf]
      %v2750 = vld [vmem:[%s2 + $0x18] sm:$0xff]
      %v2751 = vld [vmem:[%s2 + $0x20] sm:$0xf]
      %v2752 = vld [vmem:[%s2 + $0x24] sm:$0xff]
      %v2753 = vld [vmem:[%s2 + $0x2c] sm:$0xf]
      %v2754 = vld [vmem:[%s2 + $0x30] sm:$0xff]
      %v2755 = vld [vmem:[%s2 + $0x38] sm:$0xf]
      %v2756 = vld [vmem:[%s2 + $0x3c] sm:$0xff]
      %v2757 = vld [vmem:[%s2 + $0x44] sm:$0xf]
      %v2758 = vld [vmem:[%s2 + $0x48] sm:$0xff]
      %v2759 = vld [vmem:[%s2 + $0x50] sm:$0xf]
      %v2760 = vld [vmem:[%s2 + $0x54] sm:$0xff]
      %v2761 = vld [vmem:[%s2 + $0x5c] sm:$0xf]
      %v2762 = vld [vmem:[%s2 + $0x60] sm:$0xff]
      %v2763 = vld [vmem:[%s2 + $0x68] sm:$0xf]
      %v2764 = vld [vmem:[%s2 + $0x6c] sm:$0xff]
      %v2765 = vld [vmem:[%s2 + $0x74] sm:$0xf]
      %v2766 = vld [vmem:[%s2 + $0x78] sm:$0xff]
      %v2767 = vld [vmem:[%s2 + $0x80] sm:$0xf]
      %v2768 = vld [vmem:[%s2 + $0x84] sm:$0xff]
      %v2769 = vld [vmem:[%s2 + $0x8c] sm:$0xf]
      %v2770 = vld [vmem:[%s2 + $0x90] sm:$0xff]
      %v2771 = vld [vmem:[%s2 + $0x98] sm:$0xf]
      %v2772 = vld [vmem:[%s2 + $0x9c] sm:$0xff]
      %v2773 = vld [vmem:[%s2 + $0xa4] sm:$0xf]
      %v2774 = vld [vmem:[%s2 + $0xa8] sm:$0xff]
      %v2775 = vld [vmem:[%s2 + $0xb0] sm:$0xf]
      %v2776 = vld [vmem:[%s2 + $0xb4] sm:$0xff]
      %v2777 = vld [vmem:[%s2 + $0xbc] sm:$0xf]
      %v2810 = vunpack.c.l.b16 %v2746
      %v2811 = vunpack.c.h.b16 %v2746
      %v2812 = vunpack.c.l.b16 %v2747
      %v2813 = vunpack.c.l.b16 %v2748
      %v2814 = vunpack.c.h.b16 %v2748
      %v2815 = vunpack.c.l.b16 %v2749
      %v2816 = vunpack.c.l.b16 %v2750
      %v2817 = vunpack.c.h.b16 %v2750
      %v2818 = vunpack.c.l.b16 %v2751
      %v2819 = vunpack.c.l.b16 %v2752
      %v2820 = vunpack.c.h.b16 %v2752
      %v2821 = vunpack.c.l.b16 %v2753
      %v2822 = vunpack.c.l.b16 %v2754
      %v2823 = vunpack.c.h.b16 %v2754
      %v2824 = vunpack.c.l.b16 %v2755
      %v2825 = vunpack.c.l.b16 %v2756
      %v2826 = vunpack.c.h.b16 %v2756
      %v2827 = vunpack.c.l.b16 %v2757
      %v2828 = vunpack.c.l.b16 %v2758
      %v2829 = vunpack.c.h.b16 %v2758
      %v2830 = vunpack.c.l.b16 %v2759
      %v2831 = vunpack.c.l.b16 %v2760
      %v2832 = vunpack.c.h.b16 %v2760
      %v2833 = vunpack.c.l.b16 %v2761
      %v2834 = vunpack.c.l.b16 %v2762
      %v2835 = vunpack.c.h.b16 %v2762
      %v2836 = vunpack.c.l.b16 %v2763
      %v2837 = vunpack.c.l.b16 %v2764
      %v2838 = vunpack.c.h.b16 %v2764
      %v2839 = vunpack.c.l.b16 %v2765
      %v2840 = vunpack.c.l.b16 %v2766
      %v2841 = vunpack.c.h.b16 %v2766
      %v2842 = vunpack.c.l.b16 %v2767
      %v2843 = vunpack.c.l.b16 %v2768
      %v2844 = vunpack.c.h.b16 %v2768
      %v2845 = vunpack.c.l.b16 %v2769
      %v2846 = vunpack.c.l.b16 %v2770
      %v2847 = vunpack.c.h.b16 %v2770
      %v2848 = vunpack.c.l.b16 %v2771
      %v2849 = vunpack.c.l.b16 %v2772
      %v2850 = vunpack.c.h.b16 %v2772
      %v2851 = vunpack.c.l.b16 %v2773
      %v2852 = vunpack.c.l.b16 %v2774
      %v2853 = vunpack.c.h.b16 %v2774
      %v2854 = vunpack.c.l.b16 %v2775
      %v2855 = vunpack.c.l.b16 %v2776
      %v2856 = vunpack.c.h.b16 %v2776
      %v2857 = vunpack.c.l.b16 %v2777
      %v2858 = vpack.c.b16 %v2813, %v2810
      %v2859 = vpack.c.b16 %v2814, %v2811
      %v2860 = vpack.c.b16 %v2815, %v2812
      %v2861 = vpack.c.b16 %v2819, %v2816
      %v2862 = vpack.c.b16 %v2820, %v2817
      %v2863 = vpack.c.b16 %v2821, %v2818
      %v2864 = vpack.c.b16 %v2825, %v2822
      %v2865 = vpack.c.b16 %v2826, %v2823
      %v2866 = vpack.c.b16 %v2827, %v2824
      %v2867 = vpack.c.b16 %v2831, %v2828
      %v2868 = vpack.c.b16 %v2832, %v2829
      %v2869 = vpack.c.b16 %v2833, %v2830
      %v2870 = vpack.c.b16 %v2837, %v2834
      %v2871 = vpack.c.b16 %v2838, %v2835
      %v2872 = vpack.c.b16 %v2839, %v2836
      %v2873 = vpack.c.b16 %v2843, %v2840
      %v2874 = vpack.c.b16 %v2844, %v2841
      %v2875 = vpack.c.b16 %v2845, %v2842
      %v2876 = vpack.c.b16 %v2849, %v2846
      %v2877 = vpack.c.b16 %v2850, %v2847
      %v2878 = vpack.c.b16 %v2851, %v2848
      %v2879 = vpack.c.b16 %v2855, %v2852
      %v2880 = vpack.c.b16 %v2856, %v2853
      %v2881 = vpack.c.b16 %v2857, %v2854
      %2906 = vmatprep.subr.bf16.mxu0 %v2880
      %2907 = vmatpush1.bf16.msra.mxu0 %v2879
      %2908 = vmatprep.subr.bf16.mxu0 %v2877
      %2909 = vmatpush1.bf16.msra.mxu0 %v2876
      %2910 = vmatprep.subr.bf16.mxu0 %v2874
      %2911 = vmatpush1.bf16.msra.mxu0 %v2873
      %2912 = vmatprep.subr.bf16.mxu0 %v2871
      %2913 = vmatpush1.bf16.msra.mxu0 %v2870
      %2914 = vmatprep.subr.bf16.mxu0 %v2868
      %2915 = vmatpush1.bf16.msra.mxu0 %v2867
      %2916 = vmatprep.subr.bf16.mxu0 %v2865
      %2917 = vmatpush1.bf16.msra.mxu0 %v2864
      %2918 = vmatprep.subr.bf16.mxu0 %v2862
      %2919 = vmatpush1.bf16.msra.mxu0 %v2861
      %2920 = vmatprep.subr.bf16.mxu0 %v2859
      %2921 = vmatpush1.bf16.msra.mxu0 %v2858
      %2922 = vmatprep.subr.bf16.mxu0 0
      %2923 = vmatpush2.bf16.msra.mxu0 0
      %2924 = vmatprep.subr.bf16.mxu0 0
      %2925 = vmatpush2.bf16.msra.mxu0 0
      %2926 = vmatprep.subr.bf16.mxu0 0
      %2927 = vmatpush2.bf16.msra.mxu0 0
      %2928 = vmatprep.subr.bf16.mxu0 0
      %2929 = vmatpush2.bf16.msra.mxu0 0
      %2930 = vmatprep.subr.bf16.mxu0 0
      %2931 = vmatpush2.bf16.msra.mxu0 0
      %2932 = vmatprep.subr.bf16.mxu0 0
      %2933 = vmatpush2.bf16.msra.mxu0 0
      %2934 = vmatprep.subr.bf16.mxu0 0
      %2935 = vmatpush2.bf16.msra.mxu0 0
      %2936 = vmatprep.subr.bf16.mxu0 0
      %2937 = vmatpush2.bf16.msra.mxu0 0
      %2938 = vmatprep.mubr.bf16.mxu0 0
      %2939 = vmatmul.mubr.bf16.gmra.mxu0 %v2745
      %v2940 = vpop.f32.mrf.mxu0
      %v2941 = vadd.f32 0.0, %v2940
      %v2942 = vpop.f32.mrf.mxu0
      %v2943 = vadd.f32 0.0, %v2942
      %v2944 = vpop.f32.mrf.mxu0
      %v2945 = vpop.f32.mrf.mxu0
      %2946 = vdwg.mxu0
      %2947 = vmatprep.subr.bf16.mxu0 0
      %2948 = vmatpush1.bf16.msra.mxu0 %v2881
      %2949 = vmatprep.subr.bf16.mxu0 0
      %2950 = vmatpush1.bf16.msra.mxu0 %v2878
      %2951 = vmatprep.subr.bf16.mxu0 0
      %2952 = vmatpush1.bf16.msra.mxu0 %v2875
      %2953 = vmatprep.subr.bf16.mxu0 0
      %2954 = vmatpush1.bf16.msra.mxu0 %v2872
      %2955 = vmatprep.subr.bf16.mxu0 0
      %2956 = vmatpush1.bf16.msra.mxu0 %v2869
      %2957 = vmatprep.subr.bf16.mxu0 0
      %2958 = vmatpush1.bf16.msra.mxu0 %v2866
      %2959 = vmatprep.subr.bf16.mxu0 0
      %2960 = vmatpush1.bf16.msra.mxu0 %v2863
      %2961 = vmatprep.subr.bf16.mxu0 0
      %2962 = vmatpush1.bf16.msra.mxu0 %v2860
      %2963 = vmatprep.subr.bf16.mxu0 0
      %2964 = vmatpush2.bf16.msra.mxu0 0
      %2965 = vmatprep.subr.bf16.mxu0 0
      %2966 = vmatpush2.bf16.msra.mxu0 0
      %2967 = vmatprep.subr.bf16.mxu0 0
      %2968 = vmatpush2.bf16.msra.mxu0 0
      %2969 = vmatprep.subr.bf16.mxu0 0
      %2970 = vmatpush2.bf16.msra.mxu0 0
      %2971 = vmatprep.subr.bf16.mxu0 0
      %2972 = vmatpush2.bf16.msra.mxu0 0
      %2973 = vmatprep.subr.bf16.mxu0 0
      %2974 = vmatpush2.bf16.msra.mxu0 0
      %2975 = vmatprep.subr.bf16.mxu0 0
      %2976 = vmatpush2.bf16.msra.mxu0 0
      %2977 = vmatprep.subr.bf16.mxu0 0
      %2978 = vmatpush2.bf16.msra.mxu0 0
      %2979 = vmatprep.mubr.bf16.mxu0 0
      %2980 = vmatmul.mubr.bf16.gmra.mxu0 %v2745
      %v2981 = vpop.f32.mrf.mxu0
      %v2982 = vadd.f32 0.0, %v2981
      %v2983 = vpop.f32.mrf.mxu0
      %v2984 = vpop.f32.mrf.mxu0
      %v2985 = vpop.f32.mrf.mxu0
      %2986 = vdwg.mxu0
      %v2987 = vpack.c.bf16 %v2744, %v2744
      %v2988 = vld [vmem:[%s639] sm:$0xff]
      %v2989 = vld [vmem:[%s639 + $0x8] sm:$0xf]
      %v2990 = vld [vmem:[%s639 + $0xc] sm:$0xff]
      %v2991 = vld [vmem:[%s639 + $0x14] sm:$0xf]
      %v2992 = vld [vmem:[%s639 + $0x18] sm:$0xff]
      %v2993 = vld [vmem:[%s639 + $0x20] sm:$0xf]
      %v2994 = vld [vmem:[%s639 + $0x24] sm:$0xff]
      %v2995 = vld [vmem:[%s639 + $0x2c] sm:$0xf]
      %v2996 = vld [vmem:[%s639 + $0x30] sm:$0xff]
      %v2997 = vld [vmem:[%s639 + $0x38] sm:$0xf]
      %v2998 = vld [vmem:[%s639 + $0x3c] sm:$0xff]
      %v2999 = vld [vmem:[%s639 + $0x44] sm:$0xf]
      %v3000 = vld [vmem:[%s639 + $0x48] sm:$0xff]
      %v3001 = vld [vmem:[%s639 + $0x50] sm:$0xf]
      %v3002 = vld [vmem:[%s639 + $0x54] sm:$0xff]
      %v3003 = vld [vmem:[%s639 + $0x5c] sm:$0xf]
      %v3004 = vld [vmem:[%s639 + $0x60] sm:$0xff]
      %v3005 = vld [vmem:[%s639 + $0x68] sm:$0xf]
      %v3006 = vld [vmem:[%s639 + $0x6c] sm:$0xff]
      %v3007 = vld [vmem:[%s639 + $0x74] sm:$0xf]
      %v3008 = vld [vmem:[%s639 + $0x78] sm:$0xff]
      %v3009 = vld [vmem:[%s639 + $0x80] sm:$0xf]
      %v3010 = vld [vmem:[%s639 + $0x84] sm:$0xff]
      %v3011 = vld [vmem:[%s639 + $0x8c] sm:$0xf]
      %v3012 = vld [vmem:[%s639 + $0x90] sm:$0xff]
      %v3013 = vld [vmem:[%s639 + $0x98] sm:$0xf]
      %v3014 = vld [vmem:[%s639 + $0x9c] sm:$0xff]
      %v3015 = vld [vmem:[%s639 + $0xa4] sm:$0xf]
      %v3016 = vld [vmem:[%s639 + $0xa8] sm:$0xff]
      %v3017 = vld [vmem:[%s639 + $0xb0] sm:$0xf]
      %v3018 = vld [vmem:[%s639 + $0xb4] sm:$0xff]
      %v3019 = vld [vmem:[%s639 + $0xbc] sm:$0xf]
      %v3052 = vunpack.c.l.b16 %v2988
      %v3053 = vunpack.c.h.b16 %v2988
      %v3054 = vunpack.c.l.b16 %v2989
      %v3055 = vunpack.c.l.b16 %v2990
      %v3056 = vunpack.c.h.b16 %v2990
      %v3057 = vunpack.c.l.b16 %v2991
      %v3058 = vunpack.c.l.b16 %v2992
      %v3059 = vunpack.c.h.b16 %v2992
      %v3060 = vunpack.c.l.b16 %v2993
      %v3061 = vunpack.c.l.b16 %v2994
      %v3062 = vunpack.c.h.b16 %v2994
      %v3063 = vunpack.c.l.b16 %v2995
      %v3064 = vunpack.c.l.b16 %v2996
      %v3065 = vunpack.c.h.b16 %v2996
      %v3066 = vunpack.c.l.b16 %v2997
      %v3067 = vunpack.c.l.b16 %v2998
      %v3068 = vunpack.c.h.b16 %v2998
      %v3069 = vunpack.c.l.b16 %v2999
      %v3070 = vunpack.c.l.b16 %v3000
      %v3071 = vunpack.c.h.b16 %v3000
      %v3072 = vunpack.c.l.b16 %v3001
      %v3073 = vunpack.c.l.b16 %v3002
      %v3074 = vunpack.c.h.b16 %v3002
      %v3075 = vunpack.c.l.b16 %v3003
      %v3076 = vunpack.c.l.b16 %v3004
      %v3077 = vunpack.c.h.b16 %v3004
      %v3078 = vunpack.c.l.b16 %v3005
      %v3079 = vunpack.c.l.b16 %v3006
      %v3080 = vunpack.c.h.b16 %v3006
      %v3081 = vunpack.c.l.b16 %v3007
      %v3082 = vunpack.c.l.b16 %v3008
      %v3083 = vunpack.c.h.b16 %v3008
      %v3084 = vunpack.c.l.b16 %v3009
      %v3085 = vunpack.c.l.b16 %v3010
      %v3086 = vunpack.c.h.b16 %v3010
      %v3087 = vunpack.c.l.b16 %v3011
      %v3088 = vunpack.c.l.b16 %v3012
      %v3089 = vunpack.c.h.b16 %v3012
      %v3090 = vunpack.c.l.b16 %v3013
      %v3091 = vunpack.c.l.b16 %v3014
      %v3092 = vunpack.c.h.b16 %v3014
      %v3093 = vunpack.c.l.b16 %v3015
      %v3094 = vunpack.c.l.b16 %v3016
      %v3095 = vunpack.c.h.b16 %v3016
      %v3096 = vunpack.c.l.b16 %v3017
      %v3097 = vunpack.c.l.b16 %v3018
      %v3098 = vunpack.c.h.b16 %v3018
      %v3099 = vunpack.c.l.b16 %v3019
      %v3100 = vpack.c.b16 %v3055, %v3052
      %v3101 = vpack.c.b16 %v3056, %v3053
      %v3102 = vpack.c.b16 %v3057, %v3054
      %v3103 = vpack.c.b16 %v3061, %v3058
      %v3104 = vpack.c.b16 %v3062, %v3059
      %v3105 = vpack.c.b16 %v3063, %v3060
      %v3106 = vpack.c.b16 %v3067, %v3064
      %v3107 = vpack.c.b16 %v3068, %v3065
      %v3108 = vpack.c.b16 %v3069, %v3066
      %v3109 = vpack.c.b16 %v3073, %v3070
      %v3110 = vpack.c.b16 %v3074, %v3071
      %v3111 = vpack.c.b16 %v3075, %v3072
      %v3112 = vpack.c.b16 %v3079, %v3076
      %v3113 = vpack.c.b16 %v3080, %v3077
      %v3114 = vpack.c.b16 %v3081, %v3078
      %v3115 = vpack.c.b16 %v3085, %v3082
      %v3116 = vpack.c.b16 %v3086, %v3083
      %v3117 = vpack.c.b16 %v3087, %v3084
      %v3118 = vpack.c.b16 %v3091, %v3088
      %v3119 = vpack.c.b16 %v3092, %v3089
      %v3120 = vpack.c.b16 %v3093, %v3090
      %v3121 = vpack.c.b16 %v3097, %v3094
      %v3122 = vpack.c.b16 %v3098, %v3095
      %v3123 = vpack.c.b16 %v3099, %v3096
      %3148 = vmatprep.subr.bf16.mxu0 %v3122
      %3149 = vmatpush1.bf16.msra.mxu0 %v3121
      %3150 = vmatprep.subr.bf16.mxu0 %v3119
      %3151 = vmatpush1.bf16.msra.mxu0 %v3118
      %3152 = vmatprep.subr.bf16.mxu0 %v3116
      %3153 = vmatpush1.bf16.msra.mxu0 %v3115
      %3154 = vmatprep.subr.bf16.mxu0 %v3113
      %3155 = vmatpush1.bf16.msra.mxu0 %v3112
      %3156 = vmatprep.subr.bf16.mxu0 %v3110
      %3157 = vmatpush1.bf16.msra.mxu0 %v3109
      %3158 = vmatprep.subr.bf16.mxu0 %v3107
      %3159 = vmatpush1.bf16.msra.mxu0 %v3106
      %3160 = vmatprep.subr.bf16.mxu0 %v3104
      %3161 = vmatpush1.bf16.msra.mxu0 %v3103
      %3162 = vmatprep.subr.bf16.mxu0 %v3101
      %3163 = vmatpush1.bf16.msra.mxu0 %v3100
      %3164 = vmatprep.subr.bf16.mxu0 0
      %3165 = vmatpush2.bf16.msra.mxu0 0
      %3166 = vmatprep.subr.bf16.mxu0 0
      %3167 = vmatpush2.bf16.msra.mxu0 0
      %3168 = vmatprep.subr.bf16.mxu0 0
      %3169 = vmatpush2.bf16.msra.mxu0 0
      %3170 = vmatprep.subr.bf16.mxu0 0
      %3171 = vmatpush2.bf16.msra.mxu0 0
      %3172 = vmatprep.subr.bf16.mxu0 0
      %3173 = vmatpush2.bf16.msra.mxu0 0
      %3174 = vmatprep.subr.bf16.mxu0 0
      %3175 = vmatpush2.bf16.msra.mxu0 0
      %3176 = vmatprep.subr.bf16.mxu0 0
      %3177 = vmatpush2.bf16.msra.mxu0 0
      %3178 = vmatprep.subr.bf16.mxu0 0
      %3179 = vmatpush2.bf16.msra.mxu0 0
      %3180 = vmatprep.mubr.bf16.mxu0 0
      %3181 = vmatmul.mubr.bf16.gmra.mxu0 %v2987
      %v3182 = vpop.f32.mrf.mxu0
      %v3183 = vadd.f32 0.0, %v3182
      %v3184 = vpop.f32.mrf.mxu0
      %v3185 = vadd.f32 0.0, %v3184
      %v3186 = vpop.f32.mrf.mxu0
      %v3187 = vpop.f32.mrf.mxu0
      %3188 = vdwg.mxu0
      %3189 = vmatprep.subr.bf16.mxu0 0
      %3190 = vmatpush1.bf16.msra.mxu0 %v3123
      %3191 = vmatprep.subr.bf16.mxu0 0
      %3192 = vmatpush1.bf16.msra.mxu0 %v3120
      %3193 = vmatprep.subr.bf16.mxu0 0
      %3194 = vmatpush1.bf16.msra.mxu0 %v3117
      %3195 = vmatprep.subr.bf16.mxu0 0
      %3196 = vmatpush1.bf16.msra.mxu0 %v3114
      %3197 = vmatprep.subr.bf16.mxu0 0
      %3198 = vmatpush1.bf16.msra.mxu0 %v3111
      %3199 = vmatprep.subr.bf16.mxu0 0
      %3200 = vmatpush1.bf16.msra.mxu0 %v3108
      %3201 = vmatprep.subr.bf16.mxu0 0
      %3202 = vmatpush1.bf16.msra.mxu0 %v3105
      %3203 = vmatprep.subr.bf16.mxu0 0
      %3204 = vmatpush1.bf16.msra.mxu0 %v3102
      %3205 = vmatprep.subr.bf16.mxu0 0
      %3206 = vmatpush2.bf16.msra.mxu0 0
      %3207 = vmatprep.subr.bf16.mxu0 0
      %3208 = vmatpush2.bf16.msra.mxu0 0
      %3209 = vmatprep.subr.bf16.mxu0 0
      %3210 = vmatpush2.bf16.msra.mxu0 0
      %3211 = vmatprep.subr.bf16.mxu0 0
      %3212 = vmatpush2.bf16.msra.mxu0 0
      %3213 = vmatprep.subr.bf16.mxu0 0
      %3214 = vmatpush2.bf16.msra.mxu0 0
      %3215 = vmatprep.subr.bf16.mxu0 0
      %3216 = vmatpush2.bf16.msra.mxu0 0
      %3217 = vmatprep.subr.bf16.mxu0 0
      %3218 = vmatpush2.bf16.msra.mxu0 0
      %3219 = vmatprep.subr.bf16.mxu0 0
      %3220 = vmatpush2.bf16.msra.mxu0 0
      %3221 = vmatprep.mubr.bf16.mxu0 0
      %3222 = vmatmul.mubr.bf16.gmra.mxu0 %v2987
      %v3223 = vpop.f32.mrf.mxu0
      %v3224 = vadd.f32 0.0, %v3223
      %v3225 = vpop.f32.mrf.mxu0
      %v3226 = vpop.f32.mrf.mxu0
      %v3227 = vpop.f32.mrf.mxu0
      %3228 = vdwg.mxu0
      %v3229 = vadd.f32 %v2740, %v2941
      %v3230 = vxor.u32 %v3229, 2147483648
      %v3231 = vmul.f32 %v3230, 1.442695
      %v3232 = vpow.pop %v3231
      %v3233 = vadd.f32 %v3232, 1.0
      %v3234 = vrcp.pop %v3233
      %v3235 = vmul.f32 1.0, %v3234
      %v3236 = vadd.f32 %v2741, %v2943
      %v3237 = vxor.u32 %v3236, 2147483648
      %v3238 = vmul.f32 %v3237, 1.442695
      %v3239 = vpow.pop %v3238
      %v3240 = vadd.f32 %v3239, 1.0
      %v3241 = vrcp.pop %v3240
      %v3242 = vmul.f32 1.0, %v3241
      %v3243 = vadd.f32 %v2982, %v361
      %v3244 = vmul.f32 %v3235, %v3243
      %v3245 = vadd.f32 %v2742, %v3244
      %v3246 = vtanh.pop %v3245
      %v3247 = vsub.f32 1.0, %v3242
      %v3248 = vmul.f32 %v3247, %v3246
      %v3249 = vmul.f32 %v3242, %v2743
      %v3250 = vadd.f32 %v3248, %v3249
      %3251 = vst [vmem:[#allocation2] sm:$0xff] %v3250
      %v3252 = vpack.c.bf16 %v3250, %v3250
      %v3253 = vld [vmem:[%s3] sm:$0xff]
      %v3254 = vld [vmem:[%s3 + $0x8] sm:$0xf]
      %v3255 = vld [vmem:[%s3 + $0xc] sm:$0xff]
      %v3256 = vld [vmem:[%s3 + $0x14] sm:$0xf]
      %v3257 = vld [vmem:[%s3 + $0x18] sm:$0xff]
      %v3258 = vld [vmem:[%s3 + $0x20] sm:$0xf]
      %v3259 = vld [vmem:[%s3 + $0x24] sm:$0xff]
      %v3260 = vld [vmem:[%s3 + $0x2c] sm:$0xf]
      %v3261 = vld [vmem:[%s3 + $0x30] sm:$0xff]
      %v3262 = vld [vmem:[%s3 + $0x38] sm:$0xf]
      %v3263 = vld [vmem:[%s3 + $0x3c] sm:$0xff]
      %v3264 = vld [vmem:[%s3 + $0x44] sm:$0xf]
      %v3265 = vld [vmem:[%s3 + $0x48] sm:$0xff]
      %v3266 = vld [vmem:[%s3 + $0x50] sm:$0xf]
      %v3267 = vld [vmem:[%s3 + $0x54] sm:$0xff]
      %v3268 = vld [vmem:[%s3 + $0x5c] sm:$0xf]
      %v3269 = vld [vmem:[%s3 + $0x60] sm:$0xff]
      %v3270 = vld [vmem:[%s3 + $0x68] sm:$0xf]
      %v3271 = vld [vmem:[%s3 + $0x6c] sm:$0xff]
      %v3272 = vld [vmem:[%s3 + $0x74] sm:$0xf]
      %v3273 = vld [vmem:[%s3 + $0x78] sm:$0xff]
      %v3274 = vld [vmem:[%s3 + $0x80] sm:$0xf]
      %v3275 = vld [vmem:[%s3 + $0x84] sm:$0xff]
      %v3276 = vld [vmem:[%s3 + $0x8c] sm:$0xf]
      %v3277 = vld [vmem:[%s3 + $0x90] sm:$0xff]
      %v3278 = vld [vmem:[%s3 + $0x98] sm:$0xf]
      %v3279 = vld [vmem:[%s3 + $0x9c] sm:$0xff]
      %v3280 = vld [vmem:[%s3 + $0xa4] sm:$0xf]
      %v3281 = vld [vmem:[%s3 + $0xa8] sm:$0xff]
      %v3282 = vld [vmem:[%s3 + $0xb0] sm:$0xf]
      %v3283 = vld [vmem:[%s3 + $0xb4] sm:$0xff]
      %v3284 = vld [vmem:[%s3 + $0xbc] sm:$0xf]
      %v3317 = vunpack.c.l.b16 %v3253
      %v3318 = vunpack.c.h.b16 %v3253
      %v3319 = vunpack.c.l.b16 %v3254
      %v3320 = vunpack.c.l.b16 %v3255
      %v3321 = vunpack.c.h.b16 %v3255
      %v3322 = vunpack.c.l.b16 %v3256
      %v3323 = vunpack.c.l.b16 %v3257
      %v3324 = vunpack.c.h.b16 %v3257
      %v3325 = vunpack.c.l.b16 %v3258
      %v3326 = vunpack.c.l.b16 %v3259
      %v3327 = vunpack.c.h.b16 %v3259
      %v3328 = vunpack.c.l.b16 %v3260
      %v3329 = vunpack.c.l.b16 %v3261
      %v3330 = vunpack.c.h.b16 %v3261
      %v3331 = vunpack.c.l.b16 %v3262
      %v3332 = vunpack.c.l.b16 %v3263
      %v3333 = vunpack.c.h.b16 %v3263
      %v3334 = vunpack.c.l.b16 %v3264
      %v3335 = vunpack.c.l.b16 %v3265
      %v3336 = vunpack.c.h.b16 %v3265
      %v3337 = vunpack.c.l.b16 %v3266
      %v3338 = vunpack.c.l.b16 %v3267
      %v3339 = vunpack.c.h.b16 %v3267
      %v3340 = vunpack.c.l.b16 %v3268
      %v3341 = vunpack.c.l.b16 %v3269
      %v3342 = vunpack.c.h.b16 %v3269
      %v3343 = vunpack.c.l.b16 %v3270
      %v3344 = vunpack.c.l.b16 %v3271
      %v3345 = vunpack.c.h.b16 %v3271
      %v3346 = vunpack.c.l.b16 %v3272
      %v3347 = vunpack.c.l.b16 %v3273
      %v3348 = vunpack.c.h.b16 %v3273
      %v3349 = vunpack.c.l.b16 %v3274
      %v3350 = vunpack.c.l.b16 %v3275
      %v3351 = vunpack.c.h.b16 %v3275
      %v3352 = vunpack.c.l.b16 %v3276
      %v3353 = vunpack.c.l.b16 %v3277
      %v3354 = vunpack.c.h.b16 %v3277
      %v3355 = vunpack.c.l.b16 %v3278
      %v3356 = vunpack.c.l.b16 %v3279
      %v3357 = vunpack.c.h.b16 %v3279
      %v3358 = vunpack.c.l.b16 %v3280
      %v3359 = vunpack.c.l.b16 %v3281
      %v3360 = vunpack.c.h.b16 %v3281
      %v3361 = vunpack.c.l.b16 %v3282
      %v3362 = vunpack.c.l.b16 %v3283
      %v3363 = vunpack.c.h.b16 %v3283
      %v3364 = vunpack.c.l.b16 %v3284
      %v3365 = vpack.c.b16 %v3320, %v3317
      %v3366 = vpack.c.b16 %v3321, %v3318
      %v3367 = vpack.c.b16 %v3322, %v3319
      %v3368 = vpack.c.b16 %v3326, %v3323
      %v3369 = vpack.c.b16 %v3327, %v3324
      %v3370 = vpack.c.b16 %v3328, %v3325
      %v3371 = vpack.c.b16 %v3332, %v3329
      %v3372 = vpack.c.b16 %v3333, %v3330
      %v3373 = vpack.c.b16 %v3334, %v3331
      %v3374 = vpack.c.b16 %v3338, %v3335
      %v3375 = vpack.c.b16 %v3339, %v3336
      %v3376 = vpack.c.b16 %v3340, %v3337
      %v3377 = vpack.c.b16 %v3344, %v3341
      %v3378 = vpack.c.b16 %v3345, %v3342
      %v3379 = vpack.c.b16 %v3346, %v3343
      %v3380 = vpack.c.b16 %v3350, %v3347
      %v3381 = vpack.c.b16 %v3351, %v3348
      %v3382 = vpack.c.b16 %v3352, %v3349
      %v3383 = vpack.c.b16 %v3356, %v3353
      %v3384 = vpack.c.b16 %v3357, %v3354
      %v3385 = vpack.c.b16 %v3358, %v3355
      %v3386 = vpack.c.b16 %v3362, %v3359
      %v3387 = vpack.c.b16 %v3363, %v3360
      %v3388 = vpack.c.b16 %v3364, %v3361
      %3413 = vmatprep.subr.bf16.mxu0 %v3387
      %3414 = vmatpush1.bf16.msra.mxu0 %v3386
      %3415 = vmatprep.subr.bf16.mxu0 %v3384
      %3416 = vmatpush1.bf16.msra.mxu0 %v3383
      %3417 = vmatprep.subr.bf16.mxu0 %v3381
      %3418 = vmatpush1.bf16.msra.mxu0 %v3380
      %3419 = vmatprep.subr.bf16.mxu0 %v3378
      %3420 = vmatpush1.bf16.msra.mxu0 %v3377
      %3421 = vmatprep.subr.bf16.mxu0 %v3375
      %3422 = vmatpush1.bf16.msra.mxu0 %v3374
      %3423 = vmatprep.subr.bf16.mxu0 %v3372
      %3424 = vmatpush1.bf16.msra.mxu0 %v3371
      %3425 = vmatprep.subr.bf16.mxu0 %v3369
      %3426 = vmatpush1.bf16.msra.mxu0 %v3368
      %3427 = vmatprep.subr.bf16.mxu0 %v3366
      %3428 = vmatpush1.bf16.msra.mxu0 %v3365
      %3429 = vmatprep.subr.bf16.mxu0 0
      %3430 = vmatpush2.bf16.msra.mxu0 0
      %3431 = vmatprep.subr.bf16.mxu0 0
      %3432 = vmatpush2.bf16.msra.mxu0 0
      %3433 = vmatprep.subr.bf16.mxu0 0
      %3434 = vmatpush2.bf16.msra.mxu0 0
      %3435 = vmatprep.subr.bf16.mxu0 0
      %3436 = vmatpush2.bf16.msra.mxu0 0
      %3437 = vmatprep.subr.bf16.mxu0 0
      %3438 = vmatpush2.bf16.msra.mxu0 0
      %3439 = vmatprep.subr.bf16.mxu0 0
      %3440 = vmatpush2.bf16.msra.mxu0 0
      %3441 = vmatprep.subr.bf16.mxu0 0
      %3442 = vmatpush2.bf16.msra.mxu0 0
      %3443 = vmatprep.subr.bf16.mxu0 0
      %3444 = vmatpush2.bf16.msra.mxu0 0
      %3445 = vmatprep.mubr.bf16.mxu0 0
      %3446 = vmatmul.mubr.bf16.gmra.mxu0 %v3252
      %v3447 = vpop.f32.mrf.mxu0
      %v3448 = vadd.f32 %v376, %v3447
      %v3449 = vpop.f32.mrf.mxu0
      %v3450 = vadd.f32 %v380, %v3449
      %v3451 = vpop.f32.mrf.mxu0
      %v3452 = vpop.f32.mrf.mxu0
      %3453 = vdwg.mxu0
      %3454 = vmatprep.subr.bf16.mxu0 0
      %3455 = vmatpush1.bf16.msra.mxu0 %v3388
      %3456 = vmatprep.subr.bf16.mxu0 0
      %3457 = vmatpush1.bf16.msra.mxu0 %v3385
      %3458 = vmatprep.subr.bf16.mxu0 0
      %3459 = vmatpush1.bf16.msra.mxu0 %v3382
      %3460 = vmatprep.subr.bf16.mxu0 0
      %3461 = vmatpush1.bf16.msra.mxu0 %v3379
      %3462 = vmatprep.subr.bf16.mxu0 0
      %3463 = vmatpush1.bf16.msra.mxu0 %v3376
      %3464 = vmatprep.subr.bf16.mxu0 0
      %3465 = vmatpush1.bf16.msra.mxu0 %v3373
      %3466 = vmatprep.subr.bf16.mxu0 0
      %3467 = vmatpush1.bf16.msra.mxu0 %v3370
      %3468 = vmatprep.subr.bf16.mxu0 0
      %3469 = vmatpush1.bf16.msra.mxu0 %v3367
      %3470 = vmatprep.subr.bf16.mxu0 0
      %3471 = vmatpush2.bf16.msra.mxu0 0
      %3472 = vmatprep.subr.bf16.mxu0 0
      %3473 = vmatpush2.bf16.msra.mxu0 0
      %3474 = vmatprep.subr.bf16.mxu0 0
      %3475 = vmatpush2.bf16.msra.mxu0 0
      %3476 = vmatprep.subr.bf16.mxu0 0
      %3477 = vmatpush2.bf16.msra.mxu0 0
      %3478 = vmatprep.subr.bf16.mxu0 0
      %3479 = vmatpush2.bf16.msra.mxu0 0
      %3480 = vmatprep.subr.bf16.mxu0 0
      %3481 = vmatpush2.bf16.msra.mxu0 0
      %3482 = vmatprep.subr.bf16.mxu0 0
      %3483 = vmatpush2.bf16.msra.mxu0 0
      %3484 = vmatprep.subr.bf16.mxu0 0
      %3485 = vmatpush2.bf16.msra.mxu0 0
      %3486 = vmatprep.mubr.bf16.mxu0 0
      %3487 = vmatmul.mubr.bf16.gmra.mxu0 %v3252
      %v3488 = vpop.f32.mrf.mxu0
      %v3489 = vadd.f32 %v384, %v3488
      %v3490 = vpop.f32.mrf.mxu0
      %v3491 = vpop.f32.mrf.mxu0
      %v3492 = vpop.f32.mrf.mxu0
      %3493 = vdwg.mxu0
      %v3494 = vadd.f32 %v3448, %v3183
      %v3495 = vxor.u32 %v3494, 2147483648
      %v3496 = vmul.f32 %v3495, 1.442695
      %v3497 = vpow.pop %v3496
      %v3498 = vadd.f32 %v3497, 1.0
      %v3499 = vrcp.pop %v3498
      %v3500 = vmul.f32 1.0, %v3499
      %v3501 = vadd.f32 %v3450, %v3185
      %v3502 = vxor.u32 %v3501, 2147483648
      %v3503 = vmul.f32 %v3502, 1.442695
      %v3504 = vpow.pop %v3503
      %v3505 = vadd.f32 %v3504, 1.0
      %v3506 = vrcp.pop %v3505
      %v3507 = vmul.f32 1.0, %v3506
      %v3508 = vadd.f32 %v3224, %v369
      %v3509 = vmul.f32 %v3500, %v3508
      %v3510 = vadd.f32 %v3489, %v3509
      %v3511 = vtanh.pop %v3510
      %v3512 = vsub.f32 1.0, %v3507
      %v3513 = vmul.f32 %v3512, %v3511
      %v3514 = vmul.f32 %v3507, %v2744
      %v3515 = vadd.f32 %v3513, %v3514
      %3516 = vst [vmem:[%s394] sm:$0xff] %v3515
      %v3517 = vpack.c.bf16 %v3515, %v3515
      %s3518 = scalar_lea.vmem %s341, 12
      %3519 = vst [vmem:[%s3518] sm:$0xf] %v3517
      %p3520 = scmp.eq.s32.totalorder %s24, 1
      // Predicated region
      $region49: #{seq2seq_decoder_forward.2} parent=43 // pred_check
        %p3521 = pneg %p3520
      $region50: #{seq2seq_decoder_forward.2} parent=43 // pred_check_branch
        %3523 = sbr.rel (%p3521) target = $region52
      $region51: #{seq2seq_decoder_forward.2} parent=43 // pred_region
        %v3524 = vld [vmem:[#allocation2] sm:$0xff]
        %v3525 = vld [vmem:[#allocation2 + $0x8] sm:$0xff]
        %3526 = vst [vmem:[%s346] sm:$0xff] %v3524
        %3527 = vst [vmem:[%s346 + $0x8] sm:$0xff] %v3525
      $region52: #{seq2seq_decoder_forward.2} parent=43 // pred_fallthru
        _
      %s3528 = smul.u32 4, %s24
      %p3529 = scmp.lt.s32.totalorder %s3528, 7
      %s3530 = scalar_select %p3529, %s3528, 7
      %p3531 = scmp.lt.s32.totalorder %s23, 0
      %s3532 = scalar_select %p3531, %s23, 0
      %s3533 = sadd.s32 %s3532, %s3530
      %s3534 = smul.addr %s3533, 4
      %s3535 = scalar_lea.vmem %s6, %s3534
      %p3536 = scmp.lt.s32.totalorder %s23, 0
      %s3537 = scalar_select %p3536, %s23, 0
      %s3538 = smul.addr %s3537, 8
      %s3539 = scalar_lea.vmem %s7, %s3538
      // Predicated region
      $region53: #{seq2seq_decoder_forward.2} parent=43 // pred_check
        %p3540 = pneg %p189
      $region54: #{seq2seq_decoder_forward.2} parent=43 // pred_check_branch
        %3542 = sbr.rel (%p3540) target = $region56
      $region55: #{seq2seq_decoder_forward.2} parent=43 // pred_region
        %s3543 = smul.u32 4, %s24
      $region56: #{seq2seq_decoder_forward.2} parent=43 // pred_fallthru
        _
      // Predicated region
      $region57: #{seq2seq_decoder_forward.2} parent=43 // pred_check
        %p3544 = pneg %p215
      $region58: #{seq2seq_decoder_forward.2} parent=43 // pred_check_branch
        %3546 = sbr.rel (%p3544) target = $region60
      $region59: #{seq2seq_decoder_forward.2} parent=43 // pred_region
        _
      $region60: #{seq2seq_decoder_forward.2} parent=43 // pred_fallthru
        _
      // Predicated region
      $region61: #{seq2seq_decoder_forward.2} parent=43 // pred_check
        %p3547 = pneg %p215
      $region62: #{seq2seq_decoder_forward.2} parent=43 // pred_check_branch
        %3549 = sbr.rel (%p3547) target = $region64
      $region63: #{seq2seq_decoder_forward.2} parent=43 // pred_region
        %p3550 = scmp.lt.s32.totalorder %s23, 0
        %s3551 = scalar_select %p3550, %s23, 0
        %s3552 = smul.addr %s3551, 8
        %s3553 = scalar_lea.vmem %s7, %s3552
      $region64: #{seq2seq_decoder_forward.2} parent=43 // pred_fallthru
        _
    $region44: #{seq2seq_decoder_forward.2} parent=5 // pred_fallthru
      _
    %p3554 = scmp.le.s32.totalorder 2, %s14
    // Predicated region
    $region65: #{seq2seq_decoder_forward.2} parent=5 // pred_check
      %p3555 = pneg %p3554
    $region66: #{seq2seq_decoder_forward.2} parent=5 // pred_check_branch
      %3557 = sbr.rel (%p3555) target = $region68
    $region67: #{seq2seq_decoder_forward.2} parent=5 // pred_region
      %s3558 = ssub.s32 %s14, 2
      // Predicated region
      $region69: #{seq2seq_decoder_forward.2} parent=67 // pred_check
        %p3559 = pneg %p195
      $region70: #{seq2seq_decoder_forward.2} parent=67 // pred_check_branch
        %3561 = sbr.rel (%p3559) target = $region72
      $region71: #{seq2seq_decoder_forward.2} parent=67 // pred_region
        %s3562 = smul.u32 4, %s26
        %p3563 = scmp.lt.s32.totalorder %s3562, 7
        %s3564 = scalar_select %p3563, %s3562, 7
        %p3565 = scmp.lt.s32.totalorder %s25, 0
        %s3566 = scalar_select %p3565, %s25, 0
        %s3567 = sadd.s32 %s3566, %s3564
        %s3568 = smul.addr %s3567, 4
        %s3569 = scalar_lea.vmem %s6, %s3568
      $region72: #{seq2seq_decoder_forward.2} parent=67 // pred_fallthru
        _
    $region68: #{seq2seq_decoder_forward.2} parent=5 // pred_fallthru
      _
  $region6: #{seq2seq_decoder_forward.2} parent=0 // loop_footer
    %s18 = sadd.s32 1, %s14
  $region7: #{seq2seq_decoder_forward.2} parent=0 // loop_footer_branch
    %13 = sbr.rel target = $region3
  $region8: #{seq2seq_decoder_forward.2} parent=0 // loop_exit
    _

</llo_original>
